<compile_context>
chip_gen: v7x
topology: tpu7x:2x2x1
jax: 0.10.0
libtpu: 0.0.40
codegen_flags: <defaults>
</compile_context>

<pallas_src>
import jax
import jax.numpy as jnp
from jax import lax
from jax.experimental import pallas as pl
from jax.experimental.pallas import tpu as pltpu

LAYNORM_EPS = 1e-12
TAU = 1.2
V_THRESHOLD = 1.0          # spikingjelly LIFNode defaults (v_reset = 0.0, hard reset)
INV_TAU = 1.0 / TAU
DECAY = 1.0 - INV_TAU      # detach_reset only affects gradients, not the forward pass.


def _mlp_kernel(x_ref, w1_ref, b1_ref, g1_ref, be1_ref,
                w2_ref, b2_ref, g2_ref, be2_ref,
                o_ref, v1_ref, v2_ref):
    t = pl.program_id(1)  # time = inner, sequential grid axis

    # Membrane potentials start at 0 at the first timestep of every row block.
    @pl.when(t == 0)
    def _():
        v1_ref[...] = jnp.zeros_like(v1_ref)
        v2_ref[...] = jnp.zeros_like(v2_ref)

    x = x_ref[...]                                   # (TN, D) bf16

    # ---- fc1 (bf16 MXU, f32 acc) + LayerNorm(4D) with fused one-pass stats ----
    h = jnp.dot(x, w1_ref[...], preferred_element_type=jnp.float32) + b1_ref[...]
    inv_h = 1.0 / h.shape[-1]
    mu = jnp.sum(h, axis=-1, keepdims=True) * inv_h
    var = jnp.maximum(jnp.sum(h * h, axis=-1, keepdims=True) * inv_h - mu * mu, 0.0)
    h = (h - mu) * (lax.rsqrt(var + LAYNORM_EPS) * g1_ref[...]) + be1_ref[...]

    # ---- LIF 1: single-FMA charge, fire, hard reset (reuse the compare) ----
    v1 = v1_ref[...] * DECAY + h * INV_TAU
    spk1 = v1 >= V_THRESHOLD
    v1_ref[...] = jnp.where(spk1, 0.0, v1)
    s1 = spk1.astype(jnp.bfloat16)                   # spikes are exactly 0/1 -> lossless

    # ---- fc2 (bf16 MXU, f32 acc) + LayerNorm(D) with fused one-pass stats ----
    h2 = jnp.dot(s1, w2_ref[...], preferred_element_type=jnp.float32) + b2_ref[...]
    inv_d = 1.0 / h2.shape[-1]
    mu2 = jnp.sum(h2, axis=-1, keepdims=True) * inv_d
    var2 = jnp.maximum(jnp.sum(h2 * h2, axis=-1, keepdims=True) * inv_d - mu2 * mu2, 0.0)
    h2 = (h2 - mu2) * (lax.rsqrt(var2 + LAYNORM_EPS) * g2_ref[...]) + be2_ref[...]

    # ---- LIF 2 ----
    v2 = v2_ref[...] * DECAY + h2 * INV_TAU
    spk2 = v2 >= V_THRESHOLD
    v2_ref[...] = jnp.where(spk2, 0.0, v2)

    o_ref[...] = spk2.astype(o_ref.dtype)


def _round_up(a, m):
    return (a + m - 1) // m * m


def mlp_pallas(x, params, *, out_dtype=jnp.float32, block_rows=256):
    """x: (T, B, L, D) float32. params: dict of f32 weights. Returns (T, B, L, D)."""
    T, B, L, D = x.shape
    H = 4 * D
    N = B * L

    # Rows-per-block: 256 feeds the (2x)256x256 MXU; for tiny N just round N up to 8.
    TN = block_rows if N >= block_rows else _round_up(N, 8)
    N_pad = _round_up(N, TN)

    x2 = x.reshape(T, N, D).astype(jnp.bfloat16)
    if N_pad != N:
        x2 = jnp.pad(x2, ((0, 0), (0, N_pad - N), (0, 0)))

    w1 = params["w1"].astype(jnp.bfloat16)
    w2 = params["w2"].astype(jnp.bfloat16)
    b1, g1, be1 = params["b1"], params["g1"], params["be1"]
    b2, g2, be2 = params["b2"], params["g2"], params["be2"]

    out_itemsize = jnp.dtype(out_dtype).itemsize
    vmem_bytes = (
        2 * 2 * (D * H + H * D)          # bf16 w1 + w2 (x2 headroom if double-buffered)
        + 4 * 3 * (H + D)                # f32 biases / LN gamma / beta
        + 2 * (TN * D * 2)               # double-buffered bf16 x tile
        + 2 * (TN * D * out_itemsize)    # double-buffered output tile
        + 4 * TN * (H + D)               # f32 membrane scratches
    )
    vmem_limit = int(max(32 << 20, vmem_bytes + (8 << 20)))

    def call(single_buffer_consts):
        def const_spec(shape):
            idx = lambda n, t: (0,) * len(shape)
            if single_buffer_consts:
                # Constant-index operands: no need to double-buffer across grid steps.
                return pl.BlockSpec(shape, idx, pipeline_mode=pl.Buffered(1))
            return pl.BlockSpec(shape, idx)

        grid_spec = pltpu.PrefetchScalarGridSpec(
            num_scalar_prefetch=0,
            grid=(N_pad // TN, T),
            in_specs=[
                pl.BlockSpec((None, TN, D), lambda n, t: (t, n, 0)),  # x row block (squeezed T)
                const_spec((D, H)),   # w1
                const_spec((1, H)),   # b1
                const_spec((1, H)),   # ln1 gamma
                const_spec((1, H)),   # ln1 beta
                const_spec((H, D)),   # w2
                const_spec((1, D)),   # b2
                const_spec((1, D)),   # ln2 gamma
                const_spec((1, D)),   # ln2 beta
            ],
            out_specs=pl.BlockSpec((None, TN, D), lambda n, t: (t, n, 0)),
            scratch_shapes=[
                pltpu.VMEM((TN, H), jnp.float32),  # membrane v1
                pltpu.VMEM((TN, D), jnp.float32),  # membrane v2
            ],
        )
        return pl.pallas_call(
            _mlp_kernel,
            out_shape=jax.ShapeDtypeStruct((T, N_pad, D), out_dtype),
            grid_spec=grid_spec,
            compiler_params=pltpu.CompilerParams(
                dimension_semantics=("parallel", "arbitrary"),  # rows parallel, time sequential
                vmem_limit_bytes=vmem_limit,
            ),
        )(x2, w1, b1, g1, be1, w2, b2, g2, be2)

    try:
        out = call(single_buffer_consts=True)
    except Exception:
        # Fallback for jax versions without BlockSpec(pipeline_mode=...): default buffering.
        out = call(single_buffer_consts=False)

    return out[:, :N, :].reshape(T, B, L, D)


def mlp_reference(x, params):
    """Pure-JAX reference mirroring the kernel's bf16-matmul / f32 math (for checking)."""

    def layernorm(h, g, b):
        mu = jnp.mean(h, axis=-1, keepdims=True)
        var = jnp.mean((h - mu) ** 2, axis=-1, keepdims=True)
        return (h - mu) / jnp.sqrt(var + LAYNORM_EPS) * g + b

    def lif(seq):  # seq: (T, ..., C)
        def step(v, xt):
            v = v + (xt - v) / TAU
            s = (v >= V_THRESHOLD).astype(jnp.float32)
            return v * (1.0 - s), s
        _, spikes = lax.scan(step, jnp.zeros_like(seq[0]), seq)
        return spikes

    def mm(a, w):
        return jnp.dot(a.astype(jnp.bfloat16), w.astype(jnp.bfloat16),
                       preferred_element_type=jnp.float32)

    h = mm(x, params["w1"]) + params["b1"][0]
    s1 = lif(layernorm(h, params["g1"][0], params["be1"][0]))
    h2 = mm(s1, params["w2"]) + params["b2"][0]
    return lif(layernorm(h2, params["g2"][0], params["be2"][0]))


def init_params(key, D):
    H = 4 * D
    k1, k2, k3, k4 = jax.random.split(key, 4)
    # Mimic nn.Linear's uniform(-1/sqrt(fan_in), 1/sqrt(fan_in)) init.
    lim1 = 1.0 / jnp.sqrt(D)
    lim2 = 1.0 / jnp.sqrt(H)
    return {
        "w1": jax.random.uniform(k1, (D, H), jnp.float32, -lim1, lim1),
        "b1": jax.random.uniform(k2, (1, H), jnp.float32, -lim1, lim1),
        "g1": jnp.ones((1, H), jnp.float32),
        "be1": jnp.zeros((1, H), jnp.float32),
        "w2": jax.random.uniform(k3, (H, D), jnp.float32, -lim2, lim2),
        "b2": jax.random.uniform(k4, (1, D), jnp.float32, -lim2, lim2),
        "g2": jnp.ones((1, D), jnp.float32),
        "be2": jnp.zeros((1, D), jnp.float32),
    }


if __name__ == "__main__":
    # Small shapes consistent with the module (x is (T, B, L, hidden_dim)).
    # D = 128 keeps every activation / store lane-dense.
    T, B, L, D = 4, 2, 16, 128
    key = jax.random.PRNGKey(0)
    kx, kp = jax.random.split(key)
    x = jax.random.normal(kx, (T, B, L, D), dtype=jnp.float32)
    params = init_params(kp, D)

    out = jax.block_until_ready(mlp_pallas(x, params))
    ref = mlp_reference(x, params)

    assert out.shape == (T, B, L, D)
    assert bool(jnp.all((out == 0.0) | (out == 1.0))), "outputs must be 0/1 spikes"
    # Spikes are thresholded 0/1; allow a tiny fraction of borderline flips caused by
    # reduction-order differences between the Pallas MXU dot and XLA's dot.
    mismatch_frac = float(jnp.mean(jnp.abs(out - ref) > 0.5))
    assert mismatch_frac < 1e-3, f"spike mismatch fraction too high: {mismatch_frac}"

    print("KERNEL_OK")
</pallas_src>

<mosaic_0001>
module attributes {stable_mosaic.version = 11 : i64} {
  func.func @_mlp_kernel(%arg0: i32, %arg1: i32, %arg2: memref<1x32x128xbf16, #tpu.memory_space<vmem>>, %arg3: memref<128x512xbf16, #tpu.memory_space<vmem>>, %arg4: memref<1x512xf32, #tpu.memory_space<vmem>>, %arg5: memref<1x512xf32, #tpu.memory_space<vmem>>, %arg6: memref<1x512xf32, #tpu.memory_space<vmem>>, %arg7: memref<512x128xbf16, #tpu.memory_space<vmem>>, %arg8: memref<1x128xf32, #tpu.memory_space<vmem>>, %arg9: memref<1x128xf32, #tpu.memory_space<vmem>>, %arg10: memref<1x128xf32, #tpu.memory_space<vmem>>, %arg11: memref<1x32x128xf32, #tpu.memory_space<vmem>>, %arg12: memref<32x512xf32, #tpu.memory_space<vmem>>, %arg13: memref<32x128xf32, #tpu.memory_space<vmem>>) attributes {dimension_semantics = [#tpu.dimension_semantics<parallel>, #tpu.dimension_semantics<arbitrary>], iteration_bounds = array<i64: 1, 4>, scalar_prefetch = 0 : i64, scratch_operands = 2 : i64, tpu.core_type = #tpu.core_type<tc>, window_params = [{transform_indices = @transform_0, window_bounds = array<i64: 1, 32, 128>}, {pipeline_mode = #tpu.pipeline_mode<synchronous>, transform_indices = @transform_1, window_bounds = array<i64: 128, 512>}, {pipeline_mode = #tpu.pipeline_mode<synchronous>, transform_indices = @transform_2, window_bounds = array<i64: 1, 512>}, {pipeline_mode = #tpu.pipeline_mode<synchronous>, transform_indices = @transform_3, window_bounds = array<i64: 1, 512>}, {pipeline_mode = #tpu.pipeline_mode<synchronous>, transform_indices = @transform_4, window_bounds = array<i64: 1, 512>}, {pipeline_mode = #tpu.pipeline_mode<synchronous>, transform_indices = @transform_5, window_bounds = array<i64: 512, 128>}, {pipeline_mode = #tpu.pipeline_mode<synchronous>, transform_indices = @transform_6, window_bounds = array<i64: 1, 128>}, {pipeline_mode = #tpu.pipeline_mode<synchronous>, transform_indices = @transform_7, window_bounds = array<i64: 1, 128>}, {pipeline_mode = #tpu.pipeline_mode<synchronous>, transform_indices = @transform_8, window_bounds = array<i64: 1, 128>}, {transform_indices = @transform_9, window_bounds = array<i64: 1, 32, 128>}]} {
    %c0_i32 = arith.constant 0 : i32
    %0 = arith.cmpi eq, %arg1, %c0_i32 : i32
    %1 = arith.extui %0 : i1 to i32
    %c0_i32_0 = arith.constant 0 : i32
    %2 = arith.cmpi ne, %1, %c0_i32_0 : i32
    scf.if %2 {
      %cst_51 = arith.constant 0.000000e+00 : f32
      %97 = vector.broadcast %cst_51 : f32 to vector<32x512xf32>
      %c0_52 = arith.constant 0 : index
      %c0_53 = arith.constant 0 : index
      %98 = vector.load %arg12[%c0_52, %c0_53] : memref<32x512xf32, #tpu.memory_space<vmem>>, vector<32x512xf32>
      tpu.vector_store %arg12[%c0_52, %c0_53], %97 {strides = array<i32>} : memref<32x512xf32, #tpu.memory_space<vmem>>, vector<32x512xf32>,
      %cst_54 = arith.constant 0.000000e+00 : f32
      %99 = vector.broadcast %cst_54 : f32 to vector<32x128xf32>
      %c0_55 = arith.constant 0 : index
      %c0_56 = arith.constant 0 : index
      %100 = vector.load %arg13[%c0_55, %c0_56] : memref<32x128xf32, #tpu.memory_space<vmem>>, vector<32x128xf32>
      tpu.vector_store %arg13[%c0_55, %c0_56], %99 {strides = array<i32>} : memref<32x128xf32, #tpu.memory_space<vmem>>, vector<32x128xf32>,
    } else {
    }
    %c0 = arith.constant 0 : index
    %c0_1 = arith.constant 0 : index
    %c0_2 = arith.constant 0 : index
    %3 = vector.load %arg2[%c0, %c0_1, %c0_2] : memref<1x32x128xbf16, #tpu.memory_space<vmem>>, vector<1x32x128xbf16>
    %4 = vector.shape_cast %3 : vector<1x32x128xbf16> to vector<32x128xbf16>
    %c0_3 = arith.constant 0 : index
    %c0_4 = arith.constant 0 : index
    %5 = vector.load %arg3[%c0_3, %c0_4] : memref<128x512xbf16, #tpu.memory_space<vmem>>, vector<128x512xbf16>
    %cst = arith.constant dense<0.000000e+00> : vector<32x512xf32>
    %6 = tpu.matmul %4, %5, %cst {dimension_numbers = #tpu.dot_dimension_numbers<[1], [0], [0], [1], [0, 0, 1, 1], [], []>} : vector<32x128xbf16>, vector<128x512xbf16>, vector<32x512xf32> -> vector<32x512xf32>
    %c0_5 = arith.constant 0 : index
    %c0_6 = arith.constant 0 : index
    %7 = vector.load %arg4[%c0_5, %c0_6] : memref<1x512xf32, #tpu.memory_space<vmem>>, vector<1x512xf32>
    %8 = vector.broadcast %7 : vector<1x512xf32> to vector<32x512xf32>
    %9 = arith.addf %6, %8 : vector<32x512xf32>
    %cst_7 = arith.constant dense<0.000000e+00> : vector<32xf32>
    %10 = vector.multi_reduction <add>, %9, %cst_7 [1] : vector<32x512xf32> to vector<32xf32>
    %11 = vector.shape_cast %10 : vector<32xf32> to vector<32x1xf32>
    %cst_8 = arith.constant 0.001953125 : f32
    %12 = vector.broadcast %cst_8 : f32 to vector<32x1xf32>
    %13 = arith.mulf %11, %12 : vector<32x1xf32>
    %14 = arith.mulf %9, %9 : vector<32x512xf32>
    %cst_9 = arith.constant dense<0.000000e+00> : vector<32xf32>
    %15 = vector.multi_reduction <add>, %14, %cst_9 [1] : vector<32x512xf32> to vector<32xf32>
    %16 = vector.shape_cast %15 : vector<32xf32> to vector<32x1xf32>
    %cst_10 = arith.constant 0.001953125 : f32
    %17 = vector.broadcast %cst_10 : f32 to vector<32x1xf32>
    %18 = arith.mulf %16, %17 : vector<32x1xf32>
    %19 = arith.mulf %13, %13 : vector<32x1xf32>
    %20 = arith.subf %18, %19 : vector<32x1xf32>
    %cst_11 = arith.constant 0.000000e+00 : f32
    %21 = vector.broadcast %cst_11 : f32 to vector<32x1xf32>
    %22 = arith.maximumf %20, %21 : vector<32x1xf32>
    %23 = vector.broadcast %13 : vector<32x1xf32> to vector<32x512xf32>
    %24 = arith.subf %9, %23 : vector<32x512xf32>
    %cst_12 = arith.constant 9.99999996E-13 : f32
    %25 = vector.broadcast %cst_12 : f32 to vector<32x1xf32>
    %26 = arith.addf %22, %25 : vector<32x1xf32>
    %27 = math.rsqrt %26 : vector<32x1xf32>
    %c0_13 = arith.constant 0 : index
    %c0_14 = arith.constant 0 : index
    %28 = vector.load %arg5[%c0_13, %c0_14] : memref<1x512xf32, #tpu.memory_space<vmem>>, vector<1x512xf32>
    %29 = vector.broadcast %27 : vector<32x1xf32> to vector<32x512xf32>
    %30 = vector.broadcast %28 : vector<1x512xf32> to vector<32x512xf32>
    %31 = arith.mulf %29, %30 : vector<32x512xf32>
    %32 = arith.mulf %24, %31 : vector<32x512xf32>
    %c0_15 = arith.constant 0 : index
    %c0_16 = arith.constant 0 : index
    %33 = vector.load %arg6[%c0_15, %c0_16] : memref<1x512xf32, #tpu.memory_space<vmem>>, vector<1x512xf32>
    %34 = vector.broadcast %33 : vector<1x512xf32> to vector<32x512xf32>
    %35 = arith.addf %32, %34 : vector<32x512xf32>
    %c0_17 = arith.constant 0 : index
    %c0_18 = arith.constant 0 : index
    %36 = vector.load %arg12[%c0_17, %c0_18] : memref<32x512xf32, #tpu.memory_space<vmem>>, vector<32x512xf32>
    %cst_19 = arith.constant 0.166666672 : f32
    %37 = vector.broadcast %cst_19 : f32 to vector<32x512xf32>
    %38 = arith.mulf %36, %37 : vector<32x512xf32>
    %cst_20 = arith.constant 0.833333313 : f32
    %39 = vector.broadcast %cst_20 : f32 to vector<32x512xf32>
    %40 = arith.mulf %35, %39 : vector<32x512xf32>
    %41 = arith.addf %38, %40 : vector<32x512xf32>
    %cst_21 = arith.constant 1.000000e+00 : f32
    %42 = vector.broadcast %cst_21 : f32 to vector<32x512xf32>
    %43 = arith.cmpf oge, %41, %42 : vector<32x512xf32>
    %cst_22 = arith.constant 0.000000e+00 : f32
    %44 = vector.broadcast %cst_22 : f32 to vector<32x512xf32>
    %45 = arith.select %43, %44, %41 : vector<32x512xi1>, vector<32x512xf32>
    %c0_23 = arith.constant 0 : index
    %c0_24 = arith.constant 0 : index
    %46 = vector.load %arg12[%c0_23, %c0_24] : memref<32x512xf32, #tpu.memory_space<vmem>>, vector<32x512xf32>
    tpu.vector_store %arg12[%c0_23, %c0_24], %45 {strides = array<i32>} : memref<32x512xf32, #tpu.memory_space<vmem>>, vector<32x512xf32>,
    %47 = arith.extui %43 : vector<32x512xi1> to vector<32x512xi32>
    %48 = arith.sitofp %47 : vector<32x512xi32> to vector<32x512xf32>
    %49 = arith.truncf %48 : vector<32x512xf32> to vector<32x512xbf16>
    %c0_25 = arith.constant 0 : index
    %c0_26 = arith.constant 0 : index
    %50 = vector.load %arg7[%c0_25, %c0_26] : memref<512x128xbf16, #tpu.memory_space<vmem>>, vector<512x128xbf16>
    %cst_27 = arith.constant dense<0.000000e+00> : vector<32x128xf32>
    %51 = tpu.matmul %49, %50, %cst_27 {dimension_numbers = #tpu.dot_dimension_numbers<[1], [0], [0], [1], [0, 0, 1, 1], [], []>} : vector<32x512xbf16>, vector<512x128xbf16>, vector<32x128xf32> -> vector<32x128xf32>
    %c0_28 = arith.constant 0 : index
    %c0_29 = arith.constant 0 : index
    %52 = vector.load %arg8[%c0_28, %c0_29] : memref<1x128xf32, #tpu.memory_space<vmem>>, vector<1x128xf32>
    %53 = vector.broadcast %52 : vector<1x128xf32> to vector<32x128xf32>
    %54 = arith.addf %51, %53 : vector<32x128xf32>
    %cst_30 = arith.constant dense<0.000000e+00> : vector<32xf32>
    %55 = vector.multi_reduction <add>, %54, %cst_30 [1] : vector<32x128xf32> to vector<32xf32>
    %56 = vector.shape_cast %55 : vector<32xf32> to vector<32x1xf32>
    %cst_31 = arith.constant 7.812500e-03 : f32
    %57 = vector.broadcast %cst_31 : f32 to vector<32x1xf32>
    %58 = arith.mulf %56, %57 : vector<32x1xf32>
    %59 = arith.mulf %54, %54 : vector<32x128xf32>
    %cst_32 = arith.constant dense<0.000000e+00> : vector<32xf32>
    %60 = vector.multi_reduction <add>, %59, %cst_32 [1] : vector<32x128xf32> to vector<32xf32>
    %61 = vector.shape_cast %60 : vector<32xf32> to vector<32x1xf32>
    %cst_33 = arith.constant 7.812500e-03 : f32
    %62 = vector.broadcast %cst_33 : f32 to vector<32x1xf32>
    %63 = arith.mulf %61, %62 : vector<32x1xf32>
    %64 = arith.mulf %58, %58 : vector<32x1xf32>
    %65 = arith.subf %63, %64 : vector<32x1xf32>
    %cst_34 = arith.constant 0.000000e+00 : f32
    %66 = vector.broadcast %cst_34 : f32 to vector<32x1xf32>
    %67 = arith.maximumf %65, %66 : vector<32x1xf32>
    %68 = vector.broadcast %58 : vector<32x1xf32> to vector<32x128xf32>
    %69 = arith.subf %54, %68 : vector<32x128xf32>
    %cst_35 = arith.constant 9.99999996E-13 : f32
    %70 = vector.broadcast %cst_35 : f32 to vector<32x1xf32>
    %71 = arith.addf %67, %70 : vector<32x1xf32>
    %72 = math.rsqrt %71 : vector<32x1xf32>
    %c0_36 = arith.constant 0 : index
    %c0_37 = arith.constant 0 : index
    %73 = vector.load %arg9[%c0_36, %c0_37] : memref<1x128xf32, #tpu.memory_space<vmem>>, vector<1x128xf32>
    %74 = vector.broadcast %72 : vector<32x1xf32> to vector<32x128xf32>
    %75 = vector.broadcast %73 : vector<1x128xf32> to vector<32x128xf32>
    %76 = arith.mulf %74, %75 : vector<32x128xf32>
    %77 = arith.mulf %69, %76 : vector<32x128xf32>
    %c0_38 = arith.constant 0 : index
    %c0_39 = arith.constant 0 : index
    %78 = vector.load %arg10[%c0_38, %c0_39] : memref<1x128xf32, #tpu.memory_space<vmem>>, vector<1x128xf32>
    %79 = vector.broadcast %78 : vector<1x128xf32> to vector<32x128xf32>
    %80 = arith.addf %77, %79 : vector<32x128xf32>
    %c0_40 = arith.constant 0 : index
    %c0_41 = arith.constant 0 : index
    %81 = vector.load %arg13[%c0_40, %c0_41] : memref<32x128xf32, #tpu.memory_space<vmem>>, vector<32x128xf32>
    %cst_42 = arith.constant 0.166666672 : f32
    %82 = vector.broadcast %cst_42 : f32 to vector<32x128xf32>
    %83 = arith.mulf %81, %82 : vector<32x128xf32>
    %cst_43 = arith.constant 0.833333313 : f32
    %84 = vector.broadcast %cst_43 : f32 to vector<32x128xf32>
    %85 = arith.mulf %80, %84 : vector<32x128xf32>
    %86 = arith.addf %83, %85 : vector<32x128xf32>
    %cst_44 = arith.constant 1.000000e+00 : f32
    %87 = vector.broadcast %cst_44 : f32 to vector<32x128xf32>
    %88 = arith.cmpf oge, %86, %87 : vector<32x128xf32>
    %cst_45 = arith.constant 0.000000e+00 : f32
    %89 = vector.broadcast %cst_45 : f32 to vector<32x128xf32>
    %90 = arith.select %88, %89, %86 : vector<32x128xi1>, vector<32x128xf32>
    %c0_46 = arith.constant 0 : index
    %c0_47 = arith.constant 0 : index
    %91 = vector.load %arg13[%c0_46, %c0_47] : memref<32x128xf32, #tpu.memory_space<vmem>>, vector<32x128xf32>
    tpu.vector_store %arg13[%c0_46, %c0_47], %90 {strides = array<i32>} : memref<32x128xf32, #tpu.memory_space<vmem>>, vector<32x128xf32>,
    %92 = arith.extui %88 : vector<32x128xi1> to vector<32x128xi32>
    %93 = arith.sitofp %92 : vector<32x128xi32> to vector<32x128xf32>
    %c0_48 = arith.constant 0 : index
    %c0_49 = arith.constant 0 : index
    %c0_50 = arith.constant 0 : index
    %94 = vector.load %arg11[%c0_48, %c0_49, %c0_50] : memref<1x32x128xf32, #tpu.memory_space<vmem>>, vector<1x32x128xf32>
    %95 = vector.shape_cast %94 : vector<1x32x128xf32> to vector<32x128xf32>
    %96 = vector.shape_cast %93 : vector<32x128xf32> to vector<1x32x128xf32>
    tpu.vector_store %arg11[%c0_48, %c0_49, %c0_50], %96 {strides = array<i32>} : memref<1x32x128xf32, #tpu.memory_space<vmem>>, vector<1x32x128xf32>,
    return
  }
  func.func @transform_0(%arg0: i32, %arg1: i32) -> (i32, i32, i32) {
    %c0_i32 = arith.constant 0 : i32
    %c0_i32_0 = arith.constant 0 : i32
    return %arg1, %arg0, %c0_i32 : i32, i32, i32
  }
  func.func @transform_1(%arg0: i32, %arg1: i32) -> (i32, i32) {
    %c0_i32 = arith.constant 0 : i32
    %c0_i32_0 = arith.constant 0 : i32
    %c0_i32_1 = arith.constant 0 : i32
    return %c0_i32, %c0_i32_0 : i32, i32
  }
  func.func @transform_2(%arg0: i32, %arg1: i32) -> (i32, i32) {
    %c0_i32 = arith.constant 0 : i32
    %c0_i32_0 = arith.constant 0 : i32
    %c0_i32_1 = arith.constant 0 : i32
    return %c0_i32, %c0_i32_0 : i32, i32
  }
  func.func @transform_3(%arg0: i32, %arg1: i32) -> (i32, i32) {
    %c0_i32 = arith.constant 0 : i32
    %c0_i32_0 = arith.constant 0 : i32
    %c0_i32_1 = arith.constant 0 : i32
    return %c0_i32, %c0_i32_0 : i32, i32
  }
  func.func @transform_4(%arg0: i32, %arg1: i32) -> (i32, i32) {
    %c0_i32 = arith.constant 0 : i32
    %c0_i32_0 = arith.constant 0 : i32
    %c0_i32_1 = arith.constant 0 : i32
    return %c0_i32, %c0_i32_0 : i32, i32
  }
  func.func @transform_5(%arg0: i32, %arg1: i32) -> (i32, i32) {
    %c0_i32 = arith.constant 0 : i32
    %c0_i32_0 = arith.constant 0 : i32
    %c0_i32_1 = arith.constant 0 : i32
    return %c0_i32, %c0_i32_0 : i32, i32
  }
  func.func @transform_6(%arg0: i32, %arg1: i32) -> (i32, i32) {
    %c0_i32 = arith.constant 0 : i32
    %c0_i32_0 = arith.constant 0 : i32
    %c0_i32_1 = arith.constant 0 : i32
    return %c0_i32, %c0_i32_0 : i32, i32
  }
  func.func @transform_7(%arg0: i32, %arg1: i32) -> (i32, i32) {
    %c0_i32 = arith.constant 0 : i32
    %c0_i32_0 = arith.constant 0 : i32
    %c0_i32_1 = arith.constant 0 : i32
    return %c0_i32, %c0_i32_0 : i32, i32
  }
  func.func @transform_8(%arg0: i32, %arg1: i32) -> (i32, i32) {
    %c0_i32 = arith.constant 0 : i32
    %c0_i32_0 = arith.constant 0 : i32
    %c0_i32_1 = arith.constant 0 : i32
    return %c0_i32, %c0_i32_0 : i32, i32
  }
  func.func @transform_9(%arg0: i32, %arg1: i32) -> (i32, i32, i32) {
    %c0_i32 = arith.constant 0 : i32
    %c0_i32_0 = arith.constant 0 : i32
    return %arg1, %arg0, %c0_i32 : i32, i32, i32
  }
}

module attributes {stable_mosaic.version = 11 : i64} {
  func.func @_mlp_kernel(%arg0: i32, %arg1: i32, %arg2: memref<1x32x128xbf16, #tpu.memory_space<vmem>>, %arg3: memref<128x512xbf16, #tpu.memory_space<vmem>>, %arg4: memref<1x512xf32, #tpu.memory_space<vmem>>, %arg5: memref<1x512xf32, #tpu.memory_space<vmem>>, %arg6: memref<1x512xf32, #tpu.memory_space<vmem>>, %arg7: memref<512x128xbf16, #tpu.memory_space<vmem>>, %arg8: memref<1x128xf32, #tpu.memory_space<vmem>>, %arg9: memref<1x128xf32, #tpu.memory_space<vmem>>, %arg10: memref<1x128xf32, #tpu.memory_space<vmem>>, %arg11: memref<1x32x128xf32, #tpu.memory_space<vmem>>, %arg12: memref<32x512xf32, #tpu.memory_space<vmem>>, %arg13: memref<32x128xf32, #tpu.memory_space<vmem>>) attributes {dimension_semantics = [#tpu.dimension_semantics<parallel>, #tpu.dimension_semantics<arbitrary>], iteration_bounds = array<i64: 1, 4>, scalar_prefetch = 0 : i64, scratch_operands = 2 : i64, tpu.core_type = #tpu.core_type<tc>, window_params = [{transform_indices = @transform_0, window_bounds = array<i64: 1, 32, 128>}, {pipeline_mode = #tpu.pipeline_mode<synchronous>, transform_indices = @transform_1, window_bounds = array<i64: 128, 512>}, {pipeline_mode = #tpu.pipeline_mode<synchronous>, transform_indices = @transform_2, window_bounds = array<i64: 1, 512>}, {pipeline_mode = #tpu.pipeline_mode<synchronous>, transform_indices = @transform_3, window_bounds = array<i64: 1, 512>}, {pipeline_mode = #tpu.pipeline_mode<synchronous>, transform_indices = @transform_4, window_bounds = array<i64: 1, 512>}, {pipeline_mode = #tpu.pipeline_mode<synchronous>, transform_indices = @transform_5, window_bounds = array<i64: 512, 128>}, {pipeline_mode = #tpu.pipeline_mode<synchronous>, transform_indices = @transform_6, window_bounds = array<i64: 1, 128>}, {pipeline_mode = #tpu.pipeline_mode<synchronous>, transform_indices = @transform_7, window_bounds = array<i64: 1, 128>}, {pipeline_mode = #tpu.pipeline_mode<synchronous>, transform_indices = @transform_8, window_bounds = array<i64: 1, 128>}, {transform_indices = @transform_9, window_bounds = array<i64: 1, 32, 128>}]} {
    %c0_i32 = arith.constant 0 : i32
    %0 = arith.cmpi eq, %arg1, %c0_i32 : i32
    %1 = arith.extui %0 : i1 to i32
    %c0_i32_0 = arith.constant 0 : i32
    %2 = arith.cmpi ne, %1, %c0_i32_0 : i32
    scf.if %2 {
      %cst_51 = arith.constant 0.000000e+00 : f32
      %97 = vector.broadcast %cst_51 : f32 to vector<32x512xf32>
      %c0_52 = arith.constant 0 : index
      %c0_53 = arith.constant 0 : index
      %98 = vector.load %arg12[%c0_52, %c0_53] : memref<32x512xf32, #tpu.memory_space<vmem>>, vector<32x512xf32>
      tpu.vector_store %arg12[%c0_52, %c0_53], %97 {strides = array<i32>} : memref<32x512xf32, #tpu.memory_space<vmem>>, vector<32x512xf32>,
      %cst_54 = arith.constant 0.000000e+00 : f32
      %99 = vector.broadcast %cst_54 : f32 to vector<32x128xf32>
      %c0_55 = arith.constant 0 : index
      %c0_56 = arith.constant 0 : index
      %100 = vector.load %arg13[%c0_55, %c0_56] : memref<32x128xf32, #tpu.memory_space<vmem>>, vector<32x128xf32>
      tpu.vector_store %arg13[%c0_55, %c0_56], %99 {strides = array<i32>} : memref<32x128xf32, #tpu.memory_space<vmem>>, vector<32x128xf32>,
    } else {
    }
    %c0 = arith.constant 0 : index
    %c0_1 = arith.constant 0 : index
    %c0_2 = arith.constant 0 : index
    %3 = vector.load %arg2[%c0, %c0_1, %c0_2] : memref<1x32x128xbf16, #tpu.memory_space<vmem>>, vector<1x32x128xbf16>
    %4 = vector.shape_cast %3 : vector<1x32x128xbf16> to vector<32x128xbf16>
    %c0_3 = arith.constant 0 : index
    %c0_4 = arith.constant 0 : index
    %5 = vector.load %arg3[%c0_3, %c0_4] : memref<128x512xbf16, #tpu.memory_space<vmem>>, vector<128x512xbf16>
    %cst = arith.constant dense<0.000000e+00> : vector<32x512xf32>
    %6 = tpu.matmul %4, %5, %cst {dimension_numbers = #tpu.dot_dimension_numbers<[1], [0], [0], [1], [0, 0, 1, 1], [], []>} : vector<32x128xbf16>, vector<128x512xbf16>, vector<32x512xf32> -> vector<32x512xf32>
    %c0_5 = arith.constant 0 : index
    %c0_6 = arith.constant 0 : index
    %7 = vector.load %arg4[%c0_5, %c0_6] : memref<1x512xf32, #tpu.memory_space<vmem>>, vector<1x512xf32>
    %8 = vector.broadcast %7 : vector<1x512xf32> to vector<32x512xf32>
    %9 = arith.addf %6, %8 : vector<32x512xf32>
    %cst_7 = arith.constant dense<0.000000e+00> : vector<32xf32>
    %10 = vector.multi_reduction <add>, %9, %cst_7 [1] : vector<32x512xf32> to vector<32xf32>
    %11 = vector.shape_cast %10 : vector<32xf32> to vector<32x1xf32>
    %cst_8 = arith.constant 0.001953125 : f32
    %12 = vector.broadcast %cst_8 : f32 to vector<32x1xf32>
    %13 = arith.mulf %11, %12 : vector<32x1xf32>
    %14 = arith.mulf %9, %9 : vector<32x512xf32>
    %cst_9 = arith.constant dense<0.000000e+00> : vector<32xf32>
    %15 = vector.multi_reduction <add>, %14, %cst_9 [1] : vector<32x512xf32> to vector<32xf32>
    %16 = vector.shape_cast %15 : vector<32xf32> to vector<32x1xf32>
    %cst_10 = arith.constant 0.001953125 : f32
    %17 = vector.broadcast %cst_10 : f32 to vector<32x1xf32>
    %18 = arith.mulf %16, %17 : vector<32x1xf32>
    %19 = arith.mulf %13, %13 : vector<32x1xf32>
    %20 = arith.subf %18, %19 : vector<32x1xf32>
    %cst_11 = arith.constant 0.000000e+00 : f32
    %21 = vector.broadcast %cst_11 : f32 to vector<32x1xf32>
    %22 = arith.maximumf %20, %21 : vector<32x1xf32>
    %23 = vector.broadcast %13 : vector<32x1xf32> to vector<32x512xf32>
    %24 = arith.subf %9, %23 : vector<32x512xf32>
    %cst_12 = arith.constant 9.99999996E-13 : f32
    %25 = vector.broadcast %cst_12 : f32 to vector<32x1xf32>
    %26 = arith.addf %22, %25 : vector<32x1xf32>
    %27 = math.rsqrt %26 : vector<32x1xf32>
    %c0_13 = arith.constant 0 : index
    %c0_14 = arith.constant 0 : index
    %28 = vector.load %arg5[%c0_13, %c0_14] : memref<1x512xf32, #tpu.memory_space<vmem>>, vector<1x512xf32>
    %29 = vector.broadcast %27 : vector<32x1xf32> to vector<32x512xf32>
    %30 = vector.broadcast %28 : vector<1x512xf32> to vector<32x512xf32>
    %31 = arith.mulf %29, %30 : vector<32x512xf32>
    %32 = arith.mulf %24, %31 : vector<32x512xf32>
    %c0_15 = arith.constant 0 : index
    %c0_16 = arith.constant 0 : index
    %33 = vector.load %arg6[%c0_15, %c0_16] : memref<1x512xf32, #tpu.memory_space<vmem>>, vector<1x512xf32>
    %34 = vector.broadcast %33 : vector<1x512xf32> to vector<32x512xf32>
    %35 = arith.addf %32, %34 : vector<32x512xf32>
    %c0_17 = arith.constant 0 : index
    %c0_18 = arith.constant 0 : index
    %36 = vector.load %arg12[%c0_17, %c0_18] : memref<32x512xf32, #tpu.memory_space<vmem>>, vector<32x512xf32>
    %cst_19 = arith.constant 0.166666672 : f32
    %37 = vector.broadcast %cst_19 : f32 to vector<32x512xf32>
    %38 = arith.mulf %36, %37 : vector<32x512xf32>
    %cst_20 = arith.constant 0.833333313 : f32
    %39 = vector.broadcast %cst_20 : f32 to vector<32x512xf32>
    %40 = arith.mulf %35, %39 : vector<32x512xf32>
    %41 = arith.addf %38, %40 : vector<32x512xf32>
    %cst_21 = arith.constant 1.000000e+00 : f32
    %42 = vector.broadcast %cst_21 : f32 to vector<32x512xf32>
    %43 = arith.cmpf oge, %41, %42 : vector<32x512xf32>
    %cst_22 = arith.constant 0.000000e+00 : f32
    %44 = vector.broadcast %cst_22 : f32 to vector<32x512xf32>
    %45 = arith.select %43, %44, %41 : vector<32x512xi1>, vector<32x512xf32>
    %c0_23 = arith.constant 0 : index
    %c0_24 = arith.constant 0 : index
    %46 = vector.load %arg12[%c0_23, %c0_24] : memref<32x512xf32, #tpu.memory_space<vmem>>, vector<32x512xf32>
    tpu.vector_store %arg12[%c0_23, %c0_24], %45 {strides = array<i32>} : memref<32x512xf32, #tpu.memory_space<vmem>>, vector<32x512xf32>,
    %47 = arith.extui %43 : vector<32x512xi1> to vector<32x512xi32>
    %48 = arith.sitofp %47 : vector<32x512xi32> to vector<32x512xf32>
    %49 = arith.truncf %48 : vector<32x512xf32> to vector<32x512xbf16>
    %c0_25 = arith.constant 0 : index
    %c0_26 = arith.constant 0 : index
    %50 = vector.load %arg7[%c0_25, %c0_26] : memref<512x128xbf16, #tpu.memory_space<vmem>>, vector<512x128xbf16>
    %cst_27 = arith.constant dense<0.000000e+00> : vector<32x128xf32>
    %51 = tpu.matmul %49, %50, %cst_27 {dimension_numbers = #tpu.dot_dimension_numbers<[1], [0], [0], [1], [0, 0, 1, 1], [], []>} : vector<32x512xbf16>, vector<512x128xbf16>, vector<32x128xf32> -> vector<32x128xf32>
    %c0_28 = arith.constant 0 : index
    %c0_29 = arith.constant 0 : index
    %52 = vector.load %arg8[%c0_28, %c0_29] : memref<1x128xf32, #tpu.memory_space<vmem>>, vector<1x128xf32>
    %53 = vector.broadcast %52 : vector<1x128xf32> to vector<32x128xf32>
    %54 = arith.addf %51, %53 : vector<32x128xf32>
    %cst_30 = arith.constant dense<0.000000e+00> : vector<32xf32>
    %55 = vector.multi_reduction <add>, %54, %cst_30 [1] : vector<32x128xf32> to vector<32xf32>
    %56 = vector.shape_cast %55 : vector<32xf32> to vector<32x1xf32>
    %cst_31 = arith.constant 7.812500e-03 : f32
    %57 = vector.broadcast %cst_31 : f32 to vector<32x1xf32>
    %58 = arith.mulf %56, %57 : vector<32x1xf32>
    %59 = arith.mulf %54, %54 : vector<32x128xf32>
    %cst_32 = arith.constant dense<0.000000e+00> : vector<32xf32>
    %60 = vector.multi_reduction <add>, %59, %cst_32 [1] : vector<32x128xf32> to vector<32xf32>
    %61 = vector.shape_cast %60 : vector<32xf32> to vector<32x1xf32>
    %cst_33 = arith.constant 7.812500e-03 : f32
    %62 = vector.broadcast %cst_33 : f32 to vector<32x1xf32>
    %63 = arith.mulf %61, %62 : vector<32x1xf32>
    %64 = arith.mulf %58, %58 : vector<32x1xf32>
    %65 = arith.subf %63, %64 : vector<32x1xf32>
    %cst_34 = arith.constant 0.000000e+00 : f32
    %66 = vector.broadcast %cst_34 : f32 to vector<32x1xf32>
    %67 = arith.maximumf %65, %66 : vector<32x1xf32>
    %68 = vector.broadcast %58 : vector<32x1xf32> to vector<32x128xf32>
    %69 = arith.subf %54, %68 : vector<32x128xf32>
    %cst_35 = arith.constant 9.99999996E-13 : f32
    %70 = vector.broadcast %cst_35 : f32 to vector<32x1xf32>
    %71 = arith.addf %67, %70 : vector<32x1xf32>
    %72 = math.rsqrt %71 : vector<32x1xf32>
    %c0_36 = arith.constant 0 : index
    %c0_37 = arith.constant 0 : index
    %73 = vector.load %arg9[%c0_36, %c0_37] : memref<1x128xf32, #tpu.memory_space<vmem>>, vector<1x128xf32>
    %74 = vector.broadcast %72 : vector<32x1xf32> to vector<32x128xf32>
    %75 = vector.broadcast %73 : vector<1x128xf32> to vector<32x128xf32>
    %76 = arith.mulf %74, %75 : vector<32x128xf32>
    %77 = arith.mulf %69, %76 : vector<32x128xf32>
    %c0_38 = arith.constant 0 : index
    %c0_39 = arith.constant 0 : index
    %78 = vector.load %arg10[%c0_38, %c0_39] : memref<1x128xf32, #tpu.memory_space<vmem>>, vector<1x128xf32>
    %79 = vector.broadcast %78 : vector<1x128xf32> to vector<32x128xf32>
    %80 = arith.addf %77, %79 : vector<32x128xf32>
    %c0_40 = arith.constant 0 : index
    %c0_41 = arith.constant 0 : index
    %81 = vector.load %arg13[%c0_40, %c0_41] : memref<32x128xf32, #tpu.memory_space<vmem>>, vector<32x128xf32>
    %cst_42 = arith.constant 0.166666672 : f32
    %82 = vector.broadcast %cst_42 : f32 to vector<32x128xf32>
    %83 = arith.mulf %81, %82 : vector<32x128xf32>
    %cst_43 = arith.constant 0.833333313 : f32
    %84 = vector.broadcast %cst_43 : f32 to vector<32x128xf32>
    %85 = arith.mulf %80, %84 : vector<32x128xf32>
    %86 = arith.addf %83, %85 : vector<32x128xf32>
    %cst_44 = arith.constant 1.000000e+00 : f32
    %87 = vector.broadcast %cst_44 : f32 to vector<32x128xf32>
    %88 = arith.cmpf oge, %86, %87 : vector<32x128xf32>
    %cst_45 = arith.constant 0.000000e+00 : f32
    %89 = vector.broadcast %cst_45 : f32 to vector<32x128xf32>
    %90 = arith.select %88, %89, %86 : vector<32x128xi1>, vector<32x128xf32>
    %c0_46 = arith.constant 0 : index
    %c0_47 = arith.constant 0 : index
    %91 = vector.load %arg13[%c0_46, %c0_47] : memref<32x128xf32, #tpu.memory_space<vmem>>, vector<32x128xf32>
    tpu.vector_store %arg13[%c0_46, %c0_47], %90 {strides = array<i32>} : memref<32x128xf32, #tpu.memory_space<vmem>>, vector<32x128xf32>,
    %92 = arith.extui %88 : vector<32x128xi1> to vector<32x128xi32>
    %93 = arith.sitofp %92 : vector<32x128xi32> to vector<32x128xf32>
    %c0_48 = arith.constant 0 : index
    %c0_49 = arith.constant 0 : index
    %c0_50 = arith.constant 0 : index
    %94 = vector.load %arg11[%c0_48, %c0_49, %c0_50] : memref<1x32x128xf32, #tpu.memory_space<vmem>>, vector<1x32x128xf32>
    %95 = vector.shape_cast %94 : vector<1x32x128xf32> to vector<32x128xf32>
    %96 = vector.shape_cast %93 : vector<32x128xf32> to vector<1x32x128xf32>
    tpu.vector_store %arg11[%c0_48, %c0_49, %c0_50], %96 {strides = array<i32>} : memref<1x32x128xf32, #tpu.memory_space<vmem>>, vector<1x32x128xf32>,
    return
  }
  func.func @transform_0(%arg0: i32, %arg1: i32) -> (i32, i32, i32) {
    %c0_i32 = arith.constant 0 : i32
    %c0_i32_0 = arith.constant 0 : i32
    return %arg1, %arg0, %c0_i32 : i32, i32, i32
  }
  func.func @transform_1(%arg0: i32, %arg1: i32) -> (i32, i32) {
    %c0_i32 = arith.constant 0 : i32
    %c0_i32_0 = arith.constant 0 : i32
    %c0_i32_1 = arith.constant 0 : i32
    return %c0_i32, %c0_i32_0 : i32, i32
  }
  func.func @transform_2(%arg0: i32, %arg1: i32) -> (i32, i32) {
    %c0_i32 = arith.constant 0 : i32
    %c0_i32_0 = arith.constant 0 : i32
    %c0_i32_1 = arith.constant 0 : i32
    return %c0_i32, %c0_i32_0 : i32, i32
  }
  func.func @transform_3(%arg0: i32, %arg1: i32) -> (i32, i32) {
    %c0_i32 = arith.constant 0 : i32
    %c0_i32_0 = arith.constant 0 : i32
    %c0_i32_1 = arith.constant 0 : i32
    return %c0_i32, %c0_i32_0 : i32, i32
  }
  func.func @transform_4(%arg0: i32, %arg1: i32) -> (i32, i32) {
    %c0_i32 = arith.constant 0 : i32
    %c0_i32_0 = arith.constant 0 : i32
    %c0_i32_1 = arith.constant 0 : i32
    return %c0_i32, %c0_i32_0 : i32, i32
  }
  func.func @transform_5(%arg0: i32, %arg1: i32) -> (i32, i32) {
    %c0_i32 = arith.constant 0 : i32
    %c0_i32_0 = arith.constant 0 : i32
    %c0_i32_1 = arith.constant 0 : i32
    return %c0_i32, %c0_i32_0 : i32, i32
  }
  func.func @transform_6(%arg0: i32, %arg1: i32) -> (i32, i32) {
    %c0_i32 = arith.constant 0 : i32
    %c0_i32_0 = arith.constant 0 : i32
    %c0_i32_1 = arith.constant 0 : i32
    return %c0_i32, %c0_i32_0 : i32, i32
  }
  func.func @transform_7(%arg0: i32, %arg1: i32) -> (i32, i32) {
    %c0_i32 = arith.constant 0 : i32
    %c0_i32_0 = arith.constant 0 : i32
    %c0_i32_1 = arith.constant 0 : i32
    return %c0_i32, %c0_i32_0 : i32, i32
  }
  func.func @transform_8(%arg0: i32, %arg1: i32) -> (i32, i32) {
    %c0_i32 = arith.constant 0 : i32
    %c0_i32_0 = arith.constant 0 : i32
    %c0_i32_1 = arith.constant 0 : i32
    return %c0_i32, %c0_i32_0 : i32, i32
  }
  func.func @transform_9(%arg0: i32, %arg1: i32) -> (i32, i32, i32) {
    %c0_i32 = arith.constant 0 : i32
    %c0_i32_0 = arith.constant 0 : i32
    return %arg1, %arg0, %c0_i32 : i32, i32, i32
  }
}

</mosaic_0001>

<llo_original>
// kernel: tpu_custom_call.1
$region0: #{tpu_custom_call.1}
  #allocation0 [shape = 'u32[]', space=smem, size = 0x4, offset = 0x4, fixed_abs, tag = 'smem constant byte address 0x4 - core index']
  #allocation1 [shape = 'u32[144,128]{1,0:T(1,128)}', space=vmem, size = 0x12000, scoped, tag = 'internal scratch']
  #allocation2 [shape = 'f32[32,512]{1,0:T(8,128)}', space=vmem, size = 0x10000, scoped, tag = 'scratch operand']
  #allocation3 [shape = 'f32[32,128]{1,0:T(8,128)}', space=vmem, size = 0x4000, scoped, tag = 'scratch operand']
  %s0 = inlined_call_operand.hbm [shape: bf16[4,32,128], index: 0, kind: input, shape index: {}]
  %s1 = inlined_call_operand.hbm [shape: bf16[128,512], index: 1, kind: input, shape index: {}]
  %s2 = inlined_call_operand.vmem [shape: f32[1,512], index: 2, kind: input, shape index: {}]
  %s3 = inlined_call_operand.vmem [shape: f32[1,512], index: 3, kind: input, shape index: {}]
  %s4 = inlined_call_operand.vmem [shape: f32[1,512], index: 4, kind: input, shape index: {}]
  %s5 = inlined_call_operand.hbm [shape: bf16[512,128], index: 5, kind: input, shape index: {}]
  %s6 = inlined_call_operand.vmem [shape: f32[1,128], index: 6, kind: input, shape index: {}]
  %s7 = inlined_call_operand.vmem [shape: f32[1,128], index: 7, kind: input, shape index: {}]
  %s8 = inlined_call_operand.vmem [shape: f32[1,128], index: 8, kind: input, shape index: {}]
  %s9 = inlined_call_operand.hbm [shape: f32[4,32,128], index: 9, kind: output, shape index: {}]
  %s10 = sld [smem:[#allocation0]]
  $region85: #{tpu_custom_call.1} parent=0
    _
  %s12 = ssub.s32 1, %s10
  %s13 = scalar_select 0, %s12, %s10
  $region1: #{tpu_custom_call.1} parent=0
    #allocation4 [shape = 'u8[16384]{0}', space=vmem, size = 0x4000, scoped, tag = 'input window, operand 0']
    #allocation5 [shape = 's32[2]{0}', space=sflag, size = 0x8, scoped, tag = 'scoped memory for tpu_custom_call.1']
    #allocation6 [shape = 's32[2]{0}', space=sflag, size = 0x8, scoped, tag = 'scoped memory for tpu_custom_call.1']
    #allocation7 [shape = 'u8[131072]{0}', space=vmem, size = 0x20000, scoped, tag = 'input window, operand 1, single buffered']
    #allocation8 [shape = 's32[1]{0}', space=sflag, size = 0x4, scoped, tag = 'scoped memory for tpu_custom_call.1']
    #allocation9 [shape = 'u8[131072]{0}', space=vmem, size = 0x20000, scoped, tag = 'input window, operand 5, single buffered']
    #allocation10 [shape = 'u8[32768]{0}', space=vmem, size = 0x8000, scoped, tag = 'output window, operand 0']
    %14 = vsyncpa [#allocation5], 0
    %s15 = scalar_lea.sflag [#allocation5], 1
    %16 = vsyncpa %s15, 0
    %17 = vsyncpa [#allocation8], 0
    %18 = vsyncpa [#allocation6], 0
    %s19 = scalar_lea.sflag [#allocation6], 1
    %20 = vsyncpa %s19, 0
    loop: start=0, step=1, limit=6
    $region2: #{tpu_custom_call.1} parent=1 // loop_pre_header
      _
    $region3: #{tpu_custom_call.1} parent=1 // loop_header
      %s22 = sphi 0, %s26
      %p23 = scmp.ge.s32.totalorder %s22, 6
      %s29 = sphi 0, %s41
      %s30 = sphi 0, %s37
      %s31 = sphi 0, %s29
      %s32 = sphi 0, %s30
      %s33 = sphi 0, %s31
      %s34 = sphi 0, %s32
      %s46 = sphi 0, %s48
      %s49 = sphi 0, %s46
      %s50 = sphi 0, %s49
      %s66 = sphi 0, %s50
      %s70 = sphi 0, %s70
      %s72 = sphi 0, %s70
      %s73 = sphi 0, %s72
      %s87 = sphi 0, %s73
      %s91 = sphi 0, %s91
      %s93 = sphi 0, %s91
      %s94 = sphi 0, %s93
      %s108 = sphi 0, %s94
      %s112 = sphi 0, %s112
      %s114 = sphi 0, %s112
      %s115 = sphi 0, %s114
      %s129 = sphi 0, %s115
      %s133 = sphi 0, %s133
      %s135 = sphi 0, %s133
      %s136 = sphi 0, %s135
      %s150 = sphi 0, %s136
      %s154 = sphi 0, %s154
      %s156 = sphi 0, %s154
      %s157 = sphi 0, %s156
      %s171 = sphi 0, %s157
      %s175 = sphi 0, %s175
      %s177 = sphi 0, %s175
      %s178 = sphi 0, %s177
      %s192 = sphi 0, %s178
      %s196 = sphi 0, %s196
      %s198 = sphi 0, %s196
      %s199 = sphi 0, %s198
      %s213 = sphi 0, %s199
      %s217 = sphi 0, %s217
      %s219 = sphi 0, %s217
      %s220 = sphi 0, %s219
      %s234 = sphi 0, %s220
      %s242 = sphi 0, %s244
      %s245 = sphi 0, %s242
      %s246 = sphi 0, %s245
      %s262 = sphi 0, %s246
    $region4: #{tpu_custom_call.1} parent=1 // loop_header_branch
      %25 = sbr.rel (%p23) target = $region8
    $region5: #{tpu_custom_call.1} parent=1 // loop_body
      %s27 = ssub.s32 %s22, 1
      %s28 = ssub.s32 %s22, 2
      %s35 = sadd.s32 1, %s30
      %p36 = scmp.ge.s32.totalorder %s35, 4
      %s37 = scalar_select %p36, 0, %s35
      %s38 = sadd.s32 1, %s29
      %s39 = scalar_select %p36, %s38, %s29
      %p40 = scmp.ge.s32.totalorder %s39, 1
      %s41 = scalar_select %p40, 0, %s39
      %s42 = ssub.s32 %s30, %s37
      %s43 = ssub.s32 %s29, %s41
      %s44 = sor.u32 %s42, %s43
      %p45 = scmp.eq.s32.totalorder %s44, 0
      %s47 = sadd.s32 %s46, 1
      %s48 = scalar_select %p45, %s46, %s47
      %p51 = pneg %p45
      %p52 = scmp.eq.s32.totalorder %s22, 3
      %p53 = por %p51, %p52
      %p54 = scmp.ne.s32.totalorder %s46, %s49
      %p55 = scmp.eq.s32.totalorder %s22, 0
      %p56 = por %p54, %p55
      %p57 = scmp.ne.s32.totalorder %s46, %s49
      %p58 = scmp.eq.s32.totalorder %s27, 3
      %p59 = por %p57, %p58
      %p60 = scmp.ne.s32.totalorder %s49, %s50
      %p61 = scmp.eq.s32.totalorder %s27, 0
      %p62 = por %p60, %p61
      %p63 = scmp.ne.s32.totalorder %s49, %s50
      %p64 = scmp.eq.s32.totalorder %s28, 3
      %p65 = por %p63, %p64
      %p67 = scmp.ne.s32.totalorder %s50, %s66
      %p68 = scmp.eq.s32.totalorder %s28, 0
      %p69 = por %p67, %p68
      %s71 = sadd.s32 %s70, 1
      %p74 = scmp.eq.s32.totalorder %s22, 3
      %p75 = scmp.ne.s32.totalorder %s70, %s72
      %p76 = scmp.eq.s32.totalorder %s22, 0
      %p77 = por %p75, %p76
      %p78 = scmp.ne.s32.totalorder %s70, %s72
      %p79 = scmp.eq.s32.totalorder %s27, 3
      %p80 = por %p78, %p79
      %p81 = scmp.ne.s32.totalorder %s72, %s73
      %p82 = scmp.eq.s32.totalorder %s27, 0
      %p83 = por %p81, %p82
      %p84 = scmp.ne.s32.totalorder %s72, %s73
      %p85 = scmp.eq.s32.totalorder %s28, 3
      %p86 = por %p84, %p85
      %p88 = scmp.ne.s32.totalorder %s73, %s87
      %p89 = scmp.eq.s32.totalorder %s28, 0
      %p90 = por %p88, %p89
      %s92 = sadd.s32 %s91, 1
      %p95 = scmp.eq.s32.totalorder %s22, 3
      %p96 = scmp.ne.s32.totalorder %s91, %s93
      %p97 = scmp.eq.s32.totalorder %s22, 0
      %p98 = por %p96, %p97
      %p99 = scmp.ne.s32.totalorder %s91, %s93
      %p100 = scmp.eq.s32.totalorder %s27, 3
      %p101 = por %p99, %p100
      %p102 = scmp.ne.s32.totalorder %s93, %s94
      %p103 = scmp.eq.s32.totalorder %s27, 0
      %p104 = por %p102, %p103
      %p105 = scmp.ne.s32.totalorder %s93, %s94
      %p106 = scmp.eq.s32.totalorder %s28, 3
      %p107 = por %p105, %p106
      %p109 = scmp.ne.s32.totalorder %s94, %s108
      %p110 = scmp.eq.s32.totalorder %s28, 0
      %p111 = por %p109, %p110
      %s113 = sadd.s32 %s112, 1
      %p116 = scmp.eq.s32.totalorder %s22, 3
      %p117 = scmp.ne.s32.totalorder %s112, %s114
      %p118 = scmp.eq.s32.totalorder %s22, 0
      %p119 = por %p117, %p118
      %p120 = scmp.ne.s32.totalorder %s112, %s114
      %p121 = scmp.eq.s32.totalorder %s27, 3
      %p122 = por %p120, %p121
      %p123 = scmp.ne.s32.totalorder %s114, %s115
      %p124 = scmp.eq.s32.totalorder %s27, 0
      %p125 = por %p123, %p124
      %p126 = scmp.ne.s32.totalorder %s114, %s115
      %p127 = scmp.eq.s32.totalorder %s28, 3
      %p128 = por %p126, %p127
      %p130 = scmp.ne.s32.totalorder %s115, %s129
      %p131 = scmp.eq.s32.totalorder %s28, 0
      %p132 = por %p130, %p131
      %s134 = sadd.s32 %s133, 1
      %p137 = scmp.eq.s32.totalorder %s22, 3
      %p138 = scmp.ne.s32.totalorder %s133, %s135
      %p139 = scmp.eq.s32.totalorder %s22, 0
      %p140 = por %p138, %p139
      %p141 = scmp.ne.s32.totalorder %s133, %s135
      %p142 = scmp.eq.s32.totalorder %s27, 3
      %p143 = por %p141, %p142
      %p144 = scmp.ne.s32.totalorder %s135, %s136
      %p145 = scmp.eq.s32.totalorder %s27, 0
      %p146 = por %p144, %p145
      %p147 = scmp.ne.s32.totalorder %s135, %s136
      %p148 = scmp.eq.s32.totalorder %s28, 3
      %p149 = por %p147, %p148
      %p151 = scmp.ne.s32.totalorder %s136, %s150
      %p152 = scmp.eq.s32.totalorder %s28, 0
      %p153 = por %p151, %p152
      %s155 = sadd.s32 %s154, 1
      %p158 = scmp.eq.s32.totalorder %s22, 3
      %p159 = scmp.ne.s32.totalorder %s154, %s156
      %p160 = scmp.eq.s32.totalorder %s22, 0
      %p161 = por %p159, %p160
      %p162 = scmp.ne.s32.totalorder %s154, %s156
      %p163 = scmp.eq.s32.totalorder %s27, 3
      %p164 = por %p162, %p163
      %p165 = scmp.ne.s32.totalorder %s156, %s157
      %p166 = scmp.eq.s32.totalorder %s27, 0
      %p167 = por %p165, %p166
      %p168 = scmp.ne.s32.totalorder %s156, %s157
      %p169 = scmp.eq.s32.totalorder %s28, 3
      %p170 = por %p168, %p169
      %p172 = scmp.ne.s32.totalorder %s157, %s171
      %p173 = scmp.eq.s32.totalorder %s28, 0
      %p174 = por %p172, %p173
      %s176 = sadd.s32 %s175, 1
      %p179 = scmp.eq.s32.totalorder %s22, 3
      %p180 = scmp.ne.s32.totalorder %s175, %s177
      %p181 = scmp.eq.s32.totalorder %s22, 0
      %p182 = por %p180, %p181
      %p183 = scmp.ne.s32.totalorder %s175, %s177
      %p184 = scmp.eq.s32.totalorder %s27, 3
      %p185 = por %p183, %p184
      %p186 = scmp.ne.s32.totalorder %s177, %s178
      %p187 = scmp.eq.s32.totalorder %s27, 0
      %p188 = por %p186, %p187
      %p189 = scmp.ne.s32.totalorder %s177, %s178
      %p190 = scmp.eq.s32.totalorder %s28, 3
      %p191 = por %p189, %p190
      %p193 = scmp.ne.s32.totalorder %s178, %s192
      %p194 = scmp.eq.s32.totalorder %s28, 0
      %p195 = por %p193, %p194
      %s197 = sadd.s32 %s196, 1
      %p200 = scmp.eq.s32.totalorder %s22, 3
      %p201 = scmp.ne.s32.totalorder %s196, %s198
      %p202 = scmp.eq.s32.totalorder %s22, 0
      %p203 = por %p201, %p202
      %p204 = scmp.ne.s32.totalorder %s196, %s198
      %p205 = scmp.eq.s32.totalorder %s27, 3
      %p206 = por %p204, %p205
      %p207 = scmp.ne.s32.totalorder %s198, %s199
      %p208 = scmp.eq.s32.totalorder %s27, 0
      %p209 = por %p207, %p208
      %p210 = scmp.ne.s32.totalorder %s198, %s199
      %p211 = scmp.eq.s32.totalorder %s28, 3
      %p212 = por %p210, %p211
      %p214 = scmp.ne.s32.totalorder %s199, %s213
      %p215 = scmp.eq.s32.totalorder %s28, 0
      %p216 = por %p214, %p215
      %s218 = sadd.s32 %s217, 1
      %p221 = scmp.eq.s32.totalorder %s22, 3
      %p222 = scmp.ne.s32.totalorder %s217, %s219
      %p223 = scmp.eq.s32.totalorder %s22, 0
      %p224 = por %p222, %p223
      %p225 = scmp.ne.s32.totalorder %s217, %s219
      %p226 = scmp.eq.s32.totalorder %s27, 3
      %p227 = por %p225, %p226
      %p228 = scmp.ne.s32.totalorder %s219, %s220
      %p229 = scmp.eq.s32.totalorder %s27, 0
      %p230 = por %p228, %p229
      %p231 = scmp.ne.s32.totalorder %s219, %s220
      %p232 = scmp.eq.s32.totalorder %s28, 3
      %p233 = por %p231, %p232
      %p235 = scmp.ne.s32.totalorder %s220, %s234
      %p236 = scmp.eq.s32.totalorder %s28, 0
      %p237 = por %p235, %p236
      %s238 = ssub.s32 %s30, %s37
      %s239 = ssub.s32 %s29, %s41
      %s240 = sor.u32 %s238, %s239
      %p241 = scmp.eq.s32.totalorder %s240, 0
      %s243 = sadd.s32 %s242, 1
      %s244 = scalar_select %p241, %s242, %s243
      %p247 = pneg %p241
      %p248 = scmp.eq.s32.totalorder %s22, 3
      %p249 = por %p247, %p248
      %p250 = scmp.ne.s32.totalorder %s242, %s245
      %p251 = scmp.eq.s32.totalorder %s22, 0
      %p252 = por %p250, %p251
      %p253 = scmp.ne.s32.totalorder %s242, %s245
      %p254 = scmp.eq.s32.totalorder %s27, 3
      %p255 = por %p253, %p254
      %p256 = scmp.ne.s32.totalorder %s245, %s246
      %p257 = scmp.eq.s32.totalorder %s27, 0
      %p258 = por %p256, %p257
      %p259 = scmp.ne.s32.totalorder %s245, %s246
      %p260 = scmp.eq.s32.totalorder %s28, 3
      %p261 = por %p259, %p260
      %p263 = scmp.ne.s32.totalorder %s246, %s262
      %p264 = scmp.eq.s32.totalorder %s28, 0
      %p265 = por %p263, %p264
      %p266 = scmp.le.s32.totalorder 1, %s22
      %p267 = scmp.lt.s32.totalorder %s22, 5
      %p268 = pnand %p266, %p267
      %p269 = pneg %p268
      // Predicated region
      $region9: #{tpu_custom_call.1} parent=5 // pred_check
        _
      $region10: #{tpu_custom_call.1} parent=5 // pred_check_branch
        %271 = sbr.rel (%p268) target = $region12
      $region11: #{tpu_custom_call.1} parent=5 // pred_region
        %s272 = ssub.s32 %s22, 1
        // Predicated region
        $region13: #{tpu_custom_call.1} parent=11 // pred_check
          %p273 = pneg %p83
        $region14: #{tpu_custom_call.1} parent=11 // pred_check_branch
          %275 = sbr.rel (%p273) target = $region16
        $region15: #{tpu_custom_call.1} parent=11 // pred_region
          %s277 = ssub.s32 4096, 4096
          %278 = vsyncadd [#allocation8], %s277
          %s279 = sshll.u32 [#allocation7], 4
          %s280 = int_to_ptr.vmem [resolvable:$true] %s279
          %285 = dma.hbm_to_vmem [thread:$0]  %s1, 4096, %s280, [#allocation8], 256, 256, 16
        $region16: #{tpu_custom_call.1} parent=11 // pred_fallthru
          _
        // Predicated region
        $region17: #{tpu_custom_call.1} parent=11 // pred_check
          %p286 = pneg %p104
        $region18: #{tpu_custom_call.1} parent=11 // pred_check_branch
          %288 = sbr.rel (%p286) target = $region20
        $region19: #{tpu_custom_call.1} parent=11 // pred_region
          _
        $region20: #{tpu_custom_call.1} parent=11 // pred_fallthru
          _
        // Predicated region
        $region21: #{tpu_custom_call.1} parent=11 // pred_check
          %p289 = pneg %p125
        $region22: #{tpu_custom_call.1} parent=11 // pred_check_branch
          %291 = sbr.rel (%p289) target = $region24
        $region23: #{tpu_custom_call.1} parent=11 // pred_region
          _
        $region24: #{tpu_custom_call.1} parent=11 // pred_fallthru
          _
        // Predicated region
        $region25: #{tpu_custom_call.1} parent=11 // pred_check
          %p292 = pneg %p146
        $region26: #{tpu_custom_call.1} parent=11 // pred_check_branch
          %294 = sbr.rel (%p292) target = $region28
        $region27: #{tpu_custom_call.1} parent=11 // pred_region
          _
        $region28: #{tpu_custom_call.1} parent=11 // pred_fallthru
          _
        // Predicated region
        $region29: #{tpu_custom_call.1} parent=11 // pred_check
          %p295 = pneg %p167
        $region30: #{tpu_custom_call.1} parent=11 // pred_check_branch
          %297 = sbr.rel (%p295) target = $region32
        $region31: #{tpu_custom_call.1} parent=11 // pred_region
          %s299 = ssub.s32 4096, 4096
          %300 = vsyncadd [#allocation8], %s299
          %s301 = sshll.u32 [#allocation9], 4
          %s302 = int_to_ptr.vmem [resolvable:$true] %s301
          %307 = dma.hbm_to_vmem [thread:$0]  %s5, 4096, %s302, [#allocation8], 64, 64, 4
        $region32: #{tpu_custom_call.1} parent=11 // pred_fallthru
          _
        // Predicated region
        $region33: #{tpu_custom_call.1} parent=11 // pred_check
          %p308 = pneg %p188
        $region34: #{tpu_custom_call.1} parent=11 // pred_check_branch
          %310 = sbr.rel (%p308) target = $region36
        $region35: #{tpu_custom_call.1} parent=11 // pred_region
          _
        $region36: #{tpu_custom_call.1} parent=11 // pred_fallthru
          _
        // Predicated region
        $region37: #{tpu_custom_call.1} parent=11 // pred_check
          %p311 = pneg %p209
        $region38: #{tpu_custom_call.1} parent=11 // pred_check_branch
          %313 = sbr.rel (%p311) target = $region40
        $region39: #{tpu_custom_call.1} parent=11 // pred_region
          _
        $region40: #{tpu_custom_call.1} parent=11 // pred_fallthru
          _
        // Predicated region
        $region41: #{tpu_custom_call.1} parent=11 // pred_check
          %p314 = pneg %p230
        $region42: #{tpu_custom_call.1} parent=11 // pred_check_branch
          %316 = sbr.rel (%p314) target = $region44
        $region43: #{tpu_custom_call.1} parent=11 // pred_region
          _
        $region44: #{tpu_custom_call.1} parent=11 // pred_fallthru
          _
      $region12: #{tpu_custom_call.1} parent=5 // pred_fallthru
        _
      %p317 = scmp.lt.s32.totalorder %s22, 4
      // Predicated region
      $region45: #{tpu_custom_call.1} parent=5 // pred_check
        %p318 = pneg %p317
      $region46: #{tpu_custom_call.1} parent=5 // pred_check_branch
        %320 = sbr.rel (%p318) target = $region48
      $region47: #{tpu_custom_call.1} parent=5 // pred_region
        // Predicated region
        $region49: #{tpu_custom_call.1} parent=47 // pred_check
          %p321 = pneg %p56
        $region50: #{tpu_custom_call.1} parent=47 // pred_check_branch
          %323 = sbr.rel (%p321) target = $region52
        $region51: #{tpu_custom_call.1} parent=47 // pred_region
          %s324 = sand.u32 %s46, 1
          %s325 = scalar_lea.sflag [#allocation5], %s324
          %s326 = sand.u32 %s46, 1
          %s327 = smul.addr %s326, 16
          %s328 = scalar_lea.vmem [#allocation4], %s327
          %s329 = smul.u32 4, %s29
          %s331 = ssub.s32 256, 256
          %332 = vsyncadd %s325, %s331
          %s333 = smul.addr %s30, 4
          %s334 = sadd.s32 %s329, %s333
          %s335 = smul.addr %s334, 64
          %s336 = scalar_lea.hbm %s0, %s335
          %s337 = sshll.u32 %s328, 4
          %s338 = int_to_ptr.vmem [resolvable:$true] %s337
          %343 = dma.hbm_to_vmem [thread:$0]  %s336, 256, %s338, %s325, 64, 64, 4
        $region52: #{tpu_custom_call.1} parent=47 // pred_fallthru
          _
      $region48: #{tpu_custom_call.1} parent=5 // pred_fallthru
        _
      %p344 = scmp.le.s32.totalorder 1, %s22
      %p345 = scmp.lt.s32.totalorder %s22, 5
      %p346 = pnand %p344, %p345
      %p347 = pneg %p346
      // Predicated region
      $region53: #{tpu_custom_call.1} parent=5 // pred_check
        _
      $region54: #{tpu_custom_call.1} parent=5 // pred_check_branch
        %349 = sbr.rel (%p346) target = $region56
      $region55: #{tpu_custom_call.1} parent=5 // pred_region
        %s350 = ssub.s32 %s22, 1
        %s351 = sand.u32 %s49, 1
        %s352 = scalar_lea.sflag [#allocation5], %s351
        %s353 = sand.u32 %s49, 1
        %s354 = smul.addr %s353, 16
        %s355 = scalar_lea.vmem [#allocation4], %s354
        // Predicated region
        $region57: #{tpu_custom_call.1} parent=55 // pred_check
          %p356 = pneg %p62
        $region58: #{tpu_custom_call.1} parent=55 // pred_check_branch
          %358 = sbr.rel (%p356) target = $region60
        $region59: #{tpu_custom_call.1} parent=55 // pred_region
          %359 = dma.done %s352, 256
        $region60: #{tpu_custom_call.1} parent=55 // pred_fallthru
          _
        // Predicated region
        $region61: #{tpu_custom_call.1} parent=55 // pred_check
          %p360 = pneg %p83
        $region62: #{tpu_custom_call.1} parent=55 // pred_check_branch
          %362 = sbr.rel (%p360) target = $region64
        $region63: #{tpu_custom_call.1} parent=55 // pred_region
          %363 = dma.done [#allocation8], 4096
        $region64: #{tpu_custom_call.1} parent=55 // pred_fallthru
          _
        // Predicated region
        $region65: #{tpu_custom_call.1} parent=55 // pred_check
          %p364 = pneg %p167
        $region66: #{tpu_custom_call.1} parent=55 // pred_check_branch
          %366 = sbr.rel (%p364) target = $region68
        $region67: #{tpu_custom_call.1} parent=55 // pred_region
          %367 = dma.done [#allocation8], 4096
        $region68: #{tpu_custom_call.1} parent=55 // pred_fallthru
          _
        %s368 = sand.u32 %s49, 1
        %s369 = scalar_lea.sflag [#allocation5], %s368
        %s370 = sand.u32 %s49, 1
        %s371 = smul.addr %s370, 16
        %s372 = scalar_lea.vmem [#allocation4], %s371
        %p373 = pneg %p62
        %p374 = pneg %p59
        %p375 = pneg %p83
        %p376 = pneg %p80
        %p377 = pneg %p104
        %p378 = pneg %p101
        %p379 = pneg %p125
        %p380 = pneg %p122
        %p381 = pneg %p146
        %p382 = pneg %p143
        %p383 = pneg %p167
        %p384 = pneg %p164
        %p385 = pneg %p188
        %p386 = pneg %p185
        %p387 = pneg %p209
        %p388 = pneg %p206
        %p389 = pneg %p230
        %p390 = pneg %p227
        %p391 = pneg %p258
        %p392 = pneg %p255
        %s393 = sand.u32 %s245, 1
        %s394 = scalar_lea.sflag [#allocation6], %s393
        %s395 = sand.u32 %s245, 1
        %s396 = smul.addr %s395, 32
        %s397 = scalar_lea.vmem [#allocation10], %s396
        %s398 = smul.u32 4, %s31
        %s399 = smul.u32 4, %s31
        %p401 = scmp.eq.s32.totalorder %s32, 0
        // Predicated region
        $region69: #{tpu_custom_call.1} parent=55 // pred_check
          %p402 = pneg %p401
        $region70: #{tpu_custom_call.1} parent=55 // pred_check_branch
          %404 = sbr.rel (%p402) target = $region72
        $region71: #{tpu_custom_call.1} parent=55 // pred_region
          %405 = vst [vmem:[#allocation2] sm:$0xff] 0.0
          %406 = vst [vmem:[#allocation2 + $0x8] sm:$0xff] 0.0
          %407 = vst [vmem:[#allocation2 + $0x10] sm:$0xff] 0.0
          %408 = vst [vmem:[#allocation2 + $0x18] sm:$0xff] 0.0
          %409 = vst [vmem:[#allocation2 + $0x20] sm:$0xff] 0.0
          %410 = vst [vmem:[#allocation2 + $0x28] sm:$0xff] 0.0
          %411 = vst [vmem:[#allocation2 + $0x30] sm:$0xff] 0.0
          %412 = vst [vmem:[#allocation2 + $0x38] sm:$0xff] 0.0
          %413 = vst [vmem:[#allocation2 + $0x40] sm:$0xff] 0.0
          %414 = vst [vmem:[#allocation2 + $0x48] sm:$0xff] 0.0
          %415 = vst [vmem:[#allocation2 + $0x50] sm:$0xff] 0.0
          %416 = vst [vmem:[#allocation2 + $0x58] sm:$0xff] 0.0
          %417 = vst [vmem:[#allocation2 + $0x60] sm:$0xff] 0.0
          %418 = vst [vmem:[#allocation2 + $0x68] sm:$0xff] 0.0
          %419 = vst [vmem:[#allocation2 + $0x70] sm:$0xff] 0.0
          %420 = vst [vmem:[#allocation2 + $0x78] sm:$0xff] 0.0
          %421 = vst [vmem:[#allocation3] sm:$0xff] 0.0
          %422 = vst [vmem:[#allocation3 + $0x8] sm:$0xff] 0.0
          %423 = vst [vmem:[#allocation3 + $0x10] sm:$0xff] 0.0
          %424 = vst [vmem:[#allocation3 + $0x18] sm:$0xff] 0.0
        $region72: #{tpu_custom_call.1} parent=55 // pred_fallthru
          _
        %v425 = vld [vmem:[%s355] sm:$0xf]
        %v426 = vld [vmem:[%s355 + $0x4] sm:$0xf]
        %v427 = vld [vmem:[%s355 + $0x8] sm:$0xf]
        %v428 = vld [vmem:[%s355 + $0xc] sm:$0xf]
        %v429 = vld [vmem:[#allocation7] sm:$0xff]
        %v430 = vld [vmem:[#allocation7 + $0x8] sm:$0xff]
        %v431 = vld [vmem:[#allocation7 + $0x10] sm:$0xff]
        %v432 = vld [vmem:[#allocation7 + $0x18] sm:$0xff]
        %v433 = vld [vmem:[#allocation7 + $0x20] sm:$0xff]
        %v434 = vld [vmem:[#allocation7 + $0x28] sm:$0xff]
        %v435 = vld [vmem:[#allocation7 + $0x30] sm:$0xff]
        %v436 = vld [vmem:[#allocation7 + $0x38] sm:$0xff]
        %v437 = vld [vmem:[#allocation7 + $0x40] sm:$0xff]
        %v438 = vld [vmem:[#allocation7 + $0x48] sm:$0xff]
        %v439 = vld [vmem:[#allocation7 + $0x50] sm:$0xff]
        %v440 = vld [vmem:[#allocation7 + $0x58] sm:$0xff]
        %v441 = vld [vmem:[#allocation7 + $0x60] sm:$0xff]
        %v442 = vld [vmem:[#allocation7 + $0x68] sm:$0xff]
        %v443 = vld [vmem:[#allocation7 + $0x70] sm:$0xff]
        %v444 = vld [vmem:[#allocation7 + $0x78] sm:$0xff]
        %v445 = vld [vmem:[#allocation7 + $0x80] sm:$0xff]
        %v446 = vld [vmem:[#allocation7 + $0x88] sm:$0xff]
        %v447 = vld [vmem:[#allocation7 + $0x90] sm:$0xff]
        %v448 = vld [vmem:[#allocation7 + $0x98] sm:$0xff]
        %v449 = vld [vmem:[#allocation7 + $0xa0] sm:$0xff]
        %v450 = vld [vmem:[#allocation7 + $0xa8] sm:$0xff]
        %v451 = vld [vmem:[#allocation7 + $0xb0] sm:$0xff]
        %v452 = vld [vmem:[#allocation7 + $0xb8] sm:$0xff]
        %v453 = vld [vmem:[#allocation7 + $0xc0] sm:$0xff]
        %v454 = vld [vmem:[#allocation7 + $0xc8] sm:$0xff]
        %v455 = vld [vmem:[#allocation7 + $0xd0] sm:$0xff]
        %v456 = vld [vmem:[#allocation7 + $0xd8] sm:$0xff]
        %v457 = vld [vmem:[#allocation7 + $0xe0] sm:$0xff]
        %v458 = vld [vmem:[#allocation7 + $0xe8] sm:$0xff]
        %v459 = vld [vmem:[#allocation7 + $0xf0] sm:$0xff]
        %v460 = vld [vmem:[#allocation7 + $0xf8] sm:$0xff]
        %v461 = vld [vmem:[%s2] sm:$0xf]
        %v463 = vlaneseq
        %v464 = vshrl.u32 %v463, 7
        %v465 = vsub.s32 0, %v464
        %v466 = vrot.slane %v461, %v465
        %v467 = vlaneseq
        %v468 = vshrl.u32 %v467, 7
        %v469 = vsub.s32 1, %v468
        %v470 = vrot.slane %v461, %v469
        %v471 = vlaneseq
        %v472 = vshrl.u32 %v471, 7
        %v473 = vsub.s32 2, %v472
        %v474 = vrot.slane %v461, %v473
        %v475 = vlaneseq
        %v476 = vshrl.u32 %v475, 7
        %v477 = vsub.s32 3, %v476
        %v478 = vrot.slane %v461, %v477
        %v487 = vunpack.c.l.b16 %v425
        %v488 = vunpack.c.l.b16 %v426
        %v489 = vunpack.c.l.b16 %v427
        %v490 = vunpack.c.l.b16 %v428
        %v491 = vpack.c.b16 %v488, %v487
        %v492 = vpack.c.b16 %v490, %v489
        %v527 = vunpack.c.l.b16 %v429
        %v528 = vunpack.c.h.b16 %v429
        %v529 = vunpack.c.l.b16 %v430
        %v530 = vunpack.c.h.b16 %v430
        %v531 = vunpack.c.l.b16 %v431
        %v532 = vunpack.c.h.b16 %v431
        %v533 = vunpack.c.l.b16 %v432
        %v534 = vunpack.c.h.b16 %v432
        %v535 = vunpack.c.l.b16 %v433
        %v536 = vunpack.c.h.b16 %v433
        %v537 = vunpack.c.l.b16 %v434
        %v538 = vunpack.c.h.b16 %v434
        %v539 = vunpack.c.l.b16 %v435
        %v540 = vunpack.c.h.b16 %v435
        %v541 = vunpack.c.l.b16 %v436
        %v542 = vunpack.c.h.b16 %v436
        %v543 = vunpack.c.l.b16 %v437
        %v544 = vunpack.c.h.b16 %v437
        %v545 = vunpack.c.l.b16 %v438
        %v546 = vunpack.c.h.b16 %v438
        %v547 = vunpack.c.l.b16 %v439
        %v548 = vunpack.c.h.b16 %v439
        %v549 = vunpack.c.l.b16 %v440
        %v550 = vunpack.c.h.b16 %v440
        %v551 = vunpack.c.l.b16 %v441
        %v552 = vunpack.c.h.b16 %v441
        %v553 = vunpack.c.l.b16 %v442
        %v554 = vunpack.c.h.b16 %v442
        %v555 = vunpack.c.l.b16 %v443
        %v556 = vunpack.c.h.b16 %v443
        %v557 = vunpack.c.l.b16 %v444
        %v558 = vunpack.c.h.b16 %v444
        %v559 = vunpack.c.l.b16 %v445
        %v560 = vunpack.c.h.b16 %v445
        %v561 = vunpack.c.l.b16 %v446
        %v562 = vunpack.c.h.b16 %v446
        %v563 = vunpack.c.l.b16 %v447
        %v564 = vunpack.c.h.b16 %v447
        %v565 = vunpack.c.l.b16 %v448
        %v566 = vunpack.c.h.b16 %v448
        %v567 = vunpack.c.l.b16 %v449
        %v568 = vunpack.c.h.b16 %v449
        %v569 = vunpack.c.l.b16 %v450
        %v570 = vunpack.c.h.b16 %v450
        %v571 = vunpack.c.l.b16 %v451
        %v572 = vunpack.c.h.b16 %v451
        %v573 = vunpack.c.l.b16 %v452
        %v574 = vunpack.c.h.b16 %v452
        %v575 = vunpack.c.l.b16 %v453
        %v576 = vunpack.c.h.b16 %v453
        %v577 = vunpack.c.l.b16 %v454
        %v578 = vunpack.c.h.b16 %v454
        %v579 = vunpack.c.l.b16 %v455
        %v580 = vunpack.c.h.b16 %v455
        %v581 = vunpack.c.l.b16 %v456
        %v582 = vunpack.c.h.b16 %v456
        %v583 = vunpack.c.l.b16 %v457
        %v584 = vunpack.c.h.b16 %v457
        %v585 = vunpack.c.l.b16 %v458
        %v586 = vunpack.c.h.b16 %v458
        %v587 = vunpack.c.l.b16 %v459
        %v588 = vunpack.c.h.b16 %v459
        %v589 = vunpack.c.l.b16 %v460
        %v590 = vunpack.c.h.b16 %v460
        %v591 = vpack.c.b16 %v531, %v527
        %v592 = vpack.c.b16 %v532, %v528
        %v593 = vpack.c.b16 %v533, %v529
        %v594 = vpack.c.b16 %v534, %v530
        %v595 = vpack.c.b16 %v539, %v535
        %v596 = vpack.c.b16 %v540, %v536
        %v597 = vpack.c.b16 %v541, %v537
        %v598 = vpack.c.b16 %v542, %v538
        %v599 = vpack.c.b16 %v547, %v543
        %v600 = vpack.c.b16 %v548, %v544
        %v601 = vpack.c.b16 %v549, %v545
        %v602 = vpack.c.b16 %v550, %v546
        %v603 = vpack.c.b16 %v555, %v551
        %v604 = vpack.c.b16 %v556, %v552
        %v605 = vpack.c.b16 %v557, %v553
        %v606 = vpack.c.b16 %v558, %v554
        %v607 = vpack.c.b16 %v563, %v559
        %v608 = vpack.c.b16 %v564, %v560
        %v609 = vpack.c.b16 %v565, %v561
        %v610 = vpack.c.b16 %v566, %v562
        %v611 = vpack.c.b16 %v571, %v567
        %v612 = vpack.c.b16 %v572, %v568
        %v613 = vpack.c.b16 %v573, %v569
        %v614 = vpack.c.b16 %v574, %v570
        %v615 = vpack.c.b16 %v579, %v575
        %v616 = vpack.c.b16 %v580, %v576
        %v617 = vpack.c.b16 %v581, %v577
        %v618 = vpack.c.b16 %v582, %v578
        %v619 = vpack.c.b16 %v587, %v583
        %v620 = vpack.c.b16 %v588, %v584
        %v621 = vpack.c.b16 %v589, %v585
        %v622 = vpack.c.b16 %v590, %v586
        %655 = vmatprep.subr.bf16.mxu0 %v592
        %656 = vmatpush1.bf16.msra.mxu0 %v591
        %657 = vmatprep.subr.bf16.mxu0 %v596
        %658 = vmatpush1.bf16.msra.mxu0 %v595
        %659 = vmatprep.subr.bf16.mxu0 %v600
        %660 = vmatpush1.bf16.msra.mxu0 %v599
        %661 = vmatprep.subr.bf16.mxu0 %v604
        %662 = vmatpush1.bf16.msra.mxu0 %v603
        %663 = vmatprep.subr.bf16.mxu0 %v608
        %664 = vmatpush1.bf16.msra.mxu0 %v607
        %665 = vmatprep.subr.bf16.mxu0 %v612
        %666 = vmatpush1.bf16.msra.mxu0 %v611
        %667 = vmatprep.subr.bf16.mxu0 %v616
        %668 = vmatpush1.bf16.msra.mxu0 %v615
        %669 = vmatprep.subr.bf16.mxu0 %v620
        %670 = vmatpush1.bf16.msra.mxu0 %v619
        %671 = vmatprep.subr.bf16.mxu0 0
        %672 = vmatpush1.bf16.msra.mxu0 0
        %673 = vmatprep.subr.bf16.mxu0 0
        %674 = vmatpush1.bf16.msra.mxu0 0
        %675 = vmatprep.subr.bf16.mxu0 0
        %676 = vmatpush1.bf16.msra.mxu0 0
        %677 = vmatprep.subr.bf16.mxu0 0
        %678 = vmatpush1.bf16.msra.mxu0 0
        %679 = vmatprep.subr.bf16.mxu0 0
        %680 = vmatpush1.bf16.msra.mxu0 0
        %681 = vmatprep.subr.bf16.mxu0 0
        %682 = vmatpush1.bf16.msra.mxu0 0
        %683 = vmatprep.subr.bf16.mxu0 0
        %684 = vmatpush1.bf16.msra.mxu0 0
        %685 = vmatprep.subr.bf16.mxu0 0
        %686 = vmatpush1.bf16.msra.mxu0 0
        %687 = vmatprep.mubr.bf16.mxu0 0
        %688 = vmatmul.mubr.bf16.gmra.mrb[0].mxu0 %v491
        %v689 = vpop.f32.mrb[0].mxu0
        %v690 = vadd.f32 %v466, %v689
        %v691 = vpop.f32.mrb[0].mxu0
        %v692 = vadd.f32 %v470, %v691
        %v693 = vpop.f32.mrb[0].mxu0
        %v694 = vadd.f32 %v466, %v693
        %v695 = vpop.f32.mrb[0].mxu0
        %v696 = vadd.f32 %v470, %v695
        %697 = vmatprep.mubr.bf16.mxu0 0
        %698 = vmatmul.mubr.bf16.gmra.mrb[0].mxu0 %v492
        %v699 = vpop.f32.mrb[0].mxu0
        %v700 = vadd.f32 %v466, %v699
        %v701 = vpop.f32.mrb[0].mxu0
        %v702 = vadd.f32 %v470, %v701
        %v703 = vpop.f32.mrb[0].mxu0
        %v704 = vadd.f32 %v466, %v703
        %v705 = vpop.f32.mrb[0].mxu0
        %v706 = vadd.f32 %v470, %v705
        %707 = vdwg.mxu0
        %708 = vmatprep.subr.bf16.mxu0 %v594
        %709 = vmatpush1.bf16.msra.mxu0 %v593
        %710 = vmatprep.subr.bf16.mxu0 %v598
        %711 = vmatpush1.bf16.msra.mxu0 %v597
        %712 = vmatprep.subr.bf16.mxu0 %v602
        %713 = vmatpush1.bf16.msra.mxu0 %v601
        %714 = vmatprep.subr.bf16.mxu0 %v606
        %715 = vmatpush1.bf16.msra.mxu0 %v605
        %716 = vmatprep.subr.bf16.mxu0 %v610
        %717 = vmatpush1.bf16.msra.mxu0 %v609
        %718 = vmatprep.subr.bf16.mxu0 %v614
        %719 = vmatpush1.bf16.msra.mxu0 %v613
        %720 = vmatprep.subr.bf16.mxu0 %v618
        %721 = vmatpush1.bf16.msra.mxu0 %v617
        %722 = vmatprep.subr.bf16.mxu0 %v622
        %723 = vmatpush1.bf16.msra.mxu0 %v621
        %724 = vmatprep.subr.bf16.mxu0 0
        %725 = vmatpush1.bf16.msra.mxu0 0
        %726 = vmatprep.subr.bf16.mxu0 0
        %727 = vmatpush1.bf16.msra.mxu0 0
        %728 = vmatprep.subr.bf16.mxu0 0
        %729 = vmatpush1.bf16.msra.mxu0 0
        %730 = vmatprep.subr.bf16.mxu0 0
        %731 = vmatpush1.bf16.msra.mxu0 0
        %732 = vmatprep.subr.bf16.mxu0 0
        %733 = vmatpush1.bf16.msra.mxu0 0
        %734 = vmatprep.subr.bf16.mxu0 0
        %735 = vmatpush1.bf16.msra.mxu0 0
        %736 = vmatprep.subr.bf16.mxu0 0
        %737 = vmatpush1.bf16.msra.mxu0 0
        %738 = vmatprep.subr.bf16.mxu0 0
        %739 = vmatpush1.bf16.msra.mxu0 0
        %740 = vmatprep.mubr.bf16.mxu0 0
        %741 = vmatmul.mubr.bf16.gmra.mrb[0].mxu0 %v491
        %v742 = vpop.f32.mrb[0].mxu0
        %v743 = vadd.f32 %v474, %v742
        %v744 = vpop.f32.mrb[0].mxu0
        %v745 = vadd.f32 %v478, %v744
        %v746 = vpop.f32.mrb[0].mxu0
        %v747 = vadd.f32 %v474, %v746
        %v748 = vpop.f32.mrb[0].mxu0
        %v749 = vadd.f32 %v478, %v748
        %750 = vmatprep.mubr.bf16.mxu0 0
        %751 = vmatmul.mubr.bf16.gmra.mrb[0].mxu0 %v492
        %v752 = vpop.f32.mrb[0].mxu0
        %v753 = vadd.f32 %v474, %v752
        %v754 = vpop.f32.mrb[0].mxu0
        %v755 = vadd.f32 %v478, %v754
        %v756 = vpop.f32.mrb[0].mxu0
        %v757 = vadd.f32 %v474, %v756
        %v758 = vpop.f32.mrb[0].mxu0
        %v759 = vadd.f32 %v478, %v758
        %760 = vdwg.mxu0
        %v761 = vadd.f32 %v690, %v692
        %v762 = vadd.f32 %v761, %v743
        %v763 = vadd.f32 %v762, %v745
        %764 = vadd.xlane.f32.xlu0 %v763
        %v765 = vpop.xlane.xlu0 %764
        %v766 = vadd.f32 %v694, %v696
        %v767 = vadd.f32 %v766, %v747
        %v768 = vadd.f32 %v767, %v749
        %769 = vadd.xlane.f32.xlu0 %v768
        %v770 = vpop.xlane.xlu0 %769
        %v771 = vadd.f32 %v700, %v702
        %v772 = vadd.f32 %v771, %v753
        %v773 = vadd.f32 %v772, %v755
        %774 = vadd.xlane.f32.xlu0 %v773
        %v775 = vpop.xlane.xlu0 %774
        %v776 = vadd.f32 %v704, %v706
        %v777 = vadd.f32 %v776, %v757
        %v778 = vadd.f32 %v777, %v759
        %779 = vadd.xlane.f32.xlu0 %v778
        %v780 = vpop.xlane.xlu0 %779
        %v781 = vmul.f32 %v765, 0.001953125
        %v782 = vmul.f32 %v770, 0.001953125
        %v783 = vmul.f32 %v775, 0.001953125
        %v784 = vmul.f32 %v780, 0.001953125
        %v785 = vmul.f32 %v690, %v690
        %v786 = vmul.f32 %v692, %v692
        %v787 = vmul.f32 %v743, %v743
        %v788 = vmul.f32 %v745, %v745
        %v789 = vmul.f32 %v694, %v694
        %v790 = vmul.f32 %v696, %v696
        %v791 = vmul.f32 %v747, %v747
        %v792 = vmul.f32 %v749, %v749
        %v793 = vmul.f32 %v700, %v700
        %v794 = vmul.f32 %v702, %v702
        %v795 = vmul.f32 %v753, %v753
        %v796 = vmul.f32 %v755, %v755
        %v797 = vmul.f32 %v704, %v704
        %v798 = vmul.f32 %v706, %v706
        %v799 = vmul.f32 %v757, %v757
        %v800 = vmul.f32 %v759, %v759
        %v801 = vadd.f32 %v785, %v786
        %v802 = vadd.f32 %v801, %v787
        %v803 = vadd.f32 %v802, %v788
        %804 = vadd.xlane.f32.xlu0 %v803
        %v805 = vpop.xlane.xlu0 %804
        %v806 = vadd.f32 %v789, %v790
        %v807 = vadd.f32 %v806, %v791
        %v808 = vadd.f32 %v807, %v792
        %809 = vadd.xlane.f32.xlu0 %v808
        %v810 = vpop.xlane.xlu0 %809
        %v811 = vadd.f32 %v793, %v794
        %v812 = vadd.f32 %v811, %v795
        %v813 = vadd.f32 %v812, %v796
        %814 = vadd.xlane.f32.xlu0 %v813
        %v815 = vpop.xlane.xlu0 %814
        %v816 = vadd.f32 %v797, %v798
        %v817 = vadd.f32 %v816, %v799
        %v818 = vadd.f32 %v817, %v800
        %819 = vadd.xlane.f32.xlu0 %v818
        %v820 = vpop.xlane.xlu0 %819
        %v821 = vmul.f32 %v805, 0.001953125
        %v822 = vmul.f32 %v810, 0.001953125
        %v823 = vmul.f32 %v815, 0.001953125
        %v824 = vmul.f32 %v820, 0.001953125
        %v825 = vmul.f32 %v781, %v781
        %v826 = vmul.f32 %v782, %v782
        %v827 = vmul.f32 %v783, %v783
        %v828 = vmul.f32 %v784, %v784
        %v829 = vsub.f32 %v821, %v825
        %v830 = vsub.f32 %v822, %v826
        %v831 = vsub.f32 %v823, %v827
        %v832 = vsub.f32 %v824, %v828
        %v833 = vmax.f32 %v829, 0.0
        %v834 = vmax.f32 %v830, 0.0
        %v835 = vmax.f32 %v831, 0.0
        %v836 = vmax.f32 %v832, 0.0
        %v837 = vsub.f32 %v690, %v781
        %v838 = vsub.f32 %v692, %v781
        %v839 = vsub.f32 %v743, %v781
        %v840 = vsub.f32 %v745, %v781
        %v841 = vsub.f32 %v694, %v782
        %v842 = vsub.f32 %v696, %v782
        %v843 = vsub.f32 %v747, %v782
        %v844 = vsub.f32 %v749, %v782
        %v845 = vsub.f32 %v700, %v783
        %v846 = vsub.f32 %v702, %v783
        %v847 = vsub.f32 %v753, %v783
        %v848 = vsub.f32 %v755, %v783
        %v849 = vsub.f32 %v704, %v784
        %v850 = vsub.f32 %v706, %v784
        %v851 = vsub.f32 %v757, %v784
        %v852 = vsub.f32 %v759, %v784
        %v853 = vadd.f32 %v833, 1e-12
        %v854 = vadd.f32 %v834, 1e-12
        %v855 = vadd.f32 %v835, 1e-12
        %v856 = vadd.f32 %v836, 1e-12
        %v857 = vrsqrt.pop %v853
        %v858 = vrsqrt.pop %v854
        %v859 = vrsqrt.pop %v855
        %v860 = vrsqrt.pop %v856
        %v861 = vld [vmem:[%s3] sm:$0xf]
        %v863 = vlaneseq
        %v864 = vshrl.u32 %v863, 7
        %v865 = vsub.s32 0, %v864
        %v866 = vrot.slane %v861, %v865
        %v867 = vlaneseq
        %v868 = vshrl.u32 %v867, 7
        %v869 = vsub.s32 1, %v868
        %v870 = vrot.slane %v861, %v869
        %v871 = vlaneseq
        %v872 = vshrl.u32 %v871, 7
        %v873 = vsub.s32 2, %v872
        %v874 = vrot.slane %v861, %v873
        %v875 = vlaneseq
        %v876 = vshrl.u32 %v875, 7
        %v877 = vsub.s32 3, %v876
        %v878 = vrot.slane %v861, %v877
        %v883 = vmul.f32 %v857, %v866
        %v884 = vmul.f32 %v857, %v870
        %v885 = vmul.f32 %v857, %v874
        %v886 = vmul.f32 %v857, %v878
        %v887 = vmul.f32 %v858, %v866
        %v888 = vmul.f32 %v858, %v870
        %v889 = vmul.f32 %v858, %v874
        %v890 = vmul.f32 %v858, %v878
        %v891 = vmul.f32 %v859, %v866
        %v892 = vmul.f32 %v859, %v870
        %v893 = vmul.f32 %v859, %v874
        %v894 = vmul.f32 %v859, %v878
        %v895 = vmul.f32 %v860, %v866
        %v896 = vmul.f32 %v860, %v870
        %v897 = vmul.f32 %v860, %v874
        %v898 = vmul.f32 %v860, %v878
        %v899 = vmul.f32 %v837, %v883
        %v900 = vmul.f32 %v838, %v884
        %v901 = vmul.f32 %v839, %v885
        %v902 = vmul.f32 %v840, %v886
        %v903 = vmul.f32 %v841, %v887
        %v904 = vmul.f32 %v842, %v888
        %v905 = vmul.f32 %v843, %v889
        %v906 = vmul.f32 %v844, %v890
        %v907 = vmul.f32 %v845, %v891
        %v908 = vmul.f32 %v846, %v892
        %v909 = vmul.f32 %v847, %v893
        %v910 = vmul.f32 %v848, %v894
        %v911 = vmul.f32 %v849, %v895
        %v912 = vmul.f32 %v850, %v896
        %v913 = vmul.f32 %v851, %v897
        %v914 = vmul.f32 %v852, %v898
        %v915 = vld [vmem:[%s4] sm:$0xf]
        %v917 = vlaneseq
        %v918 = vshrl.u32 %v917, 7
        %v919 = vsub.s32 0, %v918
        %v920 = vrot.slane %v915, %v919
        %v921 = vlaneseq
        %v922 = vshrl.u32 %v921, 7
        %v923 = vsub.s32 1, %v922
        %v924 = vrot.slane %v915, %v923
        %v925 = vlaneseq
        %v926 = vshrl.u32 %v925, 7
        %v927 = vsub.s32 2, %v926
        %v928 = vrot.slane %v915, %v927
        %v929 = vlaneseq
        %v930 = vshrl.u32 %v929, 7
        %v931 = vsub.s32 3, %v930
        %v932 = vrot.slane %v915, %v931
        %v937 = vadd.f32 %v899, %v920
        %v938 = vadd.f32 %v900, %v924
        %v939 = vadd.f32 %v901, %v928
        %v940 = vadd.f32 %v902, %v932
        %v941 = vadd.f32 %v903, %v920
        %v942 = vadd.f32 %v904, %v924
        %v943 = vadd.f32 %v905, %v928
        %v944 = vadd.f32 %v906, %v932
        %v945 = vadd.f32 %v907, %v920
        %v946 = vadd.f32 %v908, %v924
        %v947 = vadd.f32 %v909, %v928
        %v948 = vadd.f32 %v910, %v932
        %v949 = vadd.f32 %v911, %v920
        %v950 = vadd.f32 %v912, %v924
        %v951 = vadd.f32 %v913, %v928
        %v952 = vadd.f32 %v914, %v932
        %v953 = vld [vmem:[#allocation2] sm:$0xff]
        %v954 = vld [vmem:[#allocation2 + $0x8] sm:$0xff]
        %v955 = vld [vmem:[#allocation2 + $0x10] sm:$0xff]
        %v956 = vld [vmem:[#allocation2 + $0x18] sm:$0xff]
        %v957 = vld [vmem:[#allocation2 + $0x20] sm:$0xff]
        %v958 = vld [vmem:[#allocation2 + $0x28] sm:$0xff]
        %v959 = vld [vmem:[#allocation2 + $0x30] sm:$0xff]
        %v960 = vld [vmem:[#allocation2 + $0x38] sm:$0xff]
        %v961 = vld [vmem:[#allocation2 + $0x40] sm:$0xff]
        %v962 = vld [vmem:[#allocation2 + $0x48] sm:$0xff]
        %v963 = vld [vmem:[#allocation2 + $0x50] sm:$0xff]
        %v964 = vld [vmem:[#allocation2 + $0x58] sm:$0xff]
        %v965 = vld [vmem:[#allocation2 + $0x60] sm:$0xff]
        %v966 = vld [vmem:[#allocation2 + $0x68] sm:$0xff]
        %v967 = vld [vmem:[#allocation2 + $0x70] sm:$0xff]
        %v968 = vld [vmem:[#allocation2 + $0x78] sm:$0xff]
        %v969 = vmul.f32 %v953, 0.16666667
        %v970 = vmul.f32 %v954, 0.16666667
        %v971 = vmul.f32 %v955, 0.16666667
        %v972 = vmul.f32 %v956, 0.16666667
        %v973 = vmul.f32 %v957, 0.16666667
        %v974 = vmul.f32 %v958, 0.16666667
        %v975 = vmul.f32 %v959, 0.16666667
        %v976 = vmul.f32 %v960, 0.16666667
        %v977 = vmul.f32 %v961, 0.16666667
        %v978 = vmul.f32 %v962, 0.16666667
        %v979 = vmul.f32 %v963, 0.16666667
        %v980 = vmul.f32 %v964, 0.16666667
        %v981 = vmul.f32 %v965, 0.16666667
        %v982 = vmul.f32 %v966, 0.16666667
        %v983 = vmul.f32 %v967, 0.16666667
        %v984 = vmul.f32 %v968, 0.16666667
        %v985 = vmul.f32 %v937, 0.8333333
        %v986 = vmul.f32 %v938, 0.8333333
        %v987 = vmul.f32 %v939, 0.8333333
        %v988 = vmul.f32 %v940, 0.8333333
        %v989 = vmul.f32 %v941, 0.8333333
        %v990 = vmul.f32 %v942, 0.8333333
        %v991 = vmul.f32 %v943, 0.8333333
        %v992 = vmul.f32 %v944, 0.8333333
        %v993 = vmul.f32 %v945, 0.8333333
        %v994 = vmul.f32 %v946, 0.8333333
        %v995 = vmul.f32 %v947, 0.8333333
        %v996 = vmul.f32 %v948, 0.8333333
        %v997 = vmul.f32 %v949, 0.8333333
        %v998 = vmul.f32 %v950, 0.8333333
        %v999 = vmul.f32 %v951, 0.8333333
        %v1000 = vmul.f32 %v952, 0.8333333
        %v1001 = vadd.f32 %v969, %v985
        %v1002 = vadd.f32 %v970, %v986
        %v1003 = vadd.f32 %v971, %v987
        %v1004 = vadd.f32 %v972, %v988
        %v1005 = vadd.f32 %v973, %v989
        %v1006 = vadd.f32 %v974, %v990
        %v1007 = vadd.f32 %v975, %v991
        %v1008 = vadd.f32 %v976, %v992
        %v1009 = vadd.f32 %v977, %v993
        %v1010 = vadd.f32 %v978, %v994
        %v1011 = vadd.f32 %v979, %v995
        %v1012 = vadd.f32 %v980, %v996
        %v1013 = vadd.f32 %v981, %v997
        %v1014 = vadd.f32 %v982, %v998
        %v1015 = vadd.f32 %v983, %v999
        %v1016 = vadd.f32 %v984, %v1000
        %vm1017 = vcmp.ge.f32.partialorder %v1001, 1.0
        %vm1018 = vcmp.ge.f32.partialorder %v1002, 1.0
        %vm1019 = vcmp.ge.f32.partialorder %v1003, 1.0
        %vm1020 = vcmp.ge.f32.partialorder %v1004, 1.0
        %vm1021 = vcmp.ge.f32.partialorder %v1005, 1.0
        %vm1022 = vcmp.ge.f32.partialorder %v1006, 1.0
        %vm1023 = vcmp.ge.f32.partialorder %v1007, 1.0
        %vm1024 = vcmp.ge.f32.partialorder %v1008, 1.0
        %vm1025 = vcmp.ge.f32.partialorder %v1009, 1.0
        %vm1026 = vcmp.ge.f32.partialorder %v1010, 1.0
        %vm1027 = vcmp.ge.f32.partialorder %v1011, 1.0
        %vm1028 = vcmp.ge.f32.partialorder %v1012, 1.0
        %vm1029 = vcmp.ge.f32.partialorder %v1013, 1.0
        %vm1030 = vcmp.ge.f32.partialorder %v1014, 1.0
        %vm1031 = vcmp.ge.f32.partialorder %v1015, 1.0
        %vm1032 = vcmp.ge.f32.partialorder %v1016, 1.0
        %v1033 = vsel %vm1017, 0.0, %v1001
        %v1034 = vsel %vm1018, 0.0, %v1002
        %v1035 = vsel %vm1019, 0.0, %v1003
        %v1036 = vsel %vm1020, 0.0, %v1004
        %v1037 = vsel %vm1021, 0.0, %v1005
        %v1038 = vsel %vm1022, 0.0, %v1006
        %v1039 = vsel %vm1023, 0.0, %v1007
        %v1040 = vsel %vm1024, 0.0, %v1008
        %v1041 = vsel %vm1025, 0.0, %v1009
        %v1042 = vsel %vm1026, 0.0, %v1010
        %v1043 = vsel %vm1027, 0.0, %v1011
        %v1044 = vsel %vm1028, 0.0, %v1012
        %v1045 = vsel %vm1029, 0.0, %v1013
        %v1046 = vsel %vm1030, 0.0, %v1014
        %v1047 = vsel %vm1031, 0.0, %v1015
        %v1048 = vsel %vm1032, 0.0, %v1016
        %1049 = vst [vmem:[#allocation2] sm:$0xff] %v1033
        %1050 = vst [vmem:[#allocation2 + $0x8] sm:$0xff] %v1034
        %1051 = vst [vmem:[#allocation2 + $0x10] sm:$0xff] %v1035
        %1052 = vst [vmem:[#allocation2 + $0x18] sm:$0xff] %v1036
        %1053 = vst [vmem:[#allocation2 + $0x20] sm:$0xff] %v1037
        %1054 = vst [vmem:[#allocation2 + $0x28] sm:$0xff] %v1038
        %1055 = vst [vmem:[#allocation2 + $0x30] sm:$0xff] %v1039
        %1056 = vst [vmem:[#allocation2 + $0x38] sm:$0xff] %v1040
        %1057 = vst [vmem:[#allocation2 + $0x40] sm:$0xff] %v1041
        %1058 = vst [vmem:[#allocation2 + $0x48] sm:$0xff] %v1042
        %1059 = vst [vmem:[#allocation2 + $0x50] sm:$0xff] %v1043
        %1060 = vst [vmem:[#allocation2 + $0x58] sm:$0xff] %v1044
        %1061 = vst [vmem:[#allocation2 + $0x60] sm:$0xff] %v1045
        %1062 = vst [vmem:[#allocation2 + $0x68] sm:$0xff] %v1046
        %1063 = vst [vmem:[#allocation2 + $0x70] sm:$0xff] %v1047
        %1064 = vst [vmem:[#allocation2 + $0x78] sm:$0xff] %v1048
        %v1065 = vsel %vm1017, 1, 0
        %v1066 = vsel %vm1018, 1, 0
        %v1067 = vsel %vm1019, 1, 0
        %v1068 = vsel %vm1020, 1, 0
        %v1069 = vsel %vm1021, 1, 0
        %v1070 = vsel %vm1022, 1, 0
        %v1071 = vsel %vm1023, 1, 0
        %v1072 = vsel %vm1024, 1, 0
        %v1073 = vsel %vm1025, 1, 0
        %v1074 = vsel %vm1026, 1, 0
        %v1075 = vsel %vm1027, 1, 0
        %v1076 = vsel %vm1028, 1, 0
        %v1077 = vsel %vm1029, 1, 0
        %v1078 = vsel %vm1030, 1, 0
        %v1079 = vsel %vm1031, 1, 0
        %v1080 = vsel %vm1032, 1, 0
        %v1081 = vcvt.s32.f32 %v1065
        %v1082 = vcvt.s32.f32 %v1066
        %v1083 = vcvt.s32.f32 %v1067
        %v1084 = vcvt.s32.f32 %v1068
        %v1085 = vcvt.s32.f32 %v1069
        %v1086 = vcvt.s32.f32 %v1070
        %v1087 = vcvt.s32.f32 %v1071
        %v1088 = vcvt.s32.f32 %v1072
        %v1089 = vcvt.s32.f32 %v1073
        %v1090 = vcvt.s32.f32 %v1074
        %v1091 = vcvt.s32.f32 %v1075
        %v1092 = vcvt.s32.f32 %v1076
        %v1093 = vcvt.s32.f32 %v1077
        %v1094 = vcvt.s32.f32 %v1078
        %v1095 = vcvt.s32.f32 %v1079
        %v1096 = vcvt.s32.f32 %v1080
        %v1097 = vpack.c.bf16 %v1085, %v1081
        %v1098 = vpack.c.bf16 %v1086, %v1082
        %v1099 = vpack.c.bf16 %v1087, %v1083
        %v1100 = vpack.c.bf16 %v1088, %v1084
        %v1101 = vpack.c.bf16 %v1093, %v1089
        %v1102 = vpack.c.bf16 %v1094, %v1090
        %v1103 = vpack.c.bf16 %v1095, %v1091
        %v1104 = vpack.c.bf16 %v1096, %v1092
        %v1105 = vld [vmem:[#allocation9] sm:$0xf]
        %v1106 = vld [vmem:[#allocation9 + $0x4] sm:$0xf]
        %v1107 = vld [vmem:[#allocation9 + $0x8] sm:$0xf]
        %v1108 = vld [vmem:[#allocation9 + $0xc] sm:$0xf]
        %v1109 = vld [vmem:[#allocation9 + $0x10] sm:$0xf]
        %v1110 = vld [vmem:[#allocation9 + $0x14] sm:$0xf]
        %v1111 = vld [vmem:[#allocation9 + $0x18] sm:$0xf]
        %v1112 = vld [vmem:[#allocation9 + $0x1c] sm:$0xf]
        %v1113 = vld [vmem:[#allocation9 + $0x20] sm:$0xf]
        %v1114 = vld [vmem:[#allocation9 + $0x24] sm:$0xf]
        %v1115 = vld [vmem:[#allocation9 + $0x28] sm:$0xf]
        %v1116 = vld [vmem:[#allocation9 + $0x2c] sm:$0xf]
        %v1117 = vld [vmem:[#allocation9 + $0x30] sm:$0xf]
        %v1118 = vld [vmem:[#allocation9 + $0x34] sm:$0xf]
        %v1119 = vld [vmem:[#allocation9 + $0x38] sm:$0xf]
        %v1120 = vld [vmem:[#allocation9 + $0x3c] sm:$0xf]
        %v1121 = vld [vmem:[#allocation9 + $0x40] sm:$0xf]
        %v1122 = vld [vmem:[#allocation9 + $0x44] sm:$0xf]
        %v1123 = vld [vmem:[#allocation9 + $0x48] sm:$0xf]
        %v1124 = vld [vmem:[#allocation9 + $0x4c] sm:$0xf]
        %v1125 = vld [vmem:[#allocation9 + $0x50] sm:$0xf]
        %v1126 = vld [vmem:[#allocation9 + $0x54] sm:$0xf]
        %v1127 = vld [vmem:[#allocation9 + $0x58] sm:$0xf]
        %v1128 = vld [vmem:[#allocation9 + $0x5c] sm:$0xf]
        %v1129 = vld [vmem:[#allocation9 + $0x60] sm:$0xf]
        %v1130 = vld [vmem:[#allocation9 + $0x64] sm:$0xf]
        %v1131 = vld [vmem:[#allocation9 + $0x68] sm:$0xf]
        %v1132 = vld [vmem:[#allocation9 + $0x6c] sm:$0xf]
        %v1133 = vld [vmem:[#allocation9 + $0x70] sm:$0xf]
        %v1134 = vld [vmem:[#allocation9 + $0x74] sm:$0xf]
        %v1135 = vld [vmem:[#allocation9 + $0x78] sm:$0xf]
        %v1136 = vld [vmem:[#allocation9 + $0x7c] sm:$0xf]
        %v1137 = vld [vmem:[#allocation9 + $0x80] sm:$0xf]
        %v1138 = vld [vmem:[#allocation9 + $0x84] sm:$0xf]
        %v1139 = vld [vmem:[#allocation9 + $0x88] sm:$0xf]
        %v1140 = vld [vmem:[#allocation9 + $0x8c] sm:$0xf]
        %v1141 = vld [vmem:[#allocation9 + $0x90] sm:$0xf]
        %v1142 = vld [vmem:[#allocation9 + $0x94] sm:$0xf]
        %v1143 = vld [vmem:[#allocation9 + $0x98] sm:$0xf]
        %v1144 = vld [vmem:[#allocation9 + $0x9c] sm:$0xf]
        %v1145 = vld [vmem:[#allocation9 + $0xa0] sm:$0xf]
        %v1146 = vld [vmem:[#allocation9 + $0xa4] sm:$0xf]
        %v1147 = vld [vmem:[#allocation9 + $0xa8] sm:$0xf]
        %v1148 = vld [vmem:[#allocation9 + $0xac] sm:$0xf]
        %v1149 = vld [vmem:[#allocation9 + $0xb0] sm:$0xf]
        %v1150 = vld [vmem:[#allocation9 + $0xb4] sm:$0xf]
        %v1151 = vld [vmem:[#allocation9 + $0xb8] sm:$0xf]
        %v1152 = vld [vmem:[#allocation9 + $0xbc] sm:$0xf]
        %v1153 = vld [vmem:[#allocation9 + $0xc0] sm:$0xf]
        %v1154 = vld [vmem:[#allocation9 + $0xc4] sm:$0xf]
        %v1155 = vld [vmem:[#allocation9 + $0xc8] sm:$0xf]
        %v1156 = vld [vmem:[#allocation9 + $0xcc] sm:$0xf]
        %v1157 = vld [vmem:[#allocation9 + $0xd0] sm:$0xf]
        %v1158 = vld [vmem:[#allocation9 + $0xd4] sm:$0xf]
        %v1159 = vld [vmem:[#allocation9 + $0xd8] sm:$0xf]
        %v1160 = vld [vmem:[#allocation9 + $0xdc] sm:$0xf]
        %v1161 = vld [vmem:[#allocation9 + $0xe0] sm:$0xf]
        %v1162 = vld [vmem:[#allocation9 + $0xe4] sm:$0xf]
        %v1163 = vld [vmem:[#allocation9 + $0xe8] sm:$0xf]
        %v1164 = vld [vmem:[#allocation9 + $0xec] sm:$0xf]
        %v1165 = vld [vmem:[#allocation9 + $0xf0] sm:$0xf]
        %v1166 = vld [vmem:[#allocation9 + $0xf4] sm:$0xf]
        %v1167 = vld [vmem:[#allocation9 + $0xf8] sm:$0xf]
        %v1168 = vld [vmem:[#allocation9 + $0xfc] sm:$0xf]
        %v1169 = vld [vmem:[%s6] sm:$0x1]
        %v1171 = vlaneseq
        %v1172 = vshrl.u32 %v1171, 7
        %v1173 = vsub.s32 0, %v1172
        %v1174 = vrot.slane %v1169, %v1173
        %v1240 = vunpack.c.l.b16 %v1105
        %v1241 = vunpack.c.l.b16 %v1106
        %v1242 = vunpack.c.l.b16 %v1107
        %v1243 = vunpack.c.l.b16 %v1108
        %v1244 = vunpack.c.l.b16 %v1109
        %v1245 = vunpack.c.l.b16 %v1110
        %v1246 = vunpack.c.l.b16 %v1111
        %v1247 = vunpack.c.l.b16 %v1112
        %v1248 = vunpack.c.l.b16 %v1113
        %v1249 = vunpack.c.l.b16 %v1114
        %v1250 = vunpack.c.l.b16 %v1115
        %v1251 = vunpack.c.l.b16 %v1116
        %v1252 = vunpack.c.l.b16 %v1117
        %v1253 = vunpack.c.l.b16 %v1118
        %v1254 = vunpack.c.l.b16 %v1119
        %v1255 = vunpack.c.l.b16 %v1120
        %v1256 = vunpack.c.l.b16 %v1121
        %v1257 = vunpack.c.l.b16 %v1122
        %v1258 = vunpack.c.l.b16 %v1123
        %v1259 = vunpack.c.l.b16 %v1124
        %v1260 = vunpack.c.l.b16 %v1125
        %v1261 = vunpack.c.l.b16 %v1126
        %v1262 = vunpack.c.l.b16 %v1127
        %v1263 = vunpack.c.l.b16 %v1128
        %v1264 = vunpack.c.l.b16 %v1129
        %v1265 = vunpack.c.l.b16 %v1130
        %v1266 = vunpack.c.l.b16 %v1131
        %v1267 = vunpack.c.l.b16 %v1132
        %v1268 = vunpack.c.l.b16 %v1133
        %v1269 = vunpack.c.l.b16 %v1134
        %v1270 = vunpack.c.l.b16 %v1135
        %v1271 = vunpack.c.l.b16 %v1136
        %v1272 = vunpack.c.l.b16 %v1137
        %v1273 = vunpack.c.l.b16 %v1138
        %v1274 = vunpack.c.l.b16 %v1139
        %v1275 = vunpack.c.l.b16 %v1140
        %v1276 = vunpack.c.l.b16 %v1141
        %v1277 = vunpack.c.l.b16 %v1142
        %v1278 = vunpack.c.l.b16 %v1143
        %v1279 = vunpack.c.l.b16 %v1144
        %v1280 = vunpack.c.l.b16 %v1145
        %v1281 = vunpack.c.l.b16 %v1146
        %v1282 = vunpack.c.l.b16 %v1147
        %v1283 = vunpack.c.l.b16 %v1148
        %v1284 = vunpack.c.l.b16 %v1149
        %v1285 = vunpack.c.l.b16 %v1150
        %v1286 = vunpack.c.l.b16 %v1151
        %v1287 = vunpack.c.l.b16 %v1152
        %v1288 = vunpack.c.l.b16 %v1153
        %v1289 = vunpack.c.l.b16 %v1154
        %v1290 = vunpack.c.l.b16 %v1155
        %v1291 = vunpack.c.l.b16 %v1156
        %v1292 = vunpack.c.l.b16 %v1157
        %v1293 = vunpack.c.l.b16 %v1158
        %v1294 = vunpack.c.l.b16 %v1159
        %v1295 = vunpack.c.l.b16 %v1160
        %v1296 = vunpack.c.l.b16 %v1161
        %v1297 = vunpack.c.l.b16 %v1162
        %v1298 = vunpack.c.l.b16 %v1163
        %v1299 = vunpack.c.l.b16 %v1164
        %v1300 = vunpack.c.l.b16 %v1165
        %v1301 = vunpack.c.l.b16 %v1166
        %v1302 = vunpack.c.l.b16 %v1167
        %v1303 = vunpack.c.l.b16 %v1168
        %v1304 = vpack.c.b16 %v1241, %v1240
        %v1305 = vpack.c.b16 %v1243, %v1242
        %v1306 = vpack.c.b16 %v1245, %v1244
        %v1307 = vpack.c.b16 %v1247, %v1246
        %v1308 = vpack.c.b16 %v1249, %v1248
        %v1309 = vpack.c.b16 %v1251, %v1250
        %v1310 = vpack.c.b16 %v1253, %v1252
        %v1311 = vpack.c.b16 %v1255, %v1254
        %v1312 = vpack.c.b16 %v1257, %v1256
        %v1313 = vpack.c.b16 %v1259, %v1258
        %v1314 = vpack.c.b16 %v1261, %v1260
        %v1315 = vpack.c.b16 %v1263, %v1262
        %v1316 = vpack.c.b16 %v1265, %v1264
        %v1317 = vpack.c.b16 %v1267, %v1266
        %v1318 = vpack.c.b16 %v1269, %v1268
        %v1319 = vpack.c.b16 %v1271, %v1270
        %v1320 = vpack.c.b16 %v1273, %v1272
        %v1321 = vpack.c.b16 %v1275, %v1274
        %v1322 = vpack.c.b16 %v1277, %v1276
        %v1323 = vpack.c.b16 %v1279, %v1278
        %v1324 = vpack.c.b16 %v1281, %v1280
        %v1325 = vpack.c.b16 %v1283, %v1282
        %v1326 = vpack.c.b16 %v1285, %v1284
        %v1327 = vpack.c.b16 %v1287, %v1286
        %v1328 = vpack.c.b16 %v1289, %v1288
        %v1329 = vpack.c.b16 %v1291, %v1290
        %v1330 = vpack.c.b16 %v1293, %v1292
        %v1331 = vpack.c.b16 %v1295, %v1294
        %v1332 = vpack.c.b16 %v1297, %v1296
        %v1333 = vpack.c.b16 %v1299, %v1298
        %v1334 = vpack.c.b16 %v1301, %v1300
        %v1335 = vpack.c.b16 %v1303, %v1302
        %1368 = vmatprep.subr.bf16.mxu0 0
        %1369 = vmatpush1.bf16.msra.mxu0 %v1304
        %1370 = vmatprep.subr.bf16.mxu0 0
        %1371 = vmatpush1.bf16.msra.mxu0 %v1305
        %1372 = vmatprep.subr.bf16.mxu0 0
        %1373 = vmatpush1.bf16.msra.mxu0 %v1306
        %1374 = vmatprep.subr.bf16.mxu0 0
        %1375 = vmatpush1.bf16.msra.mxu0 %v1307
        %1376 = vmatprep.subr.bf16.mxu0 0
        %1377 = vmatpush1.bf16.msra.mxu0 %v1308
        %1378 = vmatprep.subr.bf16.mxu0 0
        %1379 = vmatpush1.bf16.msra.mxu0 %v1309
        %1380 = vmatprep.subr.bf16.mxu0 0
        %1381 = vmatpush1.bf16.msra.mxu0 %v1310
        %1382 = vmatprep.subr.bf16.mxu0 0
        %1383 = vmatpush1.bf16.msra.mxu0 %v1311
        %1384 = vmatprep.subr.bf16.mxu0 0
        %1385 = vmatpush1.bf16.msra.mxu0 %v1312
        %1386 = vmatprep.subr.bf16.mxu0 0
        %1387 = vmatpush1.bf16.msra.mxu0 %v1313
        %1388 = vmatprep.subr.bf16.mxu0 0
        %1389 = vmatpush1.bf16.msra.mxu0 %v1314
        %1390 = vmatprep.subr.bf16.mxu0 0
        %1391 = vmatpush1.bf16.msra.mxu0 %v1315
        %1392 = vmatprep.subr.bf16.mxu0 0
        %1393 = vmatpush1.bf16.msra.mxu0 %v1316
        %1394 = vmatprep.subr.bf16.mxu0 0
        %1395 = vmatpush1.bf16.msra.mxu0 %v1317
        %1396 = vmatprep.subr.bf16.mxu0 0
        %1397 = vmatpush1.bf16.msra.mxu0 %v1318
        %1398 = vmatprep.subr.bf16.mxu0 0
        %1399 = vmatpush1.bf16.msra.mxu0 %v1319
        %1400 = vmatprep.mubr.bf16.mxu0 %v1098
        %1401 = vmatmul.mubr.bf16.gmra.mrb[0].mxu0 %v1097
        %v1402 = vpop.f32.mrb[0].mxu0
        %v1403 = vadd.f32 %v1174, %v1402
        %v1404 = vpop.f32.mrb[0].mxu0
        %v1405 = vpop.f32.mrb[0].mxu0
        %v1406 = vadd.f32 %v1174, %v1405
        %v1407 = vpop.f32.mrb[0].mxu0
        %1408 = vmatprep.mubr.bf16.mxu0 %v1102
        %1409 = vmatmul.mubr.bf16.gmra.mrb[0].mxu0 %v1101
        %v1410 = vpop.f32.mrb[0].mxu0
        %v1411 = vadd.f32 %v1174, %v1410
        %v1412 = vpop.f32.mrb[0].mxu0
        %v1413 = vpop.f32.mrb[0].mxu0
        %v1414 = vadd.f32 %v1174, %v1413
        %v1415 = vpop.f32.mrb[0].mxu0
        %1416 = vdwg.mxu0
        %1417 = vmatprep.subr.bf16.mxu0 0
        %1418 = vmatpush1.bf16.msra.mxu0 %v1320
        %1419 = vmatprep.subr.bf16.mxu0 0
        %1420 = vmatpush1.bf16.msra.mxu0 %v1321
        %1421 = vmatprep.subr.bf16.mxu0 0
        %1422 = vmatpush1.bf16.msra.mxu0 %v1322
        %1423 = vmatprep.subr.bf16.mxu0 0
        %1424 = vmatpush1.bf16.msra.mxu0 %v1323
        %1425 = vmatprep.subr.bf16.mxu0 0
        %1426 = vmatpush1.bf16.msra.mxu0 %v1324
        %1427 = vmatprep.subr.bf16.mxu0 0
        %1428 = vmatpush1.bf16.msra.mxu0 %v1325
        %1429 = vmatprep.subr.bf16.mxu0 0
        %1430 = vmatpush1.bf16.msra.mxu0 %v1326
        %1431 = vmatprep.subr.bf16.mxu0 0
        %1432 = vmatpush1.bf16.msra.mxu0 %v1327
        %1433 = vmatprep.subr.bf16.mxu0 0
        %1434 = vmatpush1.bf16.msra.mxu0 %v1328
        %1435 = vmatprep.subr.bf16.mxu0 0
        %1436 = vmatpush1.bf16.msra.mxu0 %v1329
        %1437 = vmatprep.subr.bf16.mxu0 0
        %1438 = vmatpush1.bf16.msra.mxu0 %v1330
        %1439 = vmatprep.subr.bf16.mxu0 0
        %1440 = vmatpush1.bf16.msra.mxu0 %v1331
        %1441 = vmatprep.subr.bf16.mxu0 0
        %1442 = vmatpush1.bf16.msra.mxu0 %v1332
        %1443 = vmatprep.subr.bf16.mxu0 0
        %1444 = vmatpush1.bf16.msra.mxu0 %v1333
        %1445 = vmatprep.subr.bf16.mxu0 0
        %1446 = vmatpush1.bf16.msra.mxu0 %v1334
        %1447 = vmatprep.subr.bf16.mxu0 0
        %1448 = vmatpush1.bf16.msra.mxu0 %v1335
        %1449 = vmatprep.mubr.bf16.mxu0 %v1100
        %1450 = vmatmul.mubr.bf16.gmra.mrb[0].mxu0 %v1099
        %v1451 = vpop.f32.mrb[0].mxu0
        %v1452 = vadd.f32 %v1403, %v1451
        %v1453 = vpop.f32.mrb[0].mxu0
        %v1454 = vpop.f32.mrb[0].mxu0
        %v1455 = vadd.f32 %v1406, %v1454
        %v1456 = vpop.f32.mrb[0].mxu0
        %1457 = vmatprep.mubr.bf16.mxu0 %v1104
        %1458 = vmatmul.mubr.bf16.gmra.mrb[0].mxu0 %v1103
        %v1459 = vpop.f32.mrb[0].mxu0
        %v1460 = vadd.f32 %v1411, %v1459
        %v1461 = vpop.f32.mrb[0].mxu0
        %v1462 = vpop.f32.mrb[0].mxu0
        %v1463 = vadd.f32 %v1414, %v1462
        %v1464 = vpop.f32.mrb[0].mxu0
        %1465 = vdwg.mxu0
        %1466 = vadd.xlane.f32.xlu0 %v1452
        %v1467 = vpop.xlane.xlu0 %1466
        %1468 = vadd.xlane.f32.xlu0 %v1455
        %v1469 = vpop.xlane.xlu0 %1468
        %1470 = vadd.xlane.f32.xlu0 %v1460
        %v1471 = vpop.xlane.xlu0 %1470
        %1472 = vadd.xlane.f32.xlu0 %v1463
        %v1473 = vpop.xlane.xlu0 %1472
        %v1474 = vmul.f32 %v1467, 0.0078125
        %v1475 = vmul.f32 %v1469, 0.0078125
        %v1476 = vmul.f32 %v1471, 0.0078125
        %v1477 = vmul.f32 %v1473, 0.0078125
        %v1478 = vmul.f32 %v1452, %v1452
        %v1479 = vmul.f32 %v1455, %v1455
        %v1480 = vmul.f32 %v1460, %v1460
        %v1481 = vmul.f32 %v1463, %v1463
        %1482 = vadd.xlane.f32.xlu0 %v1478
        %v1483 = vpop.xlane.xlu0 %1482
        %1484 = vadd.xlane.f32.xlu0 %v1479
        %v1485 = vpop.xlane.xlu0 %1484
        %1486 = vadd.xlane.f32.xlu0 %v1480
        %v1487 = vpop.xlane.xlu0 %1486
        %1488 = vadd.xlane.f32.xlu0 %v1481
        %v1489 = vpop.xlane.xlu0 %1488
        %v1490 = vmul.f32 %v1483, 0.0078125
        %v1491 = vmul.f32 %v1485, 0.0078125
        %v1492 = vmul.f32 %v1487, 0.0078125
        %v1493 = vmul.f32 %v1489, 0.0078125
        %v1494 = vmul.f32 %v1474, %v1474
        %v1495 = vmul.f32 %v1475, %v1475
        %v1496 = vmul.f32 %v1476, %v1476
        %v1497 = vmul.f32 %v1477, %v1477
        %v1498 = vsub.f32 %v1490, %v1494
        %v1499 = vsub.f32 %v1491, %v1495
        %v1500 = vsub.f32 %v1492, %v1496
        %v1501 = vsub.f32 %v1493, %v1497
        %v1502 = vmax.f32 %v1498, 0.0
        %v1503 = vmax.f32 %v1499, 0.0
        %v1504 = vmax.f32 %v1500, 0.0
        %v1505 = vmax.f32 %v1501, 0.0
        %v1506 = vsub.f32 %v1452, %v1474
        %v1507 = vsub.f32 %v1455, %v1475
        %v1508 = vsub.f32 %v1460, %v1476
        %v1509 = vsub.f32 %v1463, %v1477
        %v1510 = vadd.f32 %v1502, 1e-12
        %v1511 = vadd.f32 %v1503, 1e-12
        %v1512 = vadd.f32 %v1504, 1e-12
        %v1513 = vadd.f32 %v1505, 1e-12
        %v1514 = vrsqrt.pop %v1510
        %v1515 = vrsqrt.pop %v1511
        %v1516 = vrsqrt.pop %v1512
        %v1517 = vrsqrt.pop %v1513
        %v1518 = vld [vmem:[%s7] sm:$0x1]
        %v1520 = vlaneseq
        %v1521 = vshrl.u32 %v1520, 7
        %v1522 = vsub.s32 0, %v1521
        %v1523 = vrot.slane %v1518, %v1522
        %v1525 = vmul.f32 %v1514, %v1523
        %v1526 = vmul.f32 %v1515, %v1523
        %v1527 = vmul.f32 %v1516, %v1523
        %v1528 = vmul.f32 %v1517, %v1523
        %v1529 = vmul.f32 %v1506, %v1525
        %v1530 = vmul.f32 %v1507, %v1526
        %v1531 = vmul.f32 %v1508, %v1527
        %v1532 = vmul.f32 %v1509, %v1528
        %v1533 = vld [vmem:[%s8] sm:$0x1]
        %v1535 = vlaneseq
        %v1536 = vshrl.u32 %v1535, 7
        %v1537 = vsub.s32 0, %v1536
        %v1538 = vrot.slane %v1533, %v1537
        %v1540 = vadd.f32 %v1529, %v1538
        %v1541 = vadd.f32 %v1530, %v1538
        %v1542 = vadd.f32 %v1531, %v1538
        %v1543 = vadd.f32 %v1532, %v1538
        %v1544 = vld [vmem:[#allocation3] sm:$0xff]
        %v1545 = vld [vmem:[#allocation3 + $0x8] sm:$0xff]
        %v1546 = vld [vmem:[#allocation3 + $0x10] sm:$0xff]
        %v1547 = vld [vmem:[#allocation3 + $0x18] sm:$0xff]
        %v1548 = vmul.f32 %v1544, 0.16666667
        %v1549 = vmul.f32 %v1545, 0.16666667
        %v1550 = vmul.f32 %v1546, 0.16666667
        %v1551 = vmul.f32 %v1547, 0.16666667
        %v1552 = vmul.f32 %v1540, 0.8333333
        %v1553 = vmul.f32 %v1541, 0.8333333
        %v1554 = vmul.f32 %v1542, 0.8333333
        %v1555 = vmul.f32 %v1543, 0.8333333
        %v1556 = vadd.f32 %v1548, %v1552
        %v1557 = vadd.f32 %v1549, %v1553
        %v1558 = vadd.f32 %v1550, %v1554
        %v1559 = vadd.f32 %v1551, %v1555
        %vm1560 = vcmp.ge.f32.partialorder %v1556, 1.0
        %vm1561 = vcmp.ge.f32.partialorder %v1557, 1.0
        %vm1562 = vcmp.ge.f32.partialorder %v1558, 1.0
        %vm1563 = vcmp.ge.f32.partialorder %v1559, 1.0
        %v1564 = vsel %vm1560, 0.0, %v1556
        %v1565 = vsel %vm1561, 0.0, %v1557
        %v1566 = vsel %vm1562, 0.0, %v1558
        %v1567 = vsel %vm1563, 0.0, %v1559
        %1568 = vst [vmem:[#allocation3] sm:$0xff] %v1564
        %1569 = vst [vmem:[#allocation3 + $0x8] sm:$0xff] %v1565
        %1570 = vst [vmem:[#allocation3 + $0x10] sm:$0xff] %v1566
        %1571 = vst [vmem:[#allocation3 + $0x18] sm:$0xff] %v1567
        %v1572 = vsel %vm1560, 1, 0
        %v1573 = vsel %vm1561, 1, 0
        %v1574 = vsel %vm1562, 1, 0
        %v1575 = vsel %vm1563, 1, 0
        %v1576 = vcvt.s32.f32 %v1572
        %v1577 = vcvt.s32.f32 %v1573
        %v1578 = vcvt.s32.f32 %v1574
        %v1579 = vcvt.s32.f32 %v1575
        %1580 = vst [vmem:[%s397] sm:$0xff] %v1576
        %1581 = vst [vmem:[%s397 + $0x8] sm:$0xff] %v1577
        %1582 = vst [vmem:[%s397 + $0x10] sm:$0xff] %v1578
        %1583 = vst [vmem:[%s397 + $0x18] sm:$0xff] %v1579
        %s1584 = sand.u32 %s245, 1
        %s1585 = scalar_lea.sflag [#allocation6], %s1584
        %s1586 = sand.u32 %s245, 1
        %s1587 = smul.addr %s1586, 32
        %s1588 = scalar_lea.vmem [#allocation10], %s1587
        // Predicated region
        $region73: #{tpu_custom_call.1} parent=55 // pred_check
          %p1589 = pneg %p255
        $region74: #{tpu_custom_call.1} parent=55 // pred_check_branch
          %1591 = sbr.rel (%p1589) target = $region76
        $region75: #{tpu_custom_call.1} parent=55 // pred_region
          %s1592 = smul.u32 4, %s31
          %s1594 = ssub.s32 512, 512
          %1595 = vsyncadd %s1585, %s1594
          %s1596 = smul.addr %s32, 4
          %s1597 = sadd.s32 %s1592, %s1596
          %s1598 = smul.addr %s1597, 128
          %s1599 = scalar_lea.hbm %s9, %s1598
          %s1600 = sshll.u32 %s1588, 4
          %s1601 = int_to_ptr.vmem [resolvable:$true] %s1600
          %1606 = dma.vmem_to_hbm [thread:$0]  %s1601, 512, %s1599, %s1585, 128, 128, 8
        $region76: #{tpu_custom_call.1} parent=55 // pred_fallthru
          _
      $region56: #{tpu_custom_call.1} parent=5 // pred_fallthru
        _
      %p1607 = scmp.le.s32.totalorder 2, %s22
      // Predicated region
      $region77: #{tpu_custom_call.1} parent=5 // pred_check
        %p1608 = pneg %p1607
      $region78: #{tpu_custom_call.1} parent=5 // pred_check_branch
        %1610 = sbr.rel (%p1608) target = $region80
      $region79: #{tpu_custom_call.1} parent=5 // pred_region
        %s1611 = ssub.s32 %s22, 2
        // Predicated region
        $region81: #{tpu_custom_call.1} parent=79 // pred_check
          %p1612 = pneg %p261
        $region82: #{tpu_custom_call.1} parent=79 // pred_check_branch
          %1614 = sbr.rel (%p1612) target = $region84
        $region83: #{tpu_custom_call.1} parent=79 // pred_region
          %s1615 = sand.u32 %s246, 1
          %s1616 = scalar_lea.sflag [#allocation6], %s1615
          %s1617 = sand.u32 %s246, 1
          %s1618 = smul.addr %s1617, 32
          %s1619 = scalar_lea.vmem [#allocation10], %s1618
          %1620 = dma.done %s1616, 512
        $region84: #{tpu_custom_call.1} parent=79 // pred_fallthru
          _
      $region80: #{tpu_custom_call.1} parent=5 // pred_fallthru
        _
    $region6: #{tpu_custom_call.1} parent=1 // loop_footer
      %s26 = sadd.s32 1, %s22
    $region7: #{tpu_custom_call.1} parent=1 // loop_footer_branch
      %21 = sbr.rel target = $region3
    $region8: #{tpu_custom_call.1} parent=1 // loop_exit
      _
    %1621 = vsyncpa [#allocation5], 1
    %s1622 = scalar_lea.sflag [#allocation5], 1
    %1623 = vsyncpa %s1622, 1
    %1624 = vsyncpa [#allocation8], 1
    %1625 = vsyncpa [#allocation6], 1
    %s1626 = scalar_lea.sflag [#allocation6], 1
    %1627 = vsyncpa %s1626, 1

// kernel: tpu_custom_call.1
$region0: #{tpu_custom_call.1}
  #allocation0 [shape = 'u32[]', space=smem, size = 0x4, offset = 0x4, fixed_abs, tag = 'smem constant byte address 0x4 - core index']
  #allocation1 [shape = 'u32[144,128]{1,0:T(1,128)}', space=vmem, size = 0x12000, scoped, tag = 'internal scratch']
  #allocation2 [shape = 'f32[32,512]{1,0:T(8,128)}', space=vmem, size = 0x10000, scoped, tag = 'scratch operand']
  #allocation3 [shape = 'f32[32,128]{1,0:T(8,128)}', space=vmem, size = 0x4000, scoped, tag = 'scratch operand']
  %s0 = inlined_call_operand.hbm [shape: bf16[4,32,128], index: 0, kind: input, shape index: {}]
  %s1 = inlined_call_operand.hbm [shape: bf16[128,512], index: 1, kind: input, shape index: {}]
  %s2 = inlined_call_operand.vmem [shape: f32[1,512], index: 2, kind: input, shape index: {}]
  %s3 = inlined_call_operand.vmem [shape: f32[1,512], index: 3, kind: input, shape index: {}]
  %s4 = inlined_call_operand.vmem [shape: f32[1,512], index: 4, kind: input, shape index: {}]
  %s5 = inlined_call_operand.hbm [shape: bf16[512,128], index: 5, kind: input, shape index: {}]
  %s6 = inlined_call_operand.vmem [shape: f32[1,128], index: 6, kind: input, shape index: {}]
  %s7 = inlined_call_operand.vmem [shape: f32[1,128], index: 7, kind: input, shape index: {}]
  %s8 = inlined_call_operand.vmem [shape: f32[1,128], index: 8, kind: input, shape index: {}]
  %s9 = inlined_call_operand.hbm [shape: f32[4,32,128], index: 9, kind: output, shape index: {}]
  %s10 = sld [smem:[#allocation0]]
  $region85: #{tpu_custom_call.1} parent=0
    _
  %s12 = ssub.s32 1, %s10
  %s13 = scalar_select 0, %s12, %s10
  $region1: #{tpu_custom_call.1} parent=0
    #allocation4 [shape = 'u8[16384]{0}', space=vmem, size = 0x4000, scoped, tag = 'input window, operand 0']
    #allocation5 [shape = 's32[2]{0}', space=sflag, size = 0x8, scoped, tag = 'scoped memory for tpu_custom_call.1']
    #allocation6 [shape = 's32[2]{0}', space=sflag, size = 0x8, scoped, tag = 'scoped memory for tpu_custom_call.1']
    #allocation7 [shape = 'u8[131072]{0}', space=vmem, size = 0x20000, scoped, tag = 'input window, operand 1, single buffered']
    #allocation8 [shape = 's32[1]{0}', space=sflag, size = 0x4, scoped, tag = 'scoped memory for tpu_custom_call.1']
    #allocation9 [shape = 'u8[131072]{0}', space=vmem, size = 0x20000, scoped, tag = 'input window, operand 5, single buffered']
    #allocation10 [shape = 'u8[32768]{0}', space=vmem, size = 0x8000, scoped, tag = 'output window, operand 0']
    %14 = vsyncpa [#allocation5], 0
    %s15 = scalar_lea.sflag [#allocation5], 1
    %16 = vsyncpa %s15, 0
    %17 = vsyncpa [#allocation8], 0
    %18 = vsyncpa [#allocation6], 0
    %s19 = scalar_lea.sflag [#allocation6], 1
    %20 = vsyncpa %s19, 0
    loop: start=0, step=1, limit=6
    $region2: #{tpu_custom_call.1} parent=1 // loop_pre_header
      _
    $region3: #{tpu_custom_call.1} parent=1 // loop_header
      %s22 = sphi 0, %s26
      %p23 = scmp.ge.s32.totalorder %s22, 6
      %s29 = sphi 0, %s41
      %s30 = sphi 0, %s37
      %s31 = sphi 0, %s29
      %s32 = sphi 0, %s30
      %s33 = sphi 0, %s31
      %s34 = sphi 0, %s32
      %s46 = sphi 0, %s48
      %s49 = sphi 0, %s46
      %s50 = sphi 0, %s49
      %s66 = sphi 0, %s50
      %s70 = sphi 0, %s70
      %s72 = sphi 0, %s70
      %s73 = sphi 0, %s72
      %s87 = sphi 0, %s73
      %s91 = sphi 0, %s91
      %s93 = sphi 0, %s91
      %s94 = sphi 0, %s93
      %s108 = sphi 0, %s94
      %s112 = sphi 0, %s112
      %s114 = sphi 0, %s112
      %s115 = sphi 0, %s114
      %s129 = sphi 0, %s115
      %s133 = sphi 0, %s133
      %s135 = sphi 0, %s133
      %s136 = sphi 0, %s135
      %s150 = sphi 0, %s136
      %s154 = sphi 0, %s154
      %s156 = sphi 0, %s154
      %s157 = sphi 0, %s156
      %s171 = sphi 0, %s157
      %s175 = sphi 0, %s175
      %s177 = sphi 0, %s175
      %s178 = sphi 0, %s177
      %s192 = sphi 0, %s178
      %s196 = sphi 0, %s196
      %s198 = sphi 0, %s196
      %s199 = sphi 0, %s198
      %s213 = sphi 0, %s199
      %s217 = sphi 0, %s217
      %s219 = sphi 0, %s217
      %s220 = sphi 0, %s219
      %s234 = sphi 0, %s220
      %s242 = sphi 0, %s244
      %s245 = sphi 0, %s242
      %s246 = sphi 0, %s245
      %s262 = sphi 0, %s246
    $region4: #{tpu_custom_call.1} parent=1 // loop_header_branch
      %25 = sbr.rel (%p23) target = $region8
    $region5: #{tpu_custom_call.1} parent=1 // loop_body
      %s27 = ssub.s32 %s22, 1
      %s28 = ssub.s32 %s22, 2
      %s35 = sadd.s32 1, %s30
      %p36 = scmp.ge.s32.totalorder %s35, 4
      %s37 = scalar_select %p36, 0, %s35
      %s38 = sadd.s32 1, %s29
      %s39 = scalar_select %p36, %s38, %s29
      %p40 = scmp.ge.s32.totalorder %s39, 1
      %s41 = scalar_select %p40, 0, %s39
      %s42 = ssub.s32 %s30, %s37
      %s43 = ssub.s32 %s29, %s41
      %s44 = sor.u32 %s42, %s43
      %p45 = scmp.eq.s32.totalorder %s44, 0
      %s47 = sadd.s32 %s46, 1
      %s48 = scalar_select %p45, %s46, %s47
      %p51 = pneg %p45
      %p52 = scmp.eq.s32.totalorder %s22, 3
      %p53 = por %p51, %p52
      %p54 = scmp.ne.s32.totalorder %s46, %s49
      %p55 = scmp.eq.s32.totalorder %s22, 0
      %p56 = por %p54, %p55
      %p57 = scmp.ne.s32.totalorder %s46, %s49
      %p58 = scmp.eq.s32.totalorder %s27, 3
      %p59 = por %p57, %p58
      %p60 = scmp.ne.s32.totalorder %s49, %s50
      %p61 = scmp.eq.s32.totalorder %s27, 0
      %p62 = por %p60, %p61
      %p63 = scmp.ne.s32.totalorder %s49, %s50
      %p64 = scmp.eq.s32.totalorder %s28, 3
      %p65 = por %p63, %p64
      %p67 = scmp.ne.s32.totalorder %s50, %s66
      %p68 = scmp.eq.s32.totalorder %s28, 0
      %p69 = por %p67, %p68
      %s71 = sadd.s32 %s70, 1
      %p74 = scmp.eq.s32.totalorder %s22, 3
      %p75 = scmp.ne.s32.totalorder %s70, %s72
      %p76 = scmp.eq.s32.totalorder %s22, 0
      %p77 = por %p75, %p76
      %p78 = scmp.ne.s32.totalorder %s70, %s72
      %p79 = scmp.eq.s32.totalorder %s27, 3
      %p80 = por %p78, %p79
      %p81 = scmp.ne.s32.totalorder %s72, %s73
      %p82 = scmp.eq.s32.totalorder %s27, 0
      %p83 = por %p81, %p82
      %p84 = scmp.ne.s32.totalorder %s72, %s73
      %p85 = scmp.eq.s32.totalorder %s28, 3
      %p86 = por %p84, %p85
      %p88 = scmp.ne.s32.totalorder %s73, %s87
      %p89 = scmp.eq.s32.totalorder %s28, 0
      %p90 = por %p88, %p89
      %s92 = sadd.s32 %s91, 1
      %p95 = scmp.eq.s32.totalorder %s22, 3
      %p96 = scmp.ne.s32.totalorder %s91, %s93
      %p97 = scmp.eq.s32.totalorder %s22, 0
      %p98 = por %p96, %p97
      %p99 = scmp.ne.s32.totalorder %s91, %s93
      %p100 = scmp.eq.s32.totalorder %s27, 3
      %p101 = por %p99, %p100
      %p102 = scmp.ne.s32.totalorder %s93, %s94
      %p103 = scmp.eq.s32.totalorder %s27, 0
      %p104 = por %p102, %p103
      %p105 = scmp.ne.s32.totalorder %s93, %s94
      %p106 = scmp.eq.s32.totalorder %s28, 3
      %p107 = por %p105, %p106
      %p109 = scmp.ne.s32.totalorder %s94, %s108
      %p110 = scmp.eq.s32.totalorder %s28, 0
      %p111 = por %p109, %p110
      %s113 = sadd.s32 %s112, 1
      %p116 = scmp.eq.s32.totalorder %s22, 3
      %p117 = scmp.ne.s32.totalorder %s112, %s114
      %p118 = scmp.eq.s32.totalorder %s22, 0
      %p119 = por %p117, %p118
      %p120 = scmp.ne.s32.totalorder %s112, %s114
      %p121 = scmp.eq.s32.totalorder %s27, 3
      %p122 = por %p120, %p121
      %p123 = scmp.ne.s32.totalorder %s114, %s115
      %p124 = scmp.eq.s32.totalorder %s27, 0
      %p125 = por %p123, %p124
      %p126 = scmp.ne.s32.totalorder %s114, %s115
      %p127 = scmp.eq.s32.totalorder %s28, 3
      %p128 = por %p126, %p127
      %p130 = scmp.ne.s32.totalorder %s115, %s129
      %p131 = scmp.eq.s32.totalorder %s28, 0
      %p132 = por %p130, %p131
      %s134 = sadd.s32 %s133, 1
      %p137 = scmp.eq.s32.totalorder %s22, 3
      %p138 = scmp.ne.s32.totalorder %s133, %s135
      %p139 = scmp.eq.s32.totalorder %s22, 0
      %p140 = por %p138, %p139
      %p141 = scmp.ne.s32.totalorder %s133, %s135
      %p142 = scmp.eq.s32.totalorder %s27, 3
      %p143 = por %p141, %p142
      %p144 = scmp.ne.s32.totalorder %s135, %s136
      %p145 = scmp.eq.s32.totalorder %s27, 0
      %p146 = por %p144, %p145
      %p147 = scmp.ne.s32.totalorder %s135, %s136
      %p148 = scmp.eq.s32.totalorder %s28, 3
      %p149 = por %p147, %p148
      %p151 = scmp.ne.s32.totalorder %s136, %s150
      %p152 = scmp.eq.s32.totalorder %s28, 0
      %p153 = por %p151, %p152
      %s155 = sadd.s32 %s154, 1
      %p158 = scmp.eq.s32.totalorder %s22, 3
      %p159 = scmp.ne.s32.totalorder %s154, %s156
      %p160 = scmp.eq.s32.totalorder %s22, 0
      %p161 = por %p159, %p160
      %p162 = scmp.ne.s32.totalorder %s154, %s156
      %p163 = scmp.eq.s32.totalorder %s27, 3
      %p164 = por %p162, %p163
      %p165 = scmp.ne.s32.totalorder %s156, %s157
      %p166 = scmp.eq.s32.totalorder %s27, 0
      %p167 = por %p165, %p166
      %p168 = scmp.ne.s32.totalorder %s156, %s157
      %p169 = scmp.eq.s32.totalorder %s28, 3
      %p170 = por %p168, %p169
      %p172 = scmp.ne.s32.totalorder %s157, %s171
      %p173 = scmp.eq.s32.totalorder %s28, 0
      %p174 = por %p172, %p173
      %s176 = sadd.s32 %s175, 1
      %p179 = scmp.eq.s32.totalorder %s22, 3
      %p180 = scmp.ne.s32.totalorder %s175, %s177
      %p181 = scmp.eq.s32.totalorder %s22, 0
      %p182 = por %p180, %p181
      %p183 = scmp.ne.s32.totalorder %s175, %s177
      %p184 = scmp.eq.s32.totalorder %s27, 3
      %p185 = por %p183, %p184
      %p186 = scmp.ne.s32.totalorder %s177, %s178
      %p187 = scmp.eq.s32.totalorder %s27, 0
      %p188 = por %p186, %p187
      %p189 = scmp.ne.s32.totalorder %s177, %s178
      %p190 = scmp.eq.s32.totalorder %s28, 3
      %p191 = por %p189, %p190
      %p193 = scmp.ne.s32.totalorder %s178, %s192
      %p194 = scmp.eq.s32.totalorder %s28, 0
      %p195 = por %p193, %p194
      %s197 = sadd.s32 %s196, 1
      %p200 = scmp.eq.s32.totalorder %s22, 3
      %p201 = scmp.ne.s32.totalorder %s196, %s198
      %p202 = scmp.eq.s32.totalorder %s22, 0
      %p203 = por %p201, %p202
      %p204 = scmp.ne.s32.totalorder %s196, %s198
      %p205 = scmp.eq.s32.totalorder %s27, 3
      %p206 = por %p204, %p205
      %p207 = scmp.ne.s32.totalorder %s198, %s199
      %p208 = scmp.eq.s32.totalorder %s27, 0
      %p209 = por %p207, %p208
      %p210 = scmp.ne.s32.totalorder %s198, %s199
      %p211 = scmp.eq.s32.totalorder %s28, 3
      %p212 = por %p210, %p211
      %p214 = scmp.ne.s32.totalorder %s199, %s213
      %p215 = scmp.eq.s32.totalorder %s28, 0
      %p216 = por %p214, %p215
      %s218 = sadd.s32 %s217, 1
      %p221 = scmp.eq.s32.totalorder %s22, 3
      %p222 = scmp.ne.s32.totalorder %s217, %s219
      %p223 = scmp.eq.s32.totalorder %s22, 0
      %p224 = por %p222, %p223
      %p225 = scmp.ne.s32.totalorder %s217, %s219
      %p226 = scmp.eq.s32.totalorder %s27, 3
      %p227 = por %p225, %p226
      %p228 = scmp.ne.s32.totalorder %s219, %s220
      %p229 = scmp.eq.s32.totalorder %s27, 0
      %p230 = por %p228, %p229
      %p231 = scmp.ne.s32.totalorder %s219, %s220
      %p232 = scmp.eq.s32.totalorder %s28, 3
      %p233 = por %p231, %p232
      %p235 = scmp.ne.s32.totalorder %s220, %s234
      %p236 = scmp.eq.s32.totalorder %s28, 0
      %p237 = por %p235, %p236
      %s238 = ssub.s32 %s30, %s37
      %s239 = ssub.s32 %s29, %s41
      %s240 = sor.u32 %s238, %s239
      %p241 = scmp.eq.s32.totalorder %s240, 0
      %s243 = sadd.s32 %s242, 1
      %s244 = scalar_select %p241, %s242, %s243
      %p247 = pneg %p241
      %p248 = scmp.eq.s32.totalorder %s22, 3
      %p249 = por %p247, %p248
      %p250 = scmp.ne.s32.totalorder %s242, %s245
      %p251 = scmp.eq.s32.totalorder %s22, 0
      %p252 = por %p250, %p251
      %p253 = scmp.ne.s32.totalorder %s242, %s245
      %p254 = scmp.eq.s32.totalorder %s27, 3
      %p255 = por %p253, %p254
      %p256 = scmp.ne.s32.totalorder %s245, %s246
      %p257 = scmp.eq.s32.totalorder %s27, 0
      %p258 = por %p256, %p257
      %p259 = scmp.ne.s32.totalorder %s245, %s246
      %p260 = scmp.eq.s32.totalorder %s28, 3
      %p261 = por %p259, %p260
      %p263 = scmp.ne.s32.totalorder %s246, %s262
      %p264 = scmp.eq.s32.totalorder %s28, 0
      %p265 = por %p263, %p264
      %p266 = scmp.le.s32.totalorder 1, %s22
      %p267 = scmp.lt.s32.totalorder %s22, 5
      %p268 = pnand %p266, %p267
      %p269 = pneg %p268
      // Predicated region
      $region9: #{tpu_custom_call.1} parent=5 // pred_check
        _
      $region10: #{tpu_custom_call.1} parent=5 // pred_check_branch
        %271 = sbr.rel (%p268) target = $region12
      $region11: #{tpu_custom_call.1} parent=5 // pred_region
        %s272 = ssub.s32 %s22, 1
        // Predicated region
        $region13: #{tpu_custom_call.1} parent=11 // pred_check
          %p273 = pneg %p83
        $region14: #{tpu_custom_call.1} parent=11 // pred_check_branch
          %275 = sbr.rel (%p273) target = $region16
        $region15: #{tpu_custom_call.1} parent=11 // pred_region
          %s277 = ssub.s32 4096, 4096
          %278 = vsyncadd [#allocation8], %s277
          %s279 = sshll.u32 [#allocation7], 4
          %s280 = int_to_ptr.vmem [resolvable:$true] %s279
          %285 = dma.hbm_to_vmem [thread:$0]  %s1, 4096, %s280, [#allocation8], 256, 256, 16
        $region16: #{tpu_custom_call.1} parent=11 // pred_fallthru
          _
        // Predicated region
        $region17: #{tpu_custom_call.1} parent=11 // pred_check
          %p286 = pneg %p104
        $region18: #{tpu_custom_call.1} parent=11 // pred_check_branch
          %288 = sbr.rel (%p286) target = $region20
        $region19: #{tpu_custom_call.1} parent=11 // pred_region
          _
        $region20: #{tpu_custom_call.1} parent=11 // pred_fallthru
          _
        // Predicated region
        $region21: #{tpu_custom_call.1} parent=11 // pred_check
          %p289 = pneg %p125
        $region22: #{tpu_custom_call.1} parent=11 // pred_check_branch
          %291 = sbr.rel (%p289) target = $region24
        $region23: #{tpu_custom_call.1} parent=11 // pred_region
          _
        $region24: #{tpu_custom_call.1} parent=11 // pred_fallthru
          _
        // Predicated region
        $region25: #{tpu_custom_call.1} parent=11 // pred_check
          %p292 = pneg %p146
        $region26: #{tpu_custom_call.1} parent=11 // pred_check_branch
          %294 = sbr.rel (%p292) target = $region28
        $region27: #{tpu_custom_call.1} parent=11 // pred_region
          _
        $region28: #{tpu_custom_call.1} parent=11 // pred_fallthru
          _
        // Predicated region
        $region29: #{tpu_custom_call.1} parent=11 // pred_check
          %p295 = pneg %p167
        $region30: #{tpu_custom_call.1} parent=11 // pred_check_branch
          %297 = sbr.rel (%p295) target = $region32
        $region31: #{tpu_custom_call.1} parent=11 // pred_region
          %s299 = ssub.s32 4096, 4096
          %300 = vsyncadd [#allocation8], %s299
          %s301 = sshll.u32 [#allocation9], 4
          %s302 = int_to_ptr.vmem [resolvable:$true] %s301
          %307 = dma.hbm_to_vmem [thread:$0]  %s5, 4096, %s302, [#allocation8], 64, 64, 4
        $region32: #{tpu_custom_call.1} parent=11 // pred_fallthru
          _
        // Predicated region
        $region33: #{tpu_custom_call.1} parent=11 // pred_check
          %p308 = pneg %p188
        $region34: #{tpu_custom_call.1} parent=11 // pred_check_branch
          %310 = sbr.rel (%p308) target = $region36
        $region35: #{tpu_custom_call.1} parent=11 // pred_region
          _
        $region36: #{tpu_custom_call.1} parent=11 // pred_fallthru
          _
        // Predicated region
        $region37: #{tpu_custom_call.1} parent=11 // pred_check
          %p311 = pneg %p209
        $region38: #{tpu_custom_call.1} parent=11 // pred_check_branch
          %313 = sbr.rel (%p311) target = $region40
        $region39: #{tpu_custom_call.1} parent=11 // pred_region
          _
        $region40: #{tpu_custom_call.1} parent=11 // pred_fallthru
          _
        // Predicated region
        $region41: #{tpu_custom_call.1} parent=11 // pred_check
          %p314 = pneg %p230
        $region42: #{tpu_custom_call.1} parent=11 // pred_check_branch
          %316 = sbr.rel (%p314) target = $region44
        $region43: #{tpu_custom_call.1} parent=11 // pred_region
          _
        $region44: #{tpu_custom_call.1} parent=11 // pred_fallthru
          _
      $region12: #{tpu_custom_call.1} parent=5 // pred_fallthru
        _
      %p317 = scmp.lt.s32.totalorder %s22, 4
      // Predicated region
      $region45: #{tpu_custom_call.1} parent=5 // pred_check
        %p318 = pneg %p317
      $region46: #{tpu_custom_call.1} parent=5 // pred_check_branch
        %320 = sbr.rel (%p318) target = $region48
      $region47: #{tpu_custom_call.1} parent=5 // pred_region
        // Predicated region
        $region49: #{tpu_custom_call.1} parent=47 // pred_check
          %p321 = pneg %p56
        $region50: #{tpu_custom_call.1} parent=47 // pred_check_branch
          %323 = sbr.rel (%p321) target = $region52
        $region51: #{tpu_custom_call.1} parent=47 // pred_region
          %s324 = sand.u32 %s46, 1
          %s325 = scalar_lea.sflag [#allocation5], %s324
          %s326 = sand.u32 %s46, 1
          %s327 = smul.addr %s326, 16
          %s328 = scalar_lea.vmem [#allocation4], %s327
          %s329 = smul.u32 4, %s29
          %s331 = ssub.s32 256, 256
          %332 = vsyncadd %s325, %s331
          %s333 = smul.addr %s30, 4
          %s334 = sadd.s32 %s329, %s333
          %s335 = smul.addr %s334, 64
          %s336 = scalar_lea.hbm %s0, %s335
          %s337 = sshll.u32 %s328, 4
          %s338 = int_to_ptr.vmem [resolvable:$true] %s337
          %343 = dma.hbm_to_vmem [thread:$0]  %s336, 256, %s338, %s325, 64, 64, 4
        $region52: #{tpu_custom_call.1} parent=47 // pred_fallthru
          _
      $region48: #{tpu_custom_call.1} parent=5 // pred_fallthru
        _
      %p344 = scmp.le.s32.totalorder 1, %s22
      %p345 = scmp.lt.s32.totalorder %s22, 5
      %p346 = pnand %p344, %p345
      %p347 = pneg %p346
      // Predicated region
      $region53: #{tpu_custom_call.1} parent=5 // pred_check
        _
      $region54: #{tpu_custom_call.1} parent=5 // pred_check_branch
        %349 = sbr.rel (%p346) target = $region56
      $region55: #{tpu_custom_call.1} parent=5 // pred_region
        %s350 = ssub.s32 %s22, 1
        %s351 = sand.u32 %s49, 1
        %s352 = scalar_lea.sflag [#allocation5], %s351
        %s353 = sand.u32 %s49, 1
        %s354 = smul.addr %s353, 16
        %s355 = scalar_lea.vmem [#allocation4], %s354
        // Predicated region
        $region57: #{tpu_custom_call.1} parent=55 // pred_check
          %p356 = pneg %p62
        $region58: #{tpu_custom_call.1} parent=55 // pred_check_branch
          %358 = sbr.rel (%p356) target = $region60
        $region59: #{tpu_custom_call.1} parent=55 // pred_region
          %359 = dma.done %s352, 256
        $region60: #{tpu_custom_call.1} parent=55 // pred_fallthru
          _
        // Predicated region
        $region61: #{tpu_custom_call.1} parent=55 // pred_check
          %p360 = pneg %p83
        $region62: #{tpu_custom_call.1} parent=55 // pred_check_branch
          %362 = sbr.rel (%p360) target = $region64
        $region63: #{tpu_custom_call.1} parent=55 // pred_region
          %363 = dma.done [#allocation8], 4096
        $region64: #{tpu_custom_call.1} parent=55 // pred_fallthru
          _
        // Predicated region
        $region65: #{tpu_custom_call.1} parent=55 // pred_check
          %p364 = pneg %p167
        $region66: #{tpu_custom_call.1} parent=55 // pred_check_branch
          %366 = sbr.rel (%p364) target = $region68
        $region67: #{tpu_custom_call.1} parent=55 // pred_region
          %367 = dma.done [#allocation8], 4096
        $region68: #{tpu_custom_call.1} parent=55 // pred_fallthru
          _
        %s368 = sand.u32 %s49, 1
        %s369 = scalar_lea.sflag [#allocation5], %s368
        %s370 = sand.u32 %s49, 1
        %s371 = smul.addr %s370, 16
        %s372 = scalar_lea.vmem [#allocation4], %s371
        %p373 = pneg %p62
        %p374 = pneg %p59
        %p375 = pneg %p83
        %p376 = pneg %p80
        %p377 = pneg %p104
        %p378 = pneg %p101
        %p379 = pneg %p125
        %p380 = pneg %p122
        %p381 = pneg %p146
        %p382 = pneg %p143
        %p383 = pneg %p167
        %p384 = pneg %p164
        %p385 = pneg %p188
        %p386 = pneg %p185
        %p387 = pneg %p209
        %p388 = pneg %p206
        %p389 = pneg %p230
        %p390 = pneg %p227
        %p391 = pneg %p258
        %p392 = pneg %p255
        %s393 = sand.u32 %s245, 1
        %s394 = scalar_lea.sflag [#allocation6], %s393
        %s395 = sand.u32 %s245, 1
        %s396 = smul.addr %s395, 32
        %s397 = scalar_lea.vmem [#allocation10], %s396
        %s398 = smul.u32 4, %s31
        %s399 = smul.u32 4, %s31
        %p401 = scmp.eq.s32.totalorder %s32, 0
        // Predicated region
        $region69: #{tpu_custom_call.1} parent=55 // pred_check
          %p402 = pneg %p401
        $region70: #{tpu_custom_call.1} parent=55 // pred_check_branch
          %404 = sbr.rel (%p402) target = $region72
        $region71: #{tpu_custom_call.1} parent=55 // pred_region
          %405 = vst [vmem:[#allocation2] sm:$0xff] 0.0
          %406 = vst [vmem:[#allocation2 + $0x8] sm:$0xff] 0.0
          %407 = vst [vmem:[#allocation2 + $0x10] sm:$0xff] 0.0
          %408 = vst [vmem:[#allocation2 + $0x18] sm:$0xff] 0.0
          %409 = vst [vmem:[#allocation2 + $0x20] sm:$0xff] 0.0
          %410 = vst [vmem:[#allocation2 + $0x28] sm:$0xff] 0.0
          %411 = vst [vmem:[#allocation2 + $0x30] sm:$0xff] 0.0
          %412 = vst [vmem:[#allocation2 + $0x38] sm:$0xff] 0.0
          %413 = vst [vmem:[#allocation2 + $0x40] sm:$0xff] 0.0
          %414 = vst [vmem:[#allocation2 + $0x48] sm:$0xff] 0.0
          %415 = vst [vmem:[#allocation2 + $0x50] sm:$0xff] 0.0
          %416 = vst [vmem:[#allocation2 + $0x58] sm:$0xff] 0.0
          %417 = vst [vmem:[#allocation2 + $0x60] sm:$0xff] 0.0
          %418 = vst [vmem:[#allocation2 + $0x68] sm:$0xff] 0.0
          %419 = vst [vmem:[#allocation2 + $0x70] sm:$0xff] 0.0
          %420 = vst [vmem:[#allocation2 + $0x78] sm:$0xff] 0.0
          %421 = vst [vmem:[#allocation3] sm:$0xff] 0.0
          %422 = vst [vmem:[#allocation3 + $0x8] sm:$0xff] 0.0
          %423 = vst [vmem:[#allocation3 + $0x10] sm:$0xff] 0.0
          %424 = vst [vmem:[#allocation3 + $0x18] sm:$0xff] 0.0
        $region72: #{tpu_custom_call.1} parent=55 // pred_fallthru
          _
        %v425 = vld [vmem:[%s355] sm:$0xf]
        %v426 = vld [vmem:[%s355 + $0x4] sm:$0xf]
        %v427 = vld [vmem:[%s355 + $0x8] sm:$0xf]
        %v428 = vld [vmem:[%s355 + $0xc] sm:$0xf]
        %v429 = vld [vmem:[#allocation7] sm:$0xff]
        %v430 = vld [vmem:[#allocation7 + $0x8] sm:$0xff]
        %v431 = vld [vmem:[#allocation7 + $0x10] sm:$0xff]
        %v432 = vld [vmem:[#allocation7 + $0x18] sm:$0xff]
        %v433 = vld [vmem:[#allocation7 + $0x20] sm:$0xff]
        %v434 = vld [vmem:[#allocation7 + $0x28] sm:$0xff]
        %v435 = vld [vmem:[#allocation7 + $0x30] sm:$0xff]
        %v436 = vld [vmem:[#allocation7 + $0x38] sm:$0xff]
        %v437 = vld [vmem:[#allocation7 + $0x40] sm:$0xff]
        %v438 = vld [vmem:[#allocation7 + $0x48] sm:$0xff]
        %v439 = vld [vmem:[#allocation7 + $0x50] sm:$0xff]
        %v440 = vld [vmem:[#allocation7 + $0x58] sm:$0xff]
        %v441 = vld [vmem:[#allocation7 + $0x60] sm:$0xff]
        %v442 = vld [vmem:[#allocation7 + $0x68] sm:$0xff]
        %v443 = vld [vmem:[#allocation7 + $0x70] sm:$0xff]
        %v444 = vld [vmem:[#allocation7 + $0x78] sm:$0xff]
        %v445 = vld [vmem:[#allocation7 + $0x80] sm:$0xff]
        %v446 = vld [vmem:[#allocation7 + $0x88] sm:$0xff]
        %v447 = vld [vmem:[#allocation7 + $0x90] sm:$0xff]
        %v448 = vld [vmem:[#allocation7 + $0x98] sm:$0xff]
        %v449 = vld [vmem:[#allocation7 + $0xa0] sm:$0xff]
        %v450 = vld [vmem:[#allocation7 + $0xa8] sm:$0xff]
        %v451 = vld [vmem:[#allocation7 + $0xb0] sm:$0xff]
        %v452 = vld [vmem:[#allocation7 + $0xb8] sm:$0xff]
        %v453 = vld [vmem:[#allocation7 + $0xc0] sm:$0xff]
        %v454 = vld [vmem:[#allocation7 + $0xc8] sm:$0xff]
        %v455 = vld [vmem:[#allocation7 + $0xd0] sm:$0xff]
        %v456 = vld [vmem:[#allocation7 + $0xd8] sm:$0xff]
        %v457 = vld [vmem:[#allocation7 + $0xe0] sm:$0xff]
        %v458 = vld [vmem:[#allocation7 + $0xe8] sm:$0xff]
        %v459 = vld [vmem:[#allocation7 + $0xf0] sm:$0xff]
        %v460 = vld [vmem:[#allocation7 + $0xf8] sm:$0xff]
        %v461 = vld [vmem:[%s2] sm:$0xf]
        %v463 = vlaneseq
        %v464 = vshrl.u32 %v463, 7
        %v465 = vsub.s32 0, %v464
        %v466 = vrot.slane %v461, %v465
        %v467 = vlaneseq
        %v468 = vshrl.u32 %v467, 7
        %v469 = vsub.s32 1, %v468
        %v470 = vrot.slane %v461, %v469
        %v471 = vlaneseq
        %v472 = vshrl.u32 %v471, 7
        %v473 = vsub.s32 2, %v472
        %v474 = vrot.slane %v461, %v473
        %v475 = vlaneseq
        %v476 = vshrl.u32 %v475, 7
        %v477 = vsub.s32 3, %v476
        %v478 = vrot.slane %v461, %v477
        %v487 = vunpack.c.l.b16 %v425
        %v488 = vunpack.c.l.b16 %v426
        %v489 = vunpack.c.l.b16 %v427
        %v490 = vunpack.c.l.b16 %v428
        %v491 = vpack.c.b16 %v488, %v487
        %v492 = vpack.c.b16 %v490, %v489
        %v527 = vunpack.c.l.b16 %v429
        %v528 = vunpack.c.h.b16 %v429
        %v529 = vunpack.c.l.b16 %v430
        %v530 = vunpack.c.h.b16 %v430
        %v531 = vunpack.c.l.b16 %v431
        %v532 = vunpack.c.h.b16 %v431
        %v533 = vunpack.c.l.b16 %v432
        %v534 = vunpack.c.h.b16 %v432
        %v535 = vunpack.c.l.b16 %v433
        %v536 = vunpack.c.h.b16 %v433
        %v537 = vunpack.c.l.b16 %v434
        %v538 = vunpack.c.h.b16 %v434
        %v539 = vunpack.c.l.b16 %v435
        %v540 = vunpack.c.h.b16 %v435
        %v541 = vunpack.c.l.b16 %v436
        %v542 = vunpack.c.h.b16 %v436
        %v543 = vunpack.c.l.b16 %v437
        %v544 = vunpack.c.h.b16 %v437
        %v545 = vunpack.c.l.b16 %v438
        %v546 = vunpack.c.h.b16 %v438
        %v547 = vunpack.c.l.b16 %v439
        %v548 = vunpack.c.h.b16 %v439
        %v549 = vunpack.c.l.b16 %v440
        %v550 = vunpack.c.h.b16 %v440
        %v551 = vunpack.c.l.b16 %v441
        %v552 = vunpack.c.h.b16 %v441
        %v553 = vunpack.c.l.b16 %v442
        %v554 = vunpack.c.h.b16 %v442
        %v555 = vunpack.c.l.b16 %v443
        %v556 = vunpack.c.h.b16 %v443
        %v557 = vunpack.c.l.b16 %v444
        %v558 = vunpack.c.h.b16 %v444
        %v559 = vunpack.c.l.b16 %v445
        %v560 = vunpack.c.h.b16 %v445
        %v561 = vunpack.c.l.b16 %v446
        %v562 = vunpack.c.h.b16 %v446
        %v563 = vunpack.c.l.b16 %v447
        %v564 = vunpack.c.h.b16 %v447
        %v565 = vunpack.c.l.b16 %v448
        %v566 = vunpack.c.h.b16 %v448
        %v567 = vunpack.c.l.b16 %v449
        %v568 = vunpack.c.h.b16 %v449
        %v569 = vunpack.c.l.b16 %v450
        %v570 = vunpack.c.h.b16 %v450
        %v571 = vunpack.c.l.b16 %v451
        %v572 = vunpack.c.h.b16 %v451
        %v573 = vunpack.c.l.b16 %v452
        %v574 = vunpack.c.h.b16 %v452
        %v575 = vunpack.c.l.b16 %v453
        %v576 = vunpack.c.h.b16 %v453
        %v577 = vunpack.c.l.b16 %v454
        %v578 = vunpack.c.h.b16 %v454
        %v579 = vunpack.c.l.b16 %v455
        %v580 = vunpack.c.h.b16 %v455
        %v581 = vunpack.c.l.b16 %v456
        %v582 = vunpack.c.h.b16 %v456
        %v583 = vunpack.c.l.b16 %v457
        %v584 = vunpack.c.h.b16 %v457
        %v585 = vunpack.c.l.b16 %v458
        %v586 = vunpack.c.h.b16 %v458
        %v587 = vunpack.c.l.b16 %v459
        %v588 = vunpack.c.h.b16 %v459
        %v589 = vunpack.c.l.b16 %v460
        %v590 = vunpack.c.h.b16 %v460
        %v591 = vpack.c.b16 %v531, %v527
        %v592 = vpack.c.b16 %v532, %v528
        %v593 = vpack.c.b16 %v533, %v529
        %v594 = vpack.c.b16 %v534, %v530
        %v595 = vpack.c.b16 %v539, %v535
        %v596 = vpack.c.b16 %v540, %v536
        %v597 = vpack.c.b16 %v541, %v537
        %v598 = vpack.c.b16 %v542, %v538
        %v599 = vpack.c.b16 %v547, %v543
        %v600 = vpack.c.b16 %v548, %v544
        %v601 = vpack.c.b16 %v549, %v545
        %v602 = vpack.c.b16 %v550, %v546
        %v603 = vpack.c.b16 %v555, %v551
        %v604 = vpack.c.b16 %v556, %v552
        %v605 = vpack.c.b16 %v557, %v553
        %v606 = vpack.c.b16 %v558, %v554
        %v607 = vpack.c.b16 %v563, %v559
        %v608 = vpack.c.b16 %v564, %v560
        %v609 = vpack.c.b16 %v565, %v561
        %v610 = vpack.c.b16 %v566, %v562
        %v611 = vpack.c.b16 %v571, %v567
        %v612 = vpack.c.b16 %v572, %v568
        %v613 = vpack.c.b16 %v573, %v569
        %v614 = vpack.c.b16 %v574, %v570
        %v615 = vpack.c.b16 %v579, %v575
        %v616 = vpack.c.b16 %v580, %v576
        %v617 = vpack.c.b16 %v581, %v577
        %v618 = vpack.c.b16 %v582, %v578
        %v619 = vpack.c.b16 %v587, %v583
        %v620 = vpack.c.b16 %v588, %v584
        %v621 = vpack.c.b16 %v589, %v585
        %v622 = vpack.c.b16 %v590, %v586
        %655 = vmatprep.subr.bf16.mxu0 %v592
        %656 = vmatpush1.bf16.msra.mxu0 %v591
        %657 = vmatprep.subr.bf16.mxu0 %v596
        %658 = vmatpush1.bf16.msra.mxu0 %v595
        %659 = vmatprep.subr.bf16.mxu0 %v600
        %660 = vmatpush1.bf16.msra.mxu0 %v599
        %661 = vmatprep.subr.bf16.mxu0 %v604
        %662 = vmatpush1.bf16.msra.mxu0 %v603
        %663 = vmatprep.subr.bf16.mxu0 %v608
        %664 = vmatpush1.bf16.msra.mxu0 %v607
        %665 = vmatprep.subr.bf16.mxu0 %v612
        %666 = vmatpush1.bf16.msra.mxu0 %v611
        %667 = vmatprep.subr.bf16.mxu0 %v616
        %668 = vmatpush1.bf16.msra.mxu0 %v615
        %669 = vmatprep.subr.bf16.mxu0 %v620
        %670 = vmatpush1.bf16.msra.mxu0 %v619
        %671 = vmatprep.subr.bf16.mxu0 0
        %672 = vmatpush1.bf16.msra.mxu0 0
        %673 = vmatprep.subr.bf16.mxu0 0
        %674 = vmatpush1.bf16.msra.mxu0 0
        %675 = vmatprep.subr.bf16.mxu0 0
        %676 = vmatpush1.bf16.msra.mxu0 0
        %677 = vmatprep.subr.bf16.mxu0 0
        %678 = vmatpush1.bf16.msra.mxu0 0
        %679 = vmatprep.subr.bf16.mxu0 0
        %680 = vmatpush1.bf16.msra.mxu0 0
        %681 = vmatprep.subr.bf16.mxu0 0
        %682 = vmatpush1.bf16.msra.mxu0 0
        %683 = vmatprep.subr.bf16.mxu0 0
        %684 = vmatpush1.bf16.msra.mxu0 0
        %685 = vmatprep.subr.bf16.mxu0 0
        %686 = vmatpush1.bf16.msra.mxu0 0
        %687 = vmatprep.mubr.bf16.mxu0 0
        %688 = vmatmul.mubr.bf16.gmra.mrb[0].mxu0 %v491
        %v689 = vpop.f32.mrb[0].mxu0
        %v690 = vadd.f32 %v466, %v689
        %v691 = vpop.f32.mrb[0].mxu0
        %v692 = vadd.f32 %v470, %v691
        %v693 = vpop.f32.mrb[0].mxu0
        %v694 = vadd.f32 %v466, %v693
        %v695 = vpop.f32.mrb[0].mxu0
        %v696 = vadd.f32 %v470, %v695
        %697 = vmatprep.mubr.bf16.mxu0 0
        %698 = vmatmul.mubr.bf16.gmra.mrb[0].mxu0 %v492
        %v699 = vpop.f32.mrb[0].mxu0
        %v700 = vadd.f32 %v466, %v699
        %v701 = vpop.f32.mrb[0].mxu0
        %v702 = vadd.f32 %v470, %v701
        %v703 = vpop.f32.mrb[0].mxu0
        %v704 = vadd.f32 %v466, %v703
        %v705 = vpop.f32.mrb[0].mxu0
        %v706 = vadd.f32 %v470, %v705
        %707 = vdwg.mxu0
        %708 = vmatprep.subr.bf16.mxu0 %v594
        %709 = vmatpush1.bf16.msra.mxu0 %v593
        %710 = vmatprep.subr.bf16.mxu0 %v598
        %711 = vmatpush1.bf16.msra.mxu0 %v597
        %712 = vmatprep.subr.bf16.mxu0 %v602
        %713 = vmatpush1.bf16.msra.mxu0 %v601
        %714 = vmatprep.subr.bf16.mxu0 %v606
        %715 = vmatpush1.bf16.msra.mxu0 %v605
        %716 = vmatprep.subr.bf16.mxu0 %v610
        %717 = vmatpush1.bf16.msra.mxu0 %v609
        %718 = vmatprep.subr.bf16.mxu0 %v614
        %719 = vmatpush1.bf16.msra.mxu0 %v613
        %720 = vmatprep.subr.bf16.mxu0 %v618
        %721 = vmatpush1.bf16.msra.mxu0 %v617
        %722 = vmatprep.subr.bf16.mxu0 %v622
        %723 = vmatpush1.bf16.msra.mxu0 %v621
        %724 = vmatprep.subr.bf16.mxu0 0
        %725 = vmatpush1.bf16.msra.mxu0 0
        %726 = vmatprep.subr.bf16.mxu0 0
        %727 = vmatpush1.bf16.msra.mxu0 0
        %728 = vmatprep.subr.bf16.mxu0 0
        %729 = vmatpush1.bf16.msra.mxu0 0
        %730 = vmatprep.subr.bf16.mxu0 0
        %731 = vmatpush1.bf16.msra.mxu0 0
        %732 = vmatprep.subr.bf16.mxu0 0
        %733 = vmatpush1.bf16.msra.mxu0 0
        %734 = vmatprep.subr.bf16.mxu0 0
        %735 = vmatpush1.bf16.msra.mxu0 0
        %736 = vmatprep.subr.bf16.mxu0 0
        %737 = vmatpush1.bf16.msra.mxu0 0
        %738 = vmatprep.subr.bf16.mxu0 0
        %739 = vmatpush1.bf16.msra.mxu0 0
        %740 = vmatprep.mubr.bf16.mxu0 0
        %741 = vmatmul.mubr.bf16.gmra.mrb[0].mxu0 %v491
        %v742 = vpop.f32.mrb[0].mxu0
        %v743 = vadd.f32 %v474, %v742
        %v744 = vpop.f32.mrb[0].mxu0
        %v745 = vadd.f32 %v478, %v744
        %v746 = vpop.f32.mrb[0].mxu0
        %v747 = vadd.f32 %v474, %v746
        %v748 = vpop.f32.mrb[0].mxu0
        %v749 = vadd.f32 %v478, %v748
        %750 = vmatprep.mubr.bf16.mxu0 0
        %751 = vmatmul.mubr.bf16.gmra.mrb[0].mxu0 %v492
        %v752 = vpop.f32.mrb[0].mxu0
        %v753 = vadd.f32 %v474, %v752
        %v754 = vpop.f32.mrb[0].mxu0
        %v755 = vadd.f32 %v478, %v754
        %v756 = vpop.f32.mrb[0].mxu0
        %v757 = vadd.f32 %v474, %v756
        %v758 = vpop.f32.mrb[0].mxu0
        %v759 = vadd.f32 %v478, %v758
        %760 = vdwg.mxu0
        %v761 = vadd.f32 %v690, %v692
        %v762 = vadd.f32 %v761, %v743
        %v763 = vadd.f32 %v762, %v745
        %764 = vadd.xlane.f32.xlu0 %v763
        %v765 = vpop.xlane.xlu0 %764
        %v766 = vadd.f32 %v694, %v696
        %v767 = vadd.f32 %v766, %v747
        %v768 = vadd.f32 %v767, %v749
        %769 = vadd.xlane.f32.xlu0 %v768
        %v770 = vpop.xlane.xlu0 %769
        %v771 = vadd.f32 %v700, %v702
        %v772 = vadd.f32 %v771, %v753
        %v773 = vadd.f32 %v772, %v755
        %774 = vadd.xlane.f32.xlu0 %v773
        %v775 = vpop.xlane.xlu0 %774
        %v776 = vadd.f32 %v704, %v706
        %v777 = vadd.f32 %v776, %v757
        %v778 = vadd.f32 %v777, %v759
        %779 = vadd.xlane.f32.xlu0 %v778
        %v780 = vpop.xlane.xlu0 %779
        %v781 = vmul.f32 %v765, 0.001953125
        %v782 = vmul.f32 %v770, 0.001953125
        %v783 = vmul.f32 %v775, 0.001953125
        %v784 = vmul.f32 %v780, 0.001953125
        %v785 = vmul.f32 %v690, %v690
        %v786 = vmul.f32 %v692, %v692
        %v787 = vmul.f32 %v743, %v743
        %v788 = vmul.f32 %v745, %v745
        %v789 = vmul.f32 %v694, %v694
        %v790 = vmul.f32 %v696, %v696
        %v791 = vmul.f32 %v747, %v747
        %v792 = vmul.f32 %v749, %v749
        %v793 = vmul.f32 %v700, %v700
        %v794 = vmul.f32 %v702, %v702
        %v795 = vmul.f32 %v753, %v753
        %v796 = vmul.f32 %v755, %v755
        %v797 = vmul.f32 %v704, %v704
        %v798 = vmul.f32 %v706, %v706
        %v799 = vmul.f32 %v757, %v757
        %v800 = vmul.f32 %v759, %v759
        %v801 = vadd.f32 %v785, %v786
        %v802 = vadd.f32 %v801, %v787
        %v803 = vadd.f32 %v802, %v788
        %804 = vadd.xlane.f32.xlu0 %v803
        %v805 = vpop.xlane.xlu0 %804
        %v806 = vadd.f32 %v789, %v790
        %v807 = vadd.f32 %v806, %v791
        %v808 = vadd.f32 %v807, %v792
        %809 = vadd.xlane.f32.xlu0 %v808
        %v810 = vpop.xlane.xlu0 %809
        %v811 = vadd.f32 %v793, %v794
        %v812 = vadd.f32 %v811, %v795
        %v813 = vadd.f32 %v812, %v796
        %814 = vadd.xlane.f32.xlu0 %v813
        %v815 = vpop.xlane.xlu0 %814
        %v816 = vadd.f32 %v797, %v798
        %v817 = vadd.f32 %v816, %v799
        %v818 = vadd.f32 %v817, %v800
        %819 = vadd.xlane.f32.xlu0 %v818
        %v820 = vpop.xlane.xlu0 %819
        %v821 = vmul.f32 %v805, 0.001953125
        %v822 = vmul.f32 %v810, 0.001953125
        %v823 = vmul.f32 %v815, 0.001953125
        %v824 = vmul.f32 %v820, 0.001953125
        %v825 = vmul.f32 %v781, %v781
        %v826 = vmul.f32 %v782, %v782
        %v827 = vmul.f32 %v783, %v783
        %v828 = vmul.f32 %v784, %v784
        %v829 = vsub.f32 %v821, %v825
        %v830 = vsub.f32 %v822, %v826
        %v831 = vsub.f32 %v823, %v827
        %v832 = vsub.f32 %v824, %v828
        %v833 = vmax.f32 %v829, 0.0
        %v834 = vmax.f32 %v830, 0.0
        %v835 = vmax.f32 %v831, 0.0
        %v836 = vmax.f32 %v832, 0.0
        %v837 = vsub.f32 %v690, %v781
        %v838 = vsub.f32 %v692, %v781
        %v839 = vsub.f32 %v743, %v781
        %v840 = vsub.f32 %v745, %v781
        %v841 = vsub.f32 %v694, %v782
        %v842 = vsub.f32 %v696, %v782
        %v843 = vsub.f32 %v747, %v782
        %v844 = vsub.f32 %v749, %v782
        %v845 = vsub.f32 %v700, %v783
        %v846 = vsub.f32 %v702, %v783
        %v847 = vsub.f32 %v753, %v783
        %v848 = vsub.f32 %v755, %v783
        %v849 = vsub.f32 %v704, %v784
        %v850 = vsub.f32 %v706, %v784
        %v851 = vsub.f32 %v757, %v784
        %v852 = vsub.f32 %v759, %v784
        %v853 = vadd.f32 %v833, 1e-12
        %v854 = vadd.f32 %v834, 1e-12
        %v855 = vadd.f32 %v835, 1e-12
        %v856 = vadd.f32 %v836, 1e-12
        %v857 = vrsqrt.pop %v853
        %v858 = vrsqrt.pop %v854
        %v859 = vrsqrt.pop %v855
        %v860 = vrsqrt.pop %v856
        %v861 = vld [vmem:[%s3] sm:$0xf]
        %v863 = vlaneseq
        %v864 = vshrl.u32 %v863, 7
        %v865 = vsub.s32 0, %v864
        %v866 = vrot.slane %v861, %v865
        %v867 = vlaneseq
        %v868 = vshrl.u32 %v867, 7
        %v869 = vsub.s32 1, %v868
        %v870 = vrot.slane %v861, %v869
        %v871 = vlaneseq
        %v872 = vshrl.u32 %v871, 7
        %v873 = vsub.s32 2, %v872
        %v874 = vrot.slane %v861, %v873
        %v875 = vlaneseq
        %v876 = vshrl.u32 %v875, 7
        %v877 = vsub.s32 3, %v876
        %v878 = vrot.slane %v861, %v877
        %v883 = vmul.f32 %v857, %v866
        %v884 = vmul.f32 %v857, %v870
        %v885 = vmul.f32 %v857, %v874
        %v886 = vmul.f32 %v857, %v878
        %v887 = vmul.f32 %v858, %v866
        %v888 = vmul.f32 %v858, %v870
        %v889 = vmul.f32 %v858, %v874
        %v890 = vmul.f32 %v858, %v878
        %v891 = vmul.f32 %v859, %v866
        %v892 = vmul.f32 %v859, %v870
        %v893 = vmul.f32 %v859, %v874
        %v894 = vmul.f32 %v859, %v878
        %v895 = vmul.f32 %v860, %v866
        %v896 = vmul.f32 %v860, %v870
        %v897 = vmul.f32 %v860, %v874
        %v898 = vmul.f32 %v860, %v878
        %v899 = vmul.f32 %v837, %v883
        %v900 = vmul.f32 %v838, %v884
        %v901 = vmul.f32 %v839, %v885
        %v902 = vmul.f32 %v840, %v886
        %v903 = vmul.f32 %v841, %v887
        %v904 = vmul.f32 %v842, %v888
        %v905 = vmul.f32 %v843, %v889
        %v906 = vmul.f32 %v844, %v890
        %v907 = vmul.f32 %v845, %v891
        %v908 = vmul.f32 %v846, %v892
        %v909 = vmul.f32 %v847, %v893
        %v910 = vmul.f32 %v848, %v894
        %v911 = vmul.f32 %v849, %v895
        %v912 = vmul.f32 %v850, %v896
        %v913 = vmul.f32 %v851, %v897
        %v914 = vmul.f32 %v852, %v898
        %v915 = vld [vmem:[%s4] sm:$0xf]
        %v917 = vlaneseq
        %v918 = vshrl.u32 %v917, 7
        %v919 = vsub.s32 0, %v918
        %v920 = vrot.slane %v915, %v919
        %v921 = vlaneseq
        %v922 = vshrl.u32 %v921, 7
        %v923 = vsub.s32 1, %v922
        %v924 = vrot.slane %v915, %v923
        %v925 = vlaneseq
        %v926 = vshrl.u32 %v925, 7
        %v927 = vsub.s32 2, %v926
        %v928 = vrot.slane %v915, %v927
        %v929 = vlaneseq
        %v930 = vshrl.u32 %v929, 7
        %v931 = vsub.s32 3, %v930
        %v932 = vrot.slane %v915, %v931
        %v937 = vadd.f32 %v899, %v920
        %v938 = vadd.f32 %v900, %v924
        %v939 = vadd.f32 %v901, %v928
        %v940 = vadd.f32 %v902, %v932
        %v941 = vadd.f32 %v903, %v920
        %v942 = vadd.f32 %v904, %v924
        %v943 = vadd.f32 %v905, %v928
        %v944 = vadd.f32 %v906, %v932
        %v945 = vadd.f32 %v907, %v920
        %v946 = vadd.f32 %v908, %v924
        %v947 = vadd.f32 %v909, %v928
        %v948 = vadd.f32 %v910, %v932
        %v949 = vadd.f32 %v911, %v920
        %v950 = vadd.f32 %v912, %v924
        %v951 = vadd.f32 %v913, %v928
        %v952 = vadd.f32 %v914, %v932
        %v953 = vld [vmem:[#allocation2] sm:$0xff]
        %v954 = vld [vmem:[#allocation2 + $0x8] sm:$0xff]
        %v955 = vld [vmem:[#allocation2 + $0x10] sm:$0xff]
        %v956 = vld [vmem:[#allocation2 + $0x18] sm:$0xff]
        %v957 = vld [vmem:[#allocation2 + $0x20] sm:$0xff]
        %v958 = vld [vmem:[#allocation2 + $0x28] sm:$0xff]
        %v959 = vld [vmem:[#allocation2 + $0x30] sm:$0xff]
        %v960 = vld [vmem:[#allocation2 + $0x38] sm:$0xff]
        %v961 = vld [vmem:[#allocation2 + $0x40] sm:$0xff]
        %v962 = vld [vmem:[#allocation2 + $0x48] sm:$0xff]
        %v963 = vld [vmem:[#allocation2 + $0x50] sm:$0xff]
        %v964 = vld [vmem:[#allocation2 + $0x58] sm:$0xff]
        %v965 = vld [vmem:[#allocation2 + $0x60] sm:$0xff]
        %v966 = vld [vmem:[#allocation2 + $0x68] sm:$0xff]
        %v967 = vld [vmem:[#allocation2 + $0x70] sm:$0xff]
        %v968 = vld [vmem:[#allocation2 + $0x78] sm:$0xff]
        %v969 = vmul.f32 %v953, 0.16666667
        %v970 = vmul.f32 %v954, 0.16666667
        %v971 = vmul.f32 %v955, 0.16666667
        %v972 = vmul.f32 %v956, 0.16666667
        %v973 = vmul.f32 %v957, 0.16666667
        %v974 = vmul.f32 %v958, 0.16666667
        %v975 = vmul.f32 %v959, 0.16666667
        %v976 = vmul.f32 %v960, 0.16666667
        %v977 = vmul.f32 %v961, 0.16666667
        %v978 = vmul.f32 %v962, 0.16666667
        %v979 = vmul.f32 %v963, 0.16666667
        %v980 = vmul.f32 %v964, 0.16666667
        %v981 = vmul.f32 %v965, 0.16666667
        %v982 = vmul.f32 %v966, 0.16666667
        %v983 = vmul.f32 %v967, 0.16666667
        %v984 = vmul.f32 %v968, 0.16666667
        %v985 = vmul.f32 %v937, 0.8333333
        %v986 = vmul.f32 %v938, 0.8333333
        %v987 = vmul.f32 %v939, 0.8333333
        %v988 = vmul.f32 %v940, 0.8333333
        %v989 = vmul.f32 %v941, 0.8333333
        %v990 = vmul.f32 %v942, 0.8333333
        %v991 = vmul.f32 %v943, 0.8333333
        %v992 = vmul.f32 %v944, 0.8333333
        %v993 = vmul.f32 %v945, 0.8333333
        %v994 = vmul.f32 %v946, 0.8333333
        %v995 = vmul.f32 %v947, 0.8333333
        %v996 = vmul.f32 %v948, 0.8333333
        %v997 = vmul.f32 %v949, 0.8333333
        %v998 = vmul.f32 %v950, 0.8333333
        %v999 = vmul.f32 %v951, 0.8333333
        %v1000 = vmul.f32 %v952, 0.8333333
        %v1001 = vadd.f32 %v969, %v985
        %v1002 = vadd.f32 %v970, %v986
        %v1003 = vadd.f32 %v971, %v987
        %v1004 = vadd.f32 %v972, %v988
        %v1005 = vadd.f32 %v973, %v989
        %v1006 = vadd.f32 %v974, %v990
        %v1007 = vadd.f32 %v975, %v991
        %v1008 = vadd.f32 %v976, %v992
        %v1009 = vadd.f32 %v977, %v993
        %v1010 = vadd.f32 %v978, %v994
        %v1011 = vadd.f32 %v979, %v995
        %v1012 = vadd.f32 %v980, %v996
        %v1013 = vadd.f32 %v981, %v997
        %v1014 = vadd.f32 %v982, %v998
        %v1015 = vadd.f32 %v983, %v999
        %v1016 = vadd.f32 %v984, %v1000
        %vm1017 = vcmp.ge.f32.partialorder %v1001, 1.0
        %vm1018 = vcmp.ge.f32.partialorder %v1002, 1.0
        %vm1019 = vcmp.ge.f32.partialorder %v1003, 1.0
        %vm1020 = vcmp.ge.f32.partialorder %v1004, 1.0
        %vm1021 = vcmp.ge.f32.partialorder %v1005, 1.0
        %vm1022 = vcmp.ge.f32.partialorder %v1006, 1.0
        %vm1023 = vcmp.ge.f32.partialorder %v1007, 1.0
        %vm1024 = vcmp.ge.f32.partialorder %v1008, 1.0
        %vm1025 = vcmp.ge.f32.partialorder %v1009, 1.0
        %vm1026 = vcmp.ge.f32.partialorder %v1010, 1.0
        %vm1027 = vcmp.ge.f32.partialorder %v1011, 1.0
        %vm1028 = vcmp.ge.f32.partialorder %v1012, 1.0
        %vm1029 = vcmp.ge.f32.partialorder %v1013, 1.0
        %vm1030 = vcmp.ge.f32.partialorder %v1014, 1.0
        %vm1031 = vcmp.ge.f32.partialorder %v1015, 1.0
        %vm1032 = vcmp.ge.f32.partialorder %v1016, 1.0
        %v1033 = vsel %vm1017, 0.0, %v1001
        %v1034 = vsel %vm1018, 0.0, %v1002
        %v1035 = vsel %vm1019, 0.0, %v1003
        %v1036 = vsel %vm1020, 0.0, %v1004
        %v1037 = vsel %vm1021, 0.0, %v1005
        %v1038 = vsel %vm1022, 0.0, %v1006
        %v1039 = vsel %vm1023, 0.0, %v1007
        %v1040 = vsel %vm1024, 0.0, %v1008
        %v1041 = vsel %vm1025, 0.0, %v1009
        %v1042 = vsel %vm1026, 0.0, %v1010
        %v1043 = vsel %vm1027, 0.0, %v1011
        %v1044 = vsel %vm1028, 0.0, %v1012
        %v1045 = vsel %vm1029, 0.0, %v1013
        %v1046 = vsel %vm1030, 0.0, %v1014
        %v1047 = vsel %vm1031, 0.0, %v1015
        %v1048 = vsel %vm1032, 0.0, %v1016
        %1049 = vst [vmem:[#allocation2] sm:$0xff] %v1033
        %1050 = vst [vmem:[#allocation2 + $0x8] sm:$0xff] %v1034
        %1051 = vst [vmem:[#allocation2 + $0x10] sm:$0xff] %v1035
        %1052 = vst [vmem:[#allocation2 + $0x18] sm:$0xff] %v1036
        %1053 = vst [vmem:[#allocation2 + $0x20] sm:$0xff] %v1037
        %1054 = vst [vmem:[#allocation2 + $0x28] sm:$0xff] %v1038
        %1055 = vst [vmem:[#allocation2 + $0x30] sm:$0xff] %v1039
        %1056 = vst [vmem:[#allocation2 + $0x38] sm:$0xff] %v1040
        %1057 = vst [vmem:[#allocation2 + $0x40] sm:$0xff] %v1041
        %1058 = vst [vmem:[#allocation2 + $0x48] sm:$0xff] %v1042
        %1059 = vst [vmem:[#allocation2 + $0x50] sm:$0xff] %v1043
        %1060 = vst [vmem:[#allocation2 + $0x58] sm:$0xff] %v1044
        %1061 = vst [vmem:[#allocation2 + $0x60] sm:$0xff] %v1045
        %1062 = vst [vmem:[#allocation2 + $0x68] sm:$0xff] %v1046
        %1063 = vst [vmem:[#allocation2 + $0x70] sm:$0xff] %v1047
        %1064 = vst [vmem:[#allocation2 + $0x78] sm:$0xff] %v1048
        %v1065 = vsel %vm1017, 1, 0
        %v1066 = vsel %vm1018, 1, 0
        %v1067 = vsel %vm1019, 1, 0
        %v1068 = vsel %vm1020, 1, 0
        %v1069 = vsel %vm1021, 1, 0
        %v1070 = vsel %vm1022, 1, 0
        %v1071 = vsel %vm1023, 1, 0
        %v1072 = vsel %vm1024, 1, 0
        %v1073 = vsel %vm1025, 1, 0
        %v1074 = vsel %vm1026, 1, 0
        %v1075 = vsel %vm1027, 1, 0
        %v1076 = vsel %vm1028, 1, 0
        %v1077 = vsel %vm1029, 1, 0
        %v1078 = vsel %vm1030, 1, 0
        %v1079 = vsel %vm1031, 1, 0
        %v1080 = vsel %vm1032, 1, 0
        %v1081 = vcvt.s32.f32 %v1065
        %v1082 = vcvt.s32.f32 %v1066
        %v1083 = vcvt.s32.f32 %v1067
        %v1084 = vcvt.s32.f32 %v1068
        %v1085 = vcvt.s32.f32 %v1069
        %v1086 = vcvt.s32.f32 %v1070
        %v1087 = vcvt.s32.f32 %v1071
        %v1088 = vcvt.s32.f32 %v1072
        %v1089 = vcvt.s32.f32 %v1073
        %v1090 = vcvt.s32.f32 %v1074
        %v1091 = vcvt.s32.f32 %v1075
        %v1092 = vcvt.s32.f32 %v1076
        %v1093 = vcvt.s32.f32 %v1077
        %v1094 = vcvt.s32.f32 %v1078
        %v1095 = vcvt.s32.f32 %v1079
        %v1096 = vcvt.s32.f32 %v1080
        %v1097 = vpack.c.bf16 %v1085, %v1081
        %v1098 = vpack.c.bf16 %v1086, %v1082
        %v1099 = vpack.c.bf16 %v1087, %v1083
        %v1100 = vpack.c.bf16 %v1088, %v1084
        %v1101 = vpack.c.bf16 %v1093, %v1089
        %v1102 = vpack.c.bf16 %v1094, %v1090
        %v1103 = vpack.c.bf16 %v1095, %v1091
        %v1104 = vpack.c.bf16 %v1096, %v1092
        %v1105 = vld [vmem:[#allocation9] sm:$0xf]
        %v1106 = vld [vmem:[#allocation9 + $0x4] sm:$0xf]
        %v1107 = vld [vmem:[#allocation9 + $0x8] sm:$0xf]
        %v1108 = vld [vmem:[#allocation9 + $0xc] sm:$0xf]
        %v1109 = vld [vmem:[#allocation9 + $0x10] sm:$0xf]
        %v1110 = vld [vmem:[#allocation9 + $0x14] sm:$0xf]
        %v1111 = vld [vmem:[#allocation9 + $0x18] sm:$0xf]
        %v1112 = vld [vmem:[#allocation9 + $0x1c] sm:$0xf]
        %v1113 = vld [vmem:[#allocation9 + $0x20] sm:$0xf]
        %v1114 = vld [vmem:[#allocation9 + $0x24] sm:$0xf]
        %v1115 = vld [vmem:[#allocation9 + $0x28] sm:$0xf]
        %v1116 = vld [vmem:[#allocation9 + $0x2c] sm:$0xf]
        %v1117 = vld [vmem:[#allocation9 + $0x30] sm:$0xf]
        %v1118 = vld [vmem:[#allocation9 + $0x34] sm:$0xf]
        %v1119 = vld [vmem:[#allocation9 + $0x38] sm:$0xf]
        %v1120 = vld [vmem:[#allocation9 + $0x3c] sm:$0xf]
        %v1121 = vld [vmem:[#allocation9 + $0x40] sm:$0xf]
        %v1122 = vld [vmem:[#allocation9 + $0x44] sm:$0xf]
        %v1123 = vld [vmem:[#allocation9 + $0x48] sm:$0xf]
        %v1124 = vld [vmem:[#allocation9 + $0x4c] sm:$0xf]
        %v1125 = vld [vmem:[#allocation9 + $0x50] sm:$0xf]
        %v1126 = vld [vmem:[#allocation9 + $0x54] sm:$0xf]
        %v1127 = vld [vmem:[#allocation9 + $0x58] sm:$0xf]
        %v1128 = vld [vmem:[#allocation9 + $0x5c] sm:$0xf]
        %v1129 = vld [vmem:[#allocation9 + $0x60] sm:$0xf]
        %v1130 = vld [vmem:[#allocation9 + $0x64] sm:$0xf]
        %v1131 = vld [vmem:[#allocation9 + $0x68] sm:$0xf]
        %v1132 = vld [vmem:[#allocation9 + $0x6c] sm:$0xf]
        %v1133 = vld [vmem:[#allocation9 + $0x70] sm:$0xf]
        %v1134 = vld [vmem:[#allocation9 + $0x74] sm:$0xf]
        %v1135 = vld [vmem:[#allocation9 + $0x78] sm:$0xf]
        %v1136 = vld [vmem:[#allocation9 + $0x7c] sm:$0xf]
        %v1137 = vld [vmem:[#allocation9 + $0x80] sm:$0xf]
        %v1138 = vld [vmem:[#allocation9 + $0x84] sm:$0xf]
        %v1139 = vld [vmem:[#allocation9 + $0x88] sm:$0xf]
        %v1140 = vld [vmem:[#allocation9 + $0x8c] sm:$0xf]
        %v1141 = vld [vmem:[#allocation9 + $0x90] sm:$0xf]
        %v1142 = vld [vmem:[#allocation9 + $0x94] sm:$0xf]
        %v1143 = vld [vmem:[#allocation9 + $0x98] sm:$0xf]
        %v1144 = vld [vmem:[#allocation9 + $0x9c] sm:$0xf]
        %v1145 = vld [vmem:[#allocation9 + $0xa0] sm:$0xf]
        %v1146 = vld [vmem:[#allocation9 + $0xa4] sm:$0xf]
        %v1147 = vld [vmem:[#allocation9 + $0xa8] sm:$0xf]
        %v1148 = vld [vmem:[#allocation9 + $0xac] sm:$0xf]
        %v1149 = vld [vmem:[#allocation9 + $0xb0] sm:$0xf]
        %v1150 = vld [vmem:[#allocation9 + $0xb4] sm:$0xf]
        %v1151 = vld [vmem:[#allocation9 + $0xb8] sm:$0xf]
        %v1152 = vld [vmem:[#allocation9 + $0xbc] sm:$0xf]
        %v1153 = vld [vmem:[#allocation9 + $0xc0] sm:$0xf]
        %v1154 = vld [vmem:[#allocation9 + $0xc4] sm:$0xf]
        %v1155 = vld [vmem:[#allocation9 + $0xc8] sm:$0xf]
        %v1156 = vld [vmem:[#allocation9 + $0xcc] sm:$0xf]
        %v1157 = vld [vmem:[#allocation9 + $0xd0] sm:$0xf]
        %v1158 = vld [vmem:[#allocation9 + $0xd4] sm:$0xf]
        %v1159 = vld [vmem:[#allocation9 + $0xd8] sm:$0xf]
        %v1160 = vld [vmem:[#allocation9 + $0xdc] sm:$0xf]
        %v1161 = vld [vmem:[#allocation9 + $0xe0] sm:$0xf]
        %v1162 = vld [vmem:[#allocation9 + $0xe4] sm:$0xf]
        %v1163 = vld [vmem:[#allocation9 + $0xe8] sm:$0xf]
        %v1164 = vld [vmem:[#allocation9 + $0xec] sm:$0xf]
        %v1165 = vld [vmem:[#allocation9 + $0xf0] sm:$0xf]
        %v1166 = vld [vmem:[#allocation9 + $0xf4] sm:$0xf]
        %v1167 = vld [vmem:[#allocation9 + $0xf8] sm:$0xf]
        %v1168 = vld [vmem:[#allocation9 + $0xfc] sm:$0xf]
        %v1169 = vld [vmem:[%s6] sm:$0x1]
        %v1171 = vlaneseq
        %v1172 = vshrl.u32 %v1171, 7
        %v1173 = vsub.s32 0, %v1172
        %v1174 = vrot.slane %v1169, %v1173
        %v1240 = vunpack.c.l.b16 %v1105
        %v1241 = vunpack.c.l.b16 %v1106
        %v1242 = vunpack.c.l.b16 %v1107
        %v1243 = vunpack.c.l.b16 %v1108
        %v1244 = vunpack.c.l.b16 %v1109
        %v1245 = vunpack.c.l.b16 %v1110
        %v1246 = vunpack.c.l.b16 %v1111
        %v1247 = vunpack.c.l.b16 %v1112
        %v1248 = vunpack.c.l.b16 %v1113
        %v1249 = vunpack.c.l.b16 %v1114
        %v1250 = vunpack.c.l.b16 %v1115
        %v1251 = vunpack.c.l.b16 %v1116
        %v1252 = vunpack.c.l.b16 %v1117
        %v1253 = vunpack.c.l.b16 %v1118
        %v1254 = vunpack.c.l.b16 %v1119
        %v1255 = vunpack.c.l.b16 %v1120
        %v1256 = vunpack.c.l.b16 %v1121
        %v1257 = vunpack.c.l.b16 %v1122
        %v1258 = vunpack.c.l.b16 %v1123
        %v1259 = vunpack.c.l.b16 %v1124
        %v1260 = vunpack.c.l.b16 %v1125
        %v1261 = vunpack.c.l.b16 %v1126
        %v1262 = vunpack.c.l.b16 %v1127
        %v1263 = vunpack.c.l.b16 %v1128
        %v1264 = vunpack.c.l.b16 %v1129
        %v1265 = vunpack.c.l.b16 %v1130
        %v1266 = vunpack.c.l.b16 %v1131
        %v1267 = vunpack.c.l.b16 %v1132
        %v1268 = vunpack.c.l.b16 %v1133
        %v1269 = vunpack.c.l.b16 %v1134
        %v1270 = vunpack.c.l.b16 %v1135
        %v1271 = vunpack.c.l.b16 %v1136
        %v1272 = vunpack.c.l.b16 %v1137
        %v1273 = vunpack.c.l.b16 %v1138
        %v1274 = vunpack.c.l.b16 %v1139
        %v1275 = vunpack.c.l.b16 %v1140
        %v1276 = vunpack.c.l.b16 %v1141
        %v1277 = vunpack.c.l.b16 %v1142
        %v1278 = vunpack.c.l.b16 %v1143
        %v1279 = vunpack.c.l.b16 %v1144
        %v1280 = vunpack.c.l.b16 %v1145
        %v1281 = vunpack.c.l.b16 %v1146
        %v1282 = vunpack.c.l.b16 %v1147
        %v1283 = vunpack.c.l.b16 %v1148
        %v1284 = vunpack.c.l.b16 %v1149
        %v1285 = vunpack.c.l.b16 %v1150
        %v1286 = vunpack.c.l.b16 %v1151
        %v1287 = vunpack.c.l.b16 %v1152
        %v1288 = vunpack.c.l.b16 %v1153
        %v1289 = vunpack.c.l.b16 %v1154
        %v1290 = vunpack.c.l.b16 %v1155
        %v1291 = vunpack.c.l.b16 %v1156
        %v1292 = vunpack.c.l.b16 %v1157
        %v1293 = vunpack.c.l.b16 %v1158
        %v1294 = vunpack.c.l.b16 %v1159
        %v1295 = vunpack.c.l.b16 %v1160
        %v1296 = vunpack.c.l.b16 %v1161
        %v1297 = vunpack.c.l.b16 %v1162
        %v1298 = vunpack.c.l.b16 %v1163
        %v1299 = vunpack.c.l.b16 %v1164
        %v1300 = vunpack.c.l.b16 %v1165
        %v1301 = vunpack.c.l.b16 %v1166
        %v1302 = vunpack.c.l.b16 %v1167
        %v1303 = vunpack.c.l.b16 %v1168
        %v1304 = vpack.c.b16 %v1241, %v1240
        %v1305 = vpack.c.b16 %v1243, %v1242
        %v1306 = vpack.c.b16 %v1245, %v1244
        %v1307 = vpack.c.b16 %v1247, %v1246
        %v1308 = vpack.c.b16 %v1249, %v1248
        %v1309 = vpack.c.b16 %v1251, %v1250
        %v1310 = vpack.c.b16 %v1253, %v1252
        %v1311 = vpack.c.b16 %v1255, %v1254
        %v1312 = vpack.c.b16 %v1257, %v1256
        %v1313 = vpack.c.b16 %v1259, %v1258
        %v1314 = vpack.c.b16 %v1261, %v1260
        %v1315 = vpack.c.b16 %v1263, %v1262
        %v1316 = vpack.c.b16 %v1265, %v1264
        %v1317 = vpack.c.b16 %v1267, %v1266
        %v1318 = vpack.c.b16 %v1269, %v1268
        %v1319 = vpack.c.b16 %v1271, %v1270
        %v1320 = vpack.c.b16 %v1273, %v1272
        %v1321 = vpack.c.b16 %v1275, %v1274
        %v1322 = vpack.c.b16 %v1277, %v1276
        %v1323 = vpack.c.b16 %v1279, %v1278
        %v1324 = vpack.c.b16 %v1281, %v1280
        %v1325 = vpack.c.b16 %v1283, %v1282
        %v1326 = vpack.c.b16 %v1285, %v1284
        %v1327 = vpack.c.b16 %v1287, %v1286
        %v1328 = vpack.c.b16 %v1289, %v1288
        %v1329 = vpack.c.b16 %v1291, %v1290
        %v1330 = vpack.c.b16 %v1293, %v1292
        %v1331 = vpack.c.b16 %v1295, %v1294
        %v1332 = vpack.c.b16 %v1297, %v1296
        %v1333 = vpack.c.b16 %v1299, %v1298
        %v1334 = vpack.c.b16 %v1301, %v1300
        %v1335 = vpack.c.b16 %v1303, %v1302
        %1368 = vmatprep.subr.bf16.mxu0 0
        %1369 = vmatpush1.bf16.msra.mxu0 %v1304
        %1370 = vmatprep.subr.bf16.mxu0 0
        %1371 = vmatpush1.bf16.msra.mxu0 %v1305
        %1372 = vmatprep.subr.bf16.mxu0 0
        %1373 = vmatpush1.bf16.msra.mxu0 %v1306
        %1374 = vmatprep.subr.bf16.mxu0 0
        %1375 = vmatpush1.bf16.msra.mxu0 %v1307
        %1376 = vmatprep.subr.bf16.mxu0 0
        %1377 = vmatpush1.bf16.msra.mxu0 %v1308
        %1378 = vmatprep.subr.bf16.mxu0 0
        %1379 = vmatpush1.bf16.msra.mxu0 %v1309
        %1380 = vmatprep.subr.bf16.mxu0 0
        %1381 = vmatpush1.bf16.msra.mxu0 %v1310
        %1382 = vmatprep.subr.bf16.mxu0 0
        %1383 = vmatpush1.bf16.msra.mxu0 %v1311
        %1384 = vmatprep.subr.bf16.mxu0 0
        %1385 = vmatpush1.bf16.msra.mxu0 %v1312
        %1386 = vmatprep.subr.bf16.mxu0 0
        %1387 = vmatpush1.bf16.msra.mxu0 %v1313
        %1388 = vmatprep.subr.bf16.mxu0 0
        %1389 = vmatpush1.bf16.msra.mxu0 %v1314
        %1390 = vmatprep.subr.bf16.mxu0 0
        %1391 = vmatpush1.bf16.msra.mxu0 %v1315
        %1392 = vmatprep.subr.bf16.mxu0 0
        %1393 = vmatpush1.bf16.msra.mxu0 %v1316
        %1394 = vmatprep.subr.bf16.mxu0 0
        %1395 = vmatpush1.bf16.msra.mxu0 %v1317
        %1396 = vmatprep.subr.bf16.mxu0 0
        %1397 = vmatpush1.bf16.msra.mxu0 %v1318
        %1398 = vmatprep.subr.bf16.mxu0 0
        %1399 = vmatpush1.bf16.msra.mxu0 %v1319
        %1400 = vmatprep.mubr.bf16.mxu0 %v1098
        %1401 = vmatmul.mubr.bf16.gmra.mrb[0].mxu0 %v1097
        %v1402 = vpop.f32.mrb[0].mxu0
        %v1403 = vadd.f32 %v1174, %v1402
        %v1404 = vpop.f32.mrb[0].mxu0
        %v1405 = vpop.f32.mrb[0].mxu0
        %v1406 = vadd.f32 %v1174, %v1405
        %v1407 = vpop.f32.mrb[0].mxu0
        %1408 = vmatprep.mubr.bf16.mxu0 %v1102
        %1409 = vmatmul.mubr.bf16.gmra.mrb[0].mxu0 %v1101
        %v1410 = vpop.f32.mrb[0].mxu0
        %v1411 = vadd.f32 %v1174, %v1410
        %v1412 = vpop.f32.mrb[0].mxu0
        %v1413 = vpop.f32.mrb[0].mxu0
        %v1414 = vadd.f32 %v1174, %v1413
        %v1415 = vpop.f32.mrb[0].mxu0
        %1416 = vdwg.mxu0
        %1417 = vmatprep.subr.bf16.mxu0 0
        %1418 = vmatpush1.bf16.msra.mxu0 %v1320
        %1419 = vmatprep.subr.bf16.mxu0 0
        %1420 = vmatpush1.bf16.msra.mxu0 %v1321
        %1421 = vmatprep.subr.bf16.mxu0 0
        %1422 = vmatpush1.bf16.msra.mxu0 %v1322
        %1423 = vmatprep.subr.bf16.mxu0 0
        %1424 = vmatpush1.bf16.msra.mxu0 %v1323
        %1425 = vmatprep.subr.bf16.mxu0 0
        %1426 = vmatpush1.bf16.msra.mxu0 %v1324
        %1427 = vmatprep.subr.bf16.mxu0 0
        %1428 = vmatpush1.bf16.msra.mxu0 %v1325
        %1429 = vmatprep.subr.bf16.mxu0 0
        %1430 = vmatpush1.bf16.msra.mxu0 %v1326
        %1431 = vmatprep.subr.bf16.mxu0 0
        %1432 = vmatpush1.bf16.msra.mxu0 %v1327
        %1433 = vmatprep.subr.bf16.mxu0 0
        %1434 = vmatpush1.bf16.msra.mxu0 %v1328
        %1435 = vmatprep.subr.bf16.mxu0 0
        %1436 = vmatpush1.bf16.msra.mxu0 %v1329
        %1437 = vmatprep.subr.bf16.mxu0 0
        %1438 = vmatpush1.bf16.msra.mxu0 %v1330
        %1439 = vmatprep.subr.bf16.mxu0 0
        %1440 = vmatpush1.bf16.msra.mxu0 %v1331
        %1441 = vmatprep.subr.bf16.mxu0 0
        %1442 = vmatpush1.bf16.msra.mxu0 %v1332
        %1443 = vmatprep.subr.bf16.mxu0 0
        %1444 = vmatpush1.bf16.msra.mxu0 %v1333
        %1445 = vmatprep.subr.bf16.mxu0 0
        %1446 = vmatpush1.bf16.msra.mxu0 %v1334
        %1447 = vmatprep.subr.bf16.mxu0 0
        %1448 = vmatpush1.bf16.msra.mxu0 %v1335
        %1449 = vmatprep.mubr.bf16.mxu0 %v1100
        %1450 = vmatmul.mubr.bf16.gmra.mrb[0].mxu0 %v1099
        %v1451 = vpop.f32.mrb[0].mxu0
        %v1452 = vadd.f32 %v1403, %v1451
        %v1453 = vpop.f32.mrb[0].mxu0
        %v1454 = vpop.f32.mrb[0].mxu0
        %v1455 = vadd.f32 %v1406, %v1454
        %v1456 = vpop.f32.mrb[0].mxu0
        %1457 = vmatprep.mubr.bf16.mxu0 %v1104
        %1458 = vmatmul.mubr.bf16.gmra.mrb[0].mxu0 %v1103
        %v1459 = vpop.f32.mrb[0].mxu0
        %v1460 = vadd.f32 %v1411, %v1459
        %v1461 = vpop.f32.mrb[0].mxu0
        %v1462 = vpop.f32.mrb[0].mxu0
        %v1463 = vadd.f32 %v1414, %v1462
        %v1464 = vpop.f32.mrb[0].mxu0
        %1465 = vdwg.mxu0
        %1466 = vadd.xlane.f32.xlu0 %v1452
        %v1467 = vpop.xlane.xlu0 %1466
        %1468 = vadd.xlane.f32.xlu0 %v1455
        %v1469 = vpop.xlane.xlu0 %1468
        %1470 = vadd.xlane.f32.xlu0 %v1460
        %v1471 = vpop.xlane.xlu0 %1470
        %1472 = vadd.xlane.f32.xlu0 %v1463
        %v1473 = vpop.xlane.xlu0 %1472
        %v1474 = vmul.f32 %v1467, 0.0078125
        %v1475 = vmul.f32 %v1469, 0.0078125
        %v1476 = vmul.f32 %v1471, 0.0078125
        %v1477 = vmul.f32 %v1473, 0.0078125
        %v1478 = vmul.f32 %v1452, %v1452
        %v1479 = vmul.f32 %v1455, %v1455
        %v1480 = vmul.f32 %v1460, %v1460
        %v1481 = vmul.f32 %v1463, %v1463
        %1482 = vadd.xlane.f32.xlu0 %v1478
        %v1483 = vpop.xlane.xlu0 %1482
        %1484 = vadd.xlane.f32.xlu0 %v1479
        %v1485 = vpop.xlane.xlu0 %1484
        %1486 = vadd.xlane.f32.xlu0 %v1480
        %v1487 = vpop.xlane.xlu0 %1486
        %1488 = vadd.xlane.f32.xlu0 %v1481
        %v1489 = vpop.xlane.xlu0 %1488
        %v1490 = vmul.f32 %v1483, 0.0078125
        %v1491 = vmul.f32 %v1485, 0.0078125
        %v1492 = vmul.f32 %v1487, 0.0078125
        %v1493 = vmul.f32 %v1489, 0.0078125
        %v1494 = vmul.f32 %v1474, %v1474
        %v1495 = vmul.f32 %v1475, %v1475
        %v1496 = vmul.f32 %v1476, %v1476
        %v1497 = vmul.f32 %v1477, %v1477
        %v1498 = vsub.f32 %v1490, %v1494
        %v1499 = vsub.f32 %v1491, %v1495
        %v1500 = vsub.f32 %v1492, %v1496
        %v1501 = vsub.f32 %v1493, %v1497
        %v1502 = vmax.f32 %v1498, 0.0
        %v1503 = vmax.f32 %v1499, 0.0
        %v1504 = vmax.f32 %v1500, 0.0
        %v1505 = vmax.f32 %v1501, 0.0
        %v1506 = vsub.f32 %v1452, %v1474
        %v1507 = vsub.f32 %v1455, %v1475
        %v1508 = vsub.f32 %v1460, %v1476
        %v1509 = vsub.f32 %v1463, %v1477
        %v1510 = vadd.f32 %v1502, 1e-12
        %v1511 = vadd.f32 %v1503, 1e-12
        %v1512 = vadd.f32 %v1504, 1e-12
        %v1513 = vadd.f32 %v1505, 1e-12
        %v1514 = vrsqrt.pop %v1510
        %v1515 = vrsqrt.pop %v1511
        %v1516 = vrsqrt.pop %v1512
        %v1517 = vrsqrt.pop %v1513
        %v1518 = vld [vmem:[%s7] sm:$0x1]
        %v1520 = vlaneseq
        %v1521 = vshrl.u32 %v1520, 7
        %v1522 = vsub.s32 0, %v1521
        %v1523 = vrot.slane %v1518, %v1522
        %v1525 = vmul.f32 %v1514, %v1523
        %v1526 = vmul.f32 %v1515, %v1523
        %v1527 = vmul.f32 %v1516, %v1523
        %v1528 = vmul.f32 %v1517, %v1523
        %v1529 = vmul.f32 %v1506, %v1525
        %v1530 = vmul.f32 %v1507, %v1526
        %v1531 = vmul.f32 %v1508, %v1527
        %v1532 = vmul.f32 %v1509, %v1528
        %v1533 = vld [vmem:[%s8] sm:$0x1]
        %v1535 = vlaneseq
        %v1536 = vshrl.u32 %v1535, 7
        %v1537 = vsub.s32 0, %v1536
        %v1538 = vrot.slane %v1533, %v1537
        %v1540 = vadd.f32 %v1529, %v1538
        %v1541 = vadd.f32 %v1530, %v1538
        %v1542 = vadd.f32 %v1531, %v1538
        %v1543 = vadd.f32 %v1532, %v1538
        %v1544 = vld [vmem:[#allocation3] sm:$0xff]
        %v1545 = vld [vmem:[#allocation3 + $0x8] sm:$0xff]
        %v1546 = vld [vmem:[#allocation3 + $0x10] sm:$0xff]
        %v1547 = vld [vmem:[#allocation3 + $0x18] sm:$0xff]
        %v1548 = vmul.f32 %v1544, 0.16666667
        %v1549 = vmul.f32 %v1545, 0.16666667
        %v1550 = vmul.f32 %v1546, 0.16666667
        %v1551 = vmul.f32 %v1547, 0.16666667
        %v1552 = vmul.f32 %v1540, 0.8333333
        %v1553 = vmul.f32 %v1541, 0.8333333
        %v1554 = vmul.f32 %v1542, 0.8333333
        %v1555 = vmul.f32 %v1543, 0.8333333
        %v1556 = vadd.f32 %v1548, %v1552
        %v1557 = vadd.f32 %v1549, %v1553
        %v1558 = vadd.f32 %v1550, %v1554
        %v1559 = vadd.f32 %v1551, %v1555
        %vm1560 = vcmp.ge.f32.partialorder %v1556, 1.0
        %vm1561 = vcmp.ge.f32.partialorder %v1557, 1.0
        %vm1562 = vcmp.ge.f32.partialorder %v1558, 1.0
        %vm1563 = vcmp.ge.f32.partialorder %v1559, 1.0
        %v1564 = vsel %vm1560, 0.0, %v1556
        %v1565 = vsel %vm1561, 0.0, %v1557
        %v1566 = vsel %vm1562, 0.0, %v1558
        %v1567 = vsel %vm1563, 0.0, %v1559
        %1568 = vst [vmem:[#allocation3] sm:$0xff] %v1564
        %1569 = vst [vmem:[#allocation3 + $0x8] sm:$0xff] %v1565
        %1570 = vst [vmem:[#allocation3 + $0x10] sm:$0xff] %v1566
        %1571 = vst [vmem:[#allocation3 + $0x18] sm:$0xff] %v1567
        %v1572 = vsel %vm1560, 1, 0
        %v1573 = vsel %vm1561, 1, 0
        %v1574 = vsel %vm1562, 1, 0
        %v1575 = vsel %vm1563, 1, 0
        %v1576 = vcvt.s32.f32 %v1572
        %v1577 = vcvt.s32.f32 %v1573
        %v1578 = vcvt.s32.f32 %v1574
        %v1579 = vcvt.s32.f32 %v1575
        %1580 = vst [vmem:[%s397] sm:$0xff] %v1576
        %1581 = vst [vmem:[%s397 + $0x8] sm:$0xff] %v1577
        %1582 = vst [vmem:[%s397 + $0x10] sm:$0xff] %v1578
        %1583 = vst [vmem:[%s397 + $0x18] sm:$0xff] %v1579
        %s1584 = sand.u32 %s245, 1
        %s1585 = scalar_lea.sflag [#allocation6], %s1584
        %s1586 = sand.u32 %s245, 1
        %s1587 = smul.addr %s1586, 32
        %s1588 = scalar_lea.vmem [#allocation10], %s1587
        // Predicated region
        $region73: #{tpu_custom_call.1} parent=55 // pred_check
          %p1589 = pneg %p255
        $region74: #{tpu_custom_call.1} parent=55 // pred_check_branch
          %1591 = sbr.rel (%p1589) target = $region76
        $region75: #{tpu_custom_call.1} parent=55 // pred_region
          %s1592 = smul.u32 4, %s31
          %s1594 = ssub.s32 512, 512
          %1595 = vsyncadd %s1585, %s1594
          %s1596 = smul.addr %s32, 4
          %s1597 = sadd.s32 %s1592, %s1596
          %s1598 = smul.addr %s1597, 128
          %s1599 = scalar_lea.hbm %s9, %s1598
          %s1600 = sshll.u32 %s1588, 4
          %s1601 = int_to_ptr.vmem [resolvable:$true] %s1600
          %1606 = dma.vmem_to_hbm [thread:$0]  %s1601, 512, %s1599, %s1585, 128, 128, 8
        $region76: #{tpu_custom_call.1} parent=55 // pred_fallthru
          _
      $region56: #{tpu_custom_call.1} parent=5 // pred_fallthru
        _
      %p1607 = scmp.le.s32.totalorder 2, %s22
      // Predicated region
      $region77: #{tpu_custom_call.1} parent=5 // pred_check
        %p1608 = pneg %p1607
      $region78: #{tpu_custom_call.1} parent=5 // pred_check_branch
        %1610 = sbr.rel (%p1608) target = $region80
      $region79: #{tpu_custom_call.1} parent=5 // pred_region
        %s1611 = ssub.s32 %s22, 2
        // Predicated region
        $region81: #{tpu_custom_call.1} parent=79 // pred_check
          %p1612 = pneg %p261
        $region82: #{tpu_custom_call.1} parent=79 // pred_check_branch
          %1614 = sbr.rel (%p1612) target = $region84
        $region83: #{tpu_custom_call.1} parent=79 // pred_region
          %s1615 = sand.u32 %s246, 1
          %s1616 = scalar_lea.sflag [#allocation6], %s1615
          %s1617 = sand.u32 %s246, 1
          %s1618 = smul.addr %s1617, 32
          %s1619 = scalar_lea.vmem [#allocation10], %s1618
          %1620 = dma.done %s1616, 512
        $region84: #{tpu_custom_call.1} parent=79 // pred_fallthru
          _
      $region80: #{tpu_custom_call.1} parent=5 // pred_fallthru
        _
    $region6: #{tpu_custom_call.1} parent=1 // loop_footer
      %s26 = sadd.s32 1, %s22
    $region7: #{tpu_custom_call.1} parent=1 // loop_footer_branch
      %21 = sbr.rel target = $region3
    $region8: #{tpu_custom_call.1} parent=1 // loop_exit
      _
    %1621 = vsyncpa [#allocation5], 1
    %s1622 = scalar_lea.sflag [#allocation5], 1
    %1623 = vsyncpa %s1622, 1
    %1624 = vsyncpa [#allocation8], 1
    %1625 = vsyncpa [#allocation6], 1
    %s1626 = scalar_lea.sflag [#allocation6], 1
    %1627 = vsyncpa %s1626, 1

</llo_original>
